<compile_context>
chip_gen: v7x
topology: tpu7x:2x2x1
jax: 0.10.0
libtpu: 0.0.40
codegen_flags: <defaults>
</compile_context>

<pallas_src>
import functools

import jax
import jax.numpy as jnp
from jax.experimental import pallas as pl
from jax.experimental.pallas import tpu as pltpu


def _round_up(x, m):
    return (x + m - 1) // m * m


def _vmem_limit_bytes():
    """~75% of the chip's physical VMEM (v5e/v6e: 96 MiB, v7x: 48 MiB), capped."""
    cap = 64 << 20
    try:
        cap = int(getattr(pltpu.get_tpu_info(), "vmem_capacity_bytes", cap))
    except Exception:
        pass
    return max(32 << 20, min(cap * 3 // 4, 100 << 20))


def _pick_h_tile(H, W, Pp, y_bytes, vmem_limit):
    """Strip rows from a VMEM budget (double-buffered y block + f32 accumulator)."""
    per_row = W * Pp * (2 * y_bytes + 4)
    th = max(1, (vmem_limit // 4) // per_row)
    th = min(th, H)
    if th >= 8:
        th -= th % 8          # keep strips sublane-aligned when possible
    return th


def _conv_stats_kernel(x_ref, w_ref, y_ref, stats_ref, *, KH, KW, rate, W, TH):
    """Dilated conv for one (batch, H-strip) tile as KH*KW accumulated matmuls,
    plus per-strip BN partial statistics (two-pass BN, pass 1).

    x_ref    : (1, Hp, Wp, Cp)   spatially zero-padded, channel-padded image
    w_ref    : (KH*KW, Cp, Pp)   tap-major weight (matmul dtype)
    y_ref    : (1, TH, W, Pp)    conv output strip (matmul dtype, lane-dense)
    stats_ref: (1, 1, 2, Pp)     f32 [sum, sum_of_squares] over this strip
    """
    Cp = x_ref.shape[-1]
    Pp = w_ref.shape[-1]

    r0 = pl.program_id(1) * TH
    if TH % 8 == 0:
        r0 = pl.multiple_of(r0, 8)

    acc = jnp.zeros((TH * W, Pp), jnp.float32)
    for i in range(KH):
        for j in range(KW):
            # Output rows [r0, r0+TH) read padded input rows [r0+i*rate, ...).
            patch = x_ref[0, pl.ds(r0 + i * rate, TH), j * rate:j * rate + W, :]
            acc = acc + jnp.dot(patch.reshape(TH * W, Cp), w_ref[i * KW + j],
                                preferred_element_type=jnp.float32)

    y_ref[...] = acc.reshape(1, TH, W, Pp).astype(y_ref.dtype)

    # One packed (2, Pp) store of the partial statistics (from the f32 acc).
    s1 = jnp.sum(acc, axis=0, keepdims=True)
    s2 = jnp.sum(acc * acc, axis=0, keepdims=True)
    stats_ref[...] = jnp.concatenate([s1, s2], axis=0).reshape(1, 1, 2, Pp)


def _bn_relu_kernel(y_ref, scale_ref, shift_ref, o_ref):
    """Two-pass BN, pass 2: streamed per-strip normalize + ReLU.

    y_ref              : (1, TH, W, Pp) conv output strip
    scale_ref/shift_ref: (1, Pp)        precomputed gamma*rsqrt(var+eps), beta-mean*scale
    """
    y = y_ref[...].astype(jnp.float32)
    o_ref[...] = jnp.maximum(y * scale_ref[0] + shift_ref[0], 0.0).astype(o_ref.dtype)


def aspp_forward(x_nchw, weight_oikk, gamma, beta, rate, eps=1e-5,
                 matmul_dtype=jnp.bfloat16, h_tile=None, data_format="NCHW"):
    """ASPP_module.forward.  x_nchw: (N, C, H, W); weight: (P, C, KH, KW)."""
    N, C, H, W = x_nchw.shape
    P, _, KH, KW = weight_oikk.shape
    pad = 0 if rate == 1 else rate

    Cp = _round_up(C, 128)              # lane-dense input channels
    Pp = _round_up(P, 128)              # lane-dense output channels
    vmem_limit = _vmem_limit_bytes()
    y_bytes = jnp.dtype(matmul_dtype).itemsize
    TH = h_tile if h_tile is not None else _pick_h_tile(H, W, Pp, y_bytes, vmem_limit)
    TH = max(1, min(TH, H))
    HT = -(-H // TH)                    # cdiv; last strip may be ragged
    Hs = HT * TH                        # strip-padded output rows
    Hp2 = Hs + 2 * pad                  # padded input rows (halo + ragged tail)
    Wp = W + 2 * pad

    # ---- interface glue (NCHW -> NHWC) + one-time padding in plain JAX. ----
    # Spatial halo, ragged-tail rows, and channel pad are all zeros, so tail
    # conv rows are exactly 0 and contribute nothing to the BN sums.
    x = jnp.transpose(x_nchw, (0, 2, 3, 1))                           # (N,H,W,C)
    x = jnp.pad(x, ((0, 0), (pad, pad + (Hs - H)), (pad, pad), (0, Cp - C)))
    x = x.astype(matmul_dtype)                                        # bf16 MXU operand

    # Weight (P,C,KH,KW) -> tap-major (KH*KW, Cp, Pp), zero padded, matmul dtype.
    w = jnp.transpose(weight_oikk, (2, 3, 1, 0))                      # (KH,KW,C,P)
    w = jnp.pad(w, ((0, 0), (0, 0), (0, Cp - C), (0, Pp - P)))
    w = w.reshape(KH * KW, Cp, Pp).astype(matmul_dtype)

    # ---- pass 1: conv + per-strip partial BN statistics. ----
    conv = pl.pallas_call(
        functools.partial(_conv_stats_kernel, KH=KH, KW=KW, rate=rate, W=W, TH=TH),
        out_shape=(
            jax.ShapeDtypeStruct((N, Hs, W, Pp), matmul_dtype),       # conv out
            jax.ShapeDtypeStruct((N, HT, 2, Pp), jnp.float32),        # partial stats
        ),
        grid_spec=pltpu.PrefetchScalarGridSpec(
            num_scalar_prefetch=0,
            grid=(N, HT),
            in_specs=[
                # Whole padded image per n; index constant across h, so it is
                # fetched once per batch element by the pipeline.
                pl.BlockSpec((1, Hp2, Wp, Cp), lambda n, h: (n, 0, 0, 0)),
                # Weight index never changes -> stays resident across the grid.
                pl.BlockSpec((KH * KW, Cp, Pp), lambda n, h: (0, 0, 0)),
            ],
            out_specs=(
                pl.BlockSpec((1, TH, W, Pp), lambda n, h: (n, h, 0, 0)),
                pl.BlockSpec((1, 1, 2, Pp), lambda n, h: (n, h, 0, 0)),
            ),
        ),
        compiler_params=pltpu.CompilerParams(
            dimension_semantics=("parallel", "parallel"),
            vmem_limit_bytes=vmem_limit,
        ),
    )
    y, stats = conv(x, w)

    # ---- combine per-strip partials (tiny, plain JAX; Welford-style). ----
    rows_valid = jnp.minimum(TH, H - jnp.arange(HT) * TH).astype(jnp.float32)
    cnt_t = (rows_valid * W)[None, :, None]              # true elems per (n, strip)
    s1 = stats[:, :, 0, :]                               # (N, HT, Pp)
    s2 = stats[:, :, 1, :]
    cnt = jnp.float32(N * H * W)
    mean = jnp.sum(s1, axis=(0, 1)) / cnt
    m_t = s1 / cnt_t
    M2_t = s2 - s1 * m_t                                 # per-strip sum of squared dev
    M2 = jnp.sum(M2_t + cnt_t * jnp.square(m_t - mean), axis=(0, 1))
    var = jnp.maximum(M2 / cnt, 0.0)                     # biased batch variance

    gamma_p = jnp.pad(gamma.astype(jnp.float32), (0, Pp - P))   # padded gamma = 0
    beta_p = jnp.pad(beta.astype(jnp.float32), (0, Pp - P))     # -> padded chans stay 0
    scale = gamma_p * jax.lax.rsqrt(var + eps)
    shift = beta_p - mean * scale

    # ---- pass 2: streamed BN + ReLU (fully parallel, mem-bound). ----
    bn_relu = pl.pallas_call(
        _bn_relu_kernel,
        out_shape=jax.ShapeDtypeStruct((N, H, W, Pp), x_nchw.dtype),
        grid_spec=pltpu.PrefetchScalarGridSpec(
            num_scalar_prefetch=0,
            grid=(N, HT),
            in_specs=[
                pl.BlockSpec((1, TH, W, Pp), lambda n, h: (n, h, 0, 0)),
                pl.BlockSpec((1, Pp), lambda n, h: (0, 0)),
                pl.BlockSpec((1, Pp), lambda n, h: (0, 0)),
            ],
            out_specs=pl.BlockSpec((1, TH, W, Pp), lambda n, h: (n, h, 0, 0)),
        ),
        compiler_params=pltpu.CompilerParams(
            dimension_semantics=("parallel", "parallel"),
            vmem_limit_bytes=vmem_limit,
        ),
    )
    out = bn_relu(y, scale.reshape(1, Pp), shift.reshape(1, Pp))

    # ---- interface glue: drop channel padding (if any), NHWC -> NCHW. ----
    if Pp != P:
        out = out[..., :P]
    if data_format == "NCHW":
        out = jnp.transpose(out, (0, 3, 1, 2))
    return out


def _reference_forward(x_nchw, weight_oikk, gamma, beta, rate, eps=1e-5):
    """Pure-JAX reference (lax conv + training-mode BN + ReLU) for validation."""
    pad = 0 if rate == 1 else rate
    y = jax.lax.conv_general_dilated(
        x_nchw, weight_oikk,
        window_strides=(1, 1),
        padding=((pad, pad), (pad, pad)),
        rhs_dilation=(rate, rate),
        dimension_numbers=("NCHW", "OIHW", "NCHW"),
    )
    mean = jnp.mean(y, axis=(0, 2, 3), keepdims=True)
    var = jnp.mean(jnp.square(y - mean), axis=(0, 2, 3), keepdims=True)
    yn = (y - mean) * jax.lax.rsqrt(var + eps)
    yn = yn * gamma.reshape(1, -1, 1, 1) + beta.reshape(1, -1, 1, 1)
    return jnp.maximum(yn, 0.0)


if __name__ == "__main__":
    def make_case(key, N, C, H, W, P, rate):
        KH = KW = 1 if rate == 1 else 3
        k_x, k_w = jax.random.split(key)
        x = jax.random.normal(k_x, (N, C, H, W), jnp.float32)
        # kaiming_normal_ (fan_in, gain=sqrt(2)); BN gamma=1, beta=0.
        fan_in = C * KH * KW
        w = (2.0 / fan_in) ** 0.5 * jax.random.normal(k_w, (P, C, KH, KW), jnp.float32)
        return x, w, jnp.ones((P,), jnp.float32), jnp.zeros((P,), jnp.float32)

    k1, k2 = jax.random.split(jax.random.PRNGKey(0))

    # Case 1: rate=2 -> 3x3 conv, padding=2, dilation=2.
    x, w, gamma, beta = make_case(k1, N=2, C=4, H=16, W=16, P=8, rate=2)
    ref = jax.block_until_ready(_reference_forward(x, w, gamma, beta, 2))

    # Exact-precision mode (f32 MXU operands): tight check against the reference.
    out_f32 = jax.block_until_ready(
        aspp_forward(x, w, gamma, beta, 2, matmul_dtype=jnp.float32))
    assert out_f32.shape == (2, 8, 16, 16), out_f32.shape
    err = float(jnp.max(jnp.abs(out_f32 - ref)))
    assert jnp.allclose(out_f32, ref, atol=2e-3, rtol=2e-3), err

    # Default performance mode (bf16 MXU operands + bf16 intermediate):
    # tolerance reflects bf16's ~1e-2 relative error band.
    out_bf = jax.block_until_ready(aspp_forward(x, w, gamma, beta, 2))
    err_bf = float(jnp.max(jnp.abs(out_bf - ref)))
    assert jnp.allclose(out_bf, ref, atol=1e-1, rtol=1e-1), err_bf

    # Case 2: rate=1 -> 1x1 conv, padding=0, plus a ragged H strip (18 = 2*8 + 2).
    x2, w2, gamma2, beta2 = make_case(k2, N=1, C=8, H=18, W=18, P=16, rate=1)
    ref2 = jax.block_until_ready(_reference_forward(x2, w2, gamma2, beta2, 1))
    out2 = jax.block_until_ready(
        aspp_forward(x2, w2, gamma2, beta2, 1, matmul_dtype=jnp.float32, h_tile=8))
    err2 = float(jnp.max(jnp.abs(out2 - ref2)))
    assert out2.shape == (1, 16, 18, 18), out2.shape
    assert jnp.allclose(out2, ref2, atol=2e-3, rtol=2e-3), err2

    print("KERNEL_OK")
</pallas_src>

<mosaic_0001>
module attributes {stable_mosaic.version = 11 : i64} {
  func.func @_conv_stats_kernel(%arg0: i32, %arg1: i32, %arg2: memref<1x20x20x128xf32, #tpu.memory_space<vmem>>, %arg3: memref<9x128x128xf32, #tpu.memory_space<vmem>>, %arg4: memref<1x16x16x128xf32, #tpu.memory_space<vmem>>, %arg5: memref<1x1x2x128xf32, #tpu.memory_space<vmem>>) attributes {dimension_semantics = [#tpu.dimension_semantics<parallel>, #tpu.dimension_semantics<parallel>], iteration_bounds = array<i64: 2, 1>, scalar_prefetch = 0 : i64, scratch_operands = 0 : i64, tpu.core_type = #tpu.core_type<tc>, window_params = [{transform_indices = @transform_0, window_bounds = array<i64: 1, 20, 20, 128>}, {pipeline_mode = #tpu.pipeline_mode<synchronous>, transform_indices = @transform_1, window_bounds = array<i64: 9, 128, 128>}, {transform_indices = @transform_2, window_bounds = array<i64: 1, 16, 16, 128>}, {transform_indices = @transform_3, window_bounds = array<i64: 1, 1, 2, 128>}]} {
    %c16_i32 = arith.constant 16 : i32
    %0 = arith.muli %arg1, %c16_i32 : i32
    %1 = tpu.assume_multiple %0, 8 : i32
    %cst = arith.constant 0.000000e+00 : f32
    %2 = vector.broadcast %cst : f32 to vector<256x128xf32>
    %c0_i32 = arith.constant 0 : i32
    %3 = arith.addi %1, %c0_i32 : i32
    %c0 = arith.constant 0 : index
    %4 = arith.index_cast %3 : i32 to index
    %c0_0 = arith.constant 0 : index
    %c0_1 = arith.constant 0 : index
    %5 = vector.load %arg2[%c0, %4, %c0_0, %c0_1] : memref<1x20x20x128xf32, #tpu.memory_space<vmem>>, vector<1x16x16x128xf32>
    %6 = vector.shape_cast %5 : vector<1x16x16x128xf32> to vector<16x16x128xf32>
    %7 = vector.shape_cast %6 : vector<16x16x128xf32> to vector<256x128xf32>
    %c0_2 = arith.constant 0 : index
    %c0_3 = arith.constant 0 : index
    %c0_4 = arith.constant 0 : index
    %8 = vector.load %arg3[%c0_2, %c0_3, %c0_4] : memref<9x128x128xf32, #tpu.memory_space<vmem>>, vector<1x128x128xf32>
    %9 = vector.shape_cast %8 : vector<1x128x128xf32> to vector<128x128xf32>
    %cst_5 = arith.constant dense<0.000000e+00> : vector<256x128xf32>
    %10 = tpu.matmul %7, %9, %cst_5 {dimension_numbers = #tpu.dot_dimension_numbers<[1], [0], [0], [1], [0, 0, 1, 1], [], []>} : vector<256x128xf32>, vector<128x128xf32>, vector<256x128xf32> -> vector<256x128xf32>
    %11 = arith.addf %2, %10 : vector<256x128xf32>
    %c0_i32_6 = arith.constant 0 : i32
    %12 = arith.addi %1, %c0_i32_6 : i32
    %c0_7 = arith.constant 0 : index
    %13 = arith.index_cast %12 : i32 to index
    %c2 = arith.constant 2 : index
    %c0_8 = arith.constant 0 : index
    %14 = vector.load %arg2[%c0_7, %13, %c2, %c0_8] : memref<1x20x20x128xf32, #tpu.memory_space<vmem>>, vector<1x16x16x128xf32>
    %15 = vector.shape_cast %14 : vector<1x16x16x128xf32> to vector<16x16x128xf32>
    %16 = vector.shape_cast %15 : vector<16x16x128xf32> to vector<256x128xf32>
    %c1 = arith.constant 1 : index
    %c0_9 = arith.constant 0 : index
    %c0_10 = arith.constant 0 : index
    %17 = vector.load %arg3[%c1, %c0_9, %c0_10] : memref<9x128x128xf32, #tpu.memory_space<vmem>>, vector<1x128x128xf32>
    %18 = vector.shape_cast %17 : vector<1x128x128xf32> to vector<128x128xf32>
    %cst_11 = arith.constant dense<0.000000e+00> : vector<256x128xf32>
    %19 = tpu.matmul %16, %18, %cst_11 {dimension_numbers = #tpu.dot_dimension_numbers<[1], [0], [0], [1], [0, 0, 1, 1], [], []>} : vector<256x128xf32>, vector<128x128xf32>, vector<256x128xf32> -> vector<256x128xf32>
    %20 = arith.addf %11, %19 : vector<256x128xf32>
    %c0_i32_12 = arith.constant 0 : i32
    %21 = arith.addi %1, %c0_i32_12 : i32
    %c0_13 = arith.constant 0 : index
    %22 = arith.index_cast %21 : i32 to index
    %c4 = arith.constant 4 : index
    %c0_14 = arith.constant 0 : index
    %23 = vector.load %arg2[%c0_13, %22, %c4, %c0_14] : memref<1x20x20x128xf32, #tpu.memory_space<vmem>>, vector<1x16x16x128xf32>
    %24 = vector.shape_cast %23 : vector<1x16x16x128xf32> to vector<16x16x128xf32>
    %25 = vector.shape_cast %24 : vector<16x16x128xf32> to vector<256x128xf32>
    %c2_15 = arith.constant 2 : index
    %c0_16 = arith.constant 0 : index
    %c0_17 = arith.constant 0 : index
    %26 = vector.load %arg3[%c2_15, %c0_16, %c0_17] : memref<9x128x128xf32, #tpu.memory_space<vmem>>, vector<1x128x128xf32>
    %27 = vector.shape_cast %26 : vector<1x128x128xf32> to vector<128x128xf32>
    %cst_18 = arith.constant dense<0.000000e+00> : vector<256x128xf32>
    %28 = tpu.matmul %25, %27, %cst_18 {dimension_numbers = #tpu.dot_dimension_numbers<[1], [0], [0], [1], [0, 0, 1, 1], [], []>} : vector<256x128xf32>, vector<128x128xf32>, vector<256x128xf32> -> vector<256x128xf32>
    %29 = arith.addf %20, %28 : vector<256x128xf32>
    %c2_i32 = arith.constant 2 : i32
    %30 = arith.addi %1, %c2_i32 : i32
    %c0_19 = arith.constant 0 : index
    %31 = arith.index_cast %30 : i32 to index
    %c0_20 = arith.constant 0 : index
    %c0_21 = arith.constant 0 : index
    %32 = vector.load %arg2[%c0_19, %31, %c0_20, %c0_21] : memref<1x20x20x128xf32, #tpu.memory_space<vmem>>, vector<1x16x16x128xf32>
    %33 = vector.shape_cast %32 : vector<1x16x16x128xf32> to vector<16x16x128xf32>
    %34 = vector.shape_cast %33 : vector<16x16x128xf32> to vector<256x128xf32>
    %c3 = arith.constant 3 : index
    %c0_22 = arith.constant 0 : index
    %c0_23 = arith.constant 0 : index
    %35 = vector.load %arg3[%c3, %c0_22, %c0_23] : memref<9x128x128xf32, #tpu.memory_space<vmem>>, vector<1x128x128xf32>
    %36 = vector.shape_cast %35 : vector<1x128x128xf32> to vector<128x128xf32>
    %cst_24 = arith.constant dense<0.000000e+00> : vector<256x128xf32>
    %37 = tpu.matmul %34, %36, %cst_24 {dimension_numbers = #tpu.dot_dimension_numbers<[1], [0], [0], [1], [0, 0, 1, 1], [], []>} : vector<256x128xf32>, vector<128x128xf32>, vector<256x128xf32> -> vector<256x128xf32>
    %38 = arith.addf %29, %37 : vector<256x128xf32>
    %c2_i32_25 = arith.constant 2 : i32
    %39 = arith.addi %1, %c2_i32_25 : i32
    %c0_26 = arith.constant 0 : index
    %40 = arith.index_cast %39 : i32 to index
    %c2_27 = arith.constant 2 : index
    %c0_28 = arith.constant 0 : index
    %41 = vector.load %arg2[%c0_26, %40, %c2_27, %c0_28] : memref<1x20x20x128xf32, #tpu.memory_space<vmem>>, vector<1x16x16x128xf32>
    %42 = vector.shape_cast %41 : vector<1x16x16x128xf32> to vector<16x16x128xf32>
    %43 = vector.shape_cast %42 : vector<16x16x128xf32> to vector<256x128xf32>
    %c4_29 = arith.constant 4 : index
    %c0_30 = arith.constant 0 : index
    %c0_31 = arith.constant 0 : index
    %44 = vector.load %arg3[%c4_29, %c0_30, %c0_31] : memref<9x128x128xf32, #tpu.memory_space<vmem>>, vector<1x128x128xf32>
    %45 = vector.shape_cast %44 : vector<1x128x128xf32> to vector<128x128xf32>
    %cst_32 = arith.constant dense<0.000000e+00> : vector<256x128xf32>
    %46 = tpu.matmul %43, %45, %cst_32 {dimension_numbers = #tpu.dot_dimension_numbers<[1], [0], [0], [1], [0, 0, 1, 1], [], []>} : vector<256x128xf32>, vector<128x128xf32>, vector<256x128xf32> -> vector<256x128xf32>
    %47 = arith.addf %38, %46 : vector<256x128xf32>
    %c2_i32_33 = arith.constant 2 : i32
    %48 = arith.addi %1, %c2_i32_33 : i32
    %c0_34 = arith.constant 0 : index
    %49 = arith.index_cast %48 : i32 to index
    %c4_35 = arith.constant 4 : index
    %c0_36 = arith.constant 0 : index
    %50 = vector.load %arg2[%c0_34, %49, %c4_35, %c0_36] : memref<1x20x20x128xf32, #tpu.memory_space<vmem>>, vector<1x16x16x128xf32>
    %51 = vector.shape_cast %50 : vector<1x16x16x128xf32> to vector<16x16x128xf32>
    %52 = vector.shape_cast %51 : vector<16x16x128xf32> to vector<256x128xf32>
    %c5 = arith.constant 5 : index
    %c0_37 = arith.constant 0 : index
    %c0_38 = arith.constant 0 : index
    %53 = vector.load %arg3[%c5, %c0_37, %c0_38] : memref<9x128x128xf32, #tpu.memory_space<vmem>>, vector<1x128x128xf32>
    %54 = vector.shape_cast %53 : vector<1x128x128xf32> to vector<128x128xf32>
    %cst_39 = arith.constant dense<0.000000e+00> : vector<256x128xf32>
    %55 = tpu.matmul %52, %54, %cst_39 {dimension_numbers = #tpu.dot_dimension_numbers<[1], [0], [0], [1], [0, 0, 1, 1], [], []>} : vector<256x128xf32>, vector<128x128xf32>, vector<256x128xf32> -> vector<256x128xf32>
    %56 = arith.addf %47, %55 : vector<256x128xf32>
    %c4_i32 = arith.constant 4 : i32
    %57 = arith.addi %1, %c4_i32 : i32
    %c0_40 = arith.constant 0 : index
    %58 = arith.index_cast %57 : i32 to index
    %c0_41 = arith.constant 0 : index
    %c0_42 = arith.constant 0 : index
    %59 = vector.load %arg2[%c0_40, %58, %c0_41, %c0_42] : memref<1x20x20x128xf32, #tpu.memory_space<vmem>>, vector<1x16x16x128xf32>
    %60 = vector.shape_cast %59 : vector<1x16x16x128xf32> to vector<16x16x128xf32>
    %61 = vector.shape_cast %60 : vector<16x16x128xf32> to vector<256x128xf32>
    %c6 = arith.constant 6 : index
    %c0_43 = arith.constant 0 : index
    %c0_44 = arith.constant 0 : index
    %62 = vector.load %arg3[%c6, %c0_43, %c0_44] : memref<9x128x128xf32, #tpu.memory_space<vmem>>, vector<1x128x128xf32>
    %63 = vector.shape_cast %62 : vector<1x128x128xf32> to vector<128x128xf32>
    %cst_45 = arith.constant dense<0.000000e+00> : vector<256x128xf32>
    %64 = tpu.matmul %61, %63, %cst_45 {dimension_numbers = #tpu.dot_dimension_numbers<[1], [0], [0], [1], [0, 0, 1, 1], [], []>} : vector<256x128xf32>, vector<128x128xf32>, vector<256x128xf32> -> vector<256x128xf32>
    %65 = arith.addf %56, %64 : vector<256x128xf32>
    %c4_i32_46 = arith.constant 4 : i32
    %66 = arith.addi %1, %c4_i32_46 : i32
    %c0_47 = arith.constant 0 : index
    %67 = arith.index_cast %66 : i32 to index
    %c2_48 = arith.constant 2 : index
    %c0_49 = arith.constant 0 : index
    %68 = vector.load %arg2[%c0_47, %67, %c2_48, %c0_49] : memref<1x20x20x128xf32, #tpu.memory_space<vmem>>, vector<1x16x16x128xf32>
    %69 = vector.shape_cast %68 : vector<1x16x16x128xf32> to vector<16x16x128xf32>
    %70 = vector.shape_cast %69 : vector<16x16x128xf32> to vector<256x128xf32>
    %c7 = arith.constant 7 : index
    %c0_50 = arith.constant 0 : index
    %c0_51 = arith.constant 0 : index
    %71 = vector.load %arg3[%c7, %c0_50, %c0_51] : memref<9x128x128xf32, #tpu.memory_space<vmem>>, vector<1x128x128xf32>
    %72 = vector.shape_cast %71 : vector<1x128x128xf32> to vector<128x128xf32>
    %cst_52 = arith.constant dense<0.000000e+00> : vector<256x128xf32>
    %73 = tpu.matmul %70, %72, %cst_52 {dimension_numbers = #tpu.dot_dimension_numbers<[1], [0], [0], [1], [0, 0, 1, 1], [], []>} : vector<256x128xf32>, vector<128x128xf32>, vector<256x128xf32> -> vector<256x128xf32>
    %74 = arith.addf %65, %73 : vector<256x128xf32>
    %c4_i32_53 = arith.constant 4 : i32
    %75 = arith.addi %1, %c4_i32_53 : i32
    %c0_54 = arith.constant 0 : index
    %76 = arith.index_cast %75 : i32 to index
    %c4_55 = arith.constant 4 : index
    %c0_56 = arith.constant 0 : index
    %77 = vector.load %arg2[%c0_54, %76, %c4_55, %c0_56] : memref<1x20x20x128xf32, #tpu.memory_space<vmem>>, vector<1x16x16x128xf32>
    %78 = vector.shape_cast %77 : vector<1x16x16x128xf32> to vector<16x16x128xf32>
    %79 = vector.shape_cast %78 : vector<16x16x128xf32> to vector<256x128xf32>
    %c8 = arith.constant 8 : index
    %c0_57 = arith.constant 0 : index
    %c0_58 = arith.constant 0 : index
    %80 = vector.load %arg3[%c8, %c0_57, %c0_58] : memref<9x128x128xf32, #tpu.memory_space<vmem>>, vector<1x128x128xf32>
    %81 = vector.shape_cast %80 : vector<1x128x128xf32> to vector<128x128xf32>
    %cst_59 = arith.constant dense<0.000000e+00> : vector<256x128xf32>
    %82 = tpu.matmul %79, %81, %cst_59 {dimension_numbers = #tpu.dot_dimension_numbers<[1], [0], [0], [1], [0, 0, 1, 1], [], []>} : vector<256x128xf32>, vector<128x128xf32>, vector<256x128xf32> -> vector<256x128xf32>
    %83 = arith.addf %74, %82 : vector<256x128xf32>
    %84 = vector.shape_cast %83 : vector<256x128xf32> to vector<1x16x16x128xf32>
    %c0_60 = arith.constant 0 : index
    %c0_61 = arith.constant 0 : index
    %c0_62 = arith.constant 0 : index
    %c0_63 = arith.constant 0 : index
    %85 = vector.load %arg4[%c0_60, %c0_61, %c0_62, %c0_63] : memref<1x16x16x128xf32, #tpu.memory_space<vmem>>, vector<1x16x16x128xf32>
    tpu.vector_store %arg4[%c0_60, %c0_61, %c0_62, %c0_63], %84 {strides = array<i32>} : memref<1x16x16x128xf32, #tpu.memory_space<vmem>>, vector<1x16x16x128xf32>,
    %cst_64 = arith.constant dense<0.000000e+00> : vector<128xf32>
    %86 = vector.multi_reduction <add>, %83, %cst_64 [0] : vector<256x128xf32> to vector<128xf32>
    %87 = vector.shape_cast %86 : vector<128xf32> to vector<1x128xf32>
    %88 = arith.mulf %83, %83 : vector<256x128xf32>
    %cst_65 = arith.constant dense<0.000000e+00> : vector<128xf32>
    %89 = vector.multi_reduction <add>, %88, %cst_65 [0] : vector<256x128xf32> to vector<128xf32>
    %90 = vector.shape_cast %89 : vector<128xf32> to vector<1x128xf32>
    %91 = tpu.concatenate %87, %90 in 0 : vector<1x128xf32>, vector<1x128xf32> -> vector<2x128xf32>
    %92 = vector.shape_cast %91 : vector<2x128xf32> to vector<1x1x2x128xf32>
    %c0_66 = arith.constant 0 : index
    %c0_67 = arith.constant 0 : index
    %c0_68 = arith.constant 0 : index
    %c0_69 = arith.constant 0 : index
    %93 = vector.load %arg5[%c0_66, %c0_67, %c0_68, %c0_69] : memref<1x1x2x128xf32, #tpu.memory_space<vmem>>, vector<1x1x2x128xf32>
    tpu.vector_store %arg5[%c0_66, %c0_67, %c0_68, %c0_69], %92 {strides = array<i32>} : memref<1x1x2x128xf32, #tpu.memory_space<vmem>>, vector<1x1x2x128xf32>,
    return
  }
  func.func @transform_0(%arg0: i32, %arg1: i32) -> (i32, i32, i32, i32) {
    %c0_i32 = arith.constant 0 : i32
    %c0_i32_0 = arith.constant 0 : i32
    %c0_i32_1 = arith.constant 0 : i32
    %c0_i32_2 = arith.constant 0 : i32
    return %arg0, %c0_i32, %c0_i32_0, %c0_i32_1 : i32, i32, i32, i32
  }
  func.func @transform_1(%arg0: i32, %arg1: i32) -> (i32, i32, i32) {
    %c0_i32 = arith.constant 0 : i32
    %c0_i32_0 = arith.constant 0 : i32
    %c0_i32_1 = arith.constant 0 : i32
    %c0_i32_2 = arith.constant 0 : i32
    return %c0_i32, %c0_i32_0, %c0_i32_1 : i32, i32, i32
  }
  func.func @transform_2(%arg0: i32, %arg1: i32) -> (i32, i32, i32, i32) {
    %c0_i32 = arith.constant 0 : i32
    %c0_i32_0 = arith.constant 0 : i32
    %c0_i32_1 = arith.constant 0 : i32
    return %arg0, %arg1, %c0_i32, %c0_i32_0 : i32, i32, i32, i32
  }
  func.func @transform_3(%arg0: i32, %arg1: i32) -> (i32, i32, i32, i32) {
    %c0_i32 = arith.constant 0 : i32
    %c0_i32_0 = arith.constant 0 : i32
    %c0_i32_1 = arith.constant 0 : i32
    return %arg0, %arg1, %c0_i32, %c0_i32_0 : i32, i32, i32, i32
  }
}

</mosaic_0001>

<llo_original>
// kernel: tpu_custom_call.1
$region0: #{tpu_custom_call.1}
  #allocation0 [shape = 'u32[]', space=smem, size = 0x4, offset = 0x4, fixed_abs, tag = 'smem constant byte address 0x4 - core index']
  #allocation1 [shape = 'u32[144,128]{1,0:T(1,128)}', space=vmem, size = 0x12000, scoped, tag = 'internal scratch']
  %s0 = inlined_call_operand.vmem [shape: f32[2,20,20,128], index: 0, kind: input, shape index: {}]
  %s1 = inlined_call_operand.vmem [shape: f32[9,128,128], index: 1, kind: input, shape index: {}]
  %s2 = inlined_call_operand.hbm [shape: f32[2,16,16,128], index: 2, kind: output, shape index: {0}]
  %s3 = inlined_call_operand.hbm [shape: f32[2,1,2,128], index: 3, kind: output, shape index: {1}]
  %4 = xla_tuple %s2, %s3
  %s5 = sld [smem:[#allocation0]]
  $region49: #{tpu_custom_call.1} parent=0
    _
  %s7 = ssub.s32 1, %s5
  %s8 = scalar_select 0, %s7, %s5
  $region1: #{tpu_custom_call.1} parent=0
    #allocation2 [shape = 'u8[262144]{0}', space=vmem, size = 0x40000, scoped, tag = 'output window, operand 0']
    #allocation3 [shape = 's32[2]{0}', space=sflag, size = 0x8, scoped, tag = 'scoped memory for tpu_custom_call.1']
    #allocation4 [shape = 'u8[2048]{0}', space=vmem, size = 0x800, scoped, tag = 'output window, operand 1']
    #allocation5 [shape = 's32[2]{0}', space=sflag, size = 0x8, scoped, tag = 'scoped memory for tpu_custom_call.1']
    %9 = vsyncpa [#allocation3], 0
    %s10 = scalar_lea.sflag [#allocation3], 1
    %11 = vsyncpa %s10, 0
    %12 = vsyncpa [#allocation5], 0
    %s13 = scalar_lea.sflag [#allocation5], 1
    %14 = vsyncpa %s13, 0
    loop: start=0, step=1, limit=4
    $region2: #{tpu_custom_call.1} parent=1 // loop_pre_header
      _
    $region3: #{tpu_custom_call.1} parent=1 // loop_header
      %s16 = sphi 0, %s20
      %p17 = scmp.ge.s32.totalorder %s16, 4
      %s23 = sphi 0, %s35
      %s24 = sphi 0, %s31
      %s25 = sphi 0, %s23
      %s26 = sphi 0, %s24
      %s27 = sphi 0, %s25
      %s28 = sphi 0, %s26
      %s38 = sphi 0, %s40
      %s41 = sphi 0, %s38
      %s42 = sphi 0, %s41
      %s58 = sphi 0, %s42
      %s62 = sphi 0, %s62
      %s64 = sphi 0, %s62
      %s65 = sphi 0, %s64
      %s79 = sphi 0, %s65
      %s87 = sphi 0, %s89
      %s90 = sphi 0, %s87
      %s91 = sphi 0, %s90
      %s107 = sphi 0, %s91
      %s115 = sphi 0, %s117
      %s118 = sphi 0, %s115
      %s119 = sphi 0, %s118
      %s135 = sphi 0, %s119
    $region4: #{tpu_custom_call.1} parent=1 // loop_header_branch
      %19 = sbr.rel (%p17) target = $region8
    $region5: #{tpu_custom_call.1} parent=1 // loop_body
      %s21 = ssub.s32 %s16, 1
      %s22 = ssub.s32 %s16, 2
      %s29 = sadd.s32 1, %s24
      %p30 = scmp.ge.s32.totalorder %s29, 1
      %s31 = scalar_select %p30, 0, %s29
      %s32 = sadd.s32 1, %s23
      %s33 = scalar_select %p30, %s32, %s23
      %p34 = scmp.ge.s32.totalorder %s33, 2
      %s35 = scalar_select %p34, 0, %s33
      %s36 = ssub.s32 %s23, %s35
      %p37 = scmp.eq.s32.totalorder %s36, 0
      %s39 = sadd.s32 %s38, 1
      %s40 = scalar_select %p37, %s38, %s39
      %p43 = pneg %p37
      %p44 = scmp.eq.s32.totalorder %s16, 1
      %p45 = por %p43, %p44
      %p46 = scmp.ne.s32.totalorder %s38, %s41
      %p47 = scmp.eq.s32.totalorder %s16, 0
      %p48 = por %p46, %p47
      %p49 = scmp.ne.s32.totalorder %s38, %s41
      %p50 = scmp.eq.s32.totalorder %s21, 1
      %p51 = por %p49, %p50
      %p52 = scmp.ne.s32.totalorder %s41, %s42
      %p53 = scmp.eq.s32.totalorder %s21, 0
      %p54 = por %p52, %p53
      %p55 = scmp.ne.s32.totalorder %s41, %s42
      %p56 = scmp.eq.s32.totalorder %s22, 1
      %p57 = por %p55, %p56
      %p59 = scmp.ne.s32.totalorder %s42, %s58
      %p60 = scmp.eq.s32.totalorder %s22, 0
      %p61 = por %p59, %p60
      %s63 = sadd.s32 %s62, 1
      %p66 = scmp.eq.s32.totalorder %s16, 1
      %p67 = scmp.ne.s32.totalorder %s62, %s64
      %p68 = scmp.eq.s32.totalorder %s16, 0
      %p69 = por %p67, %p68
      %p70 = scmp.ne.s32.totalorder %s62, %s64
      %p71 = scmp.eq.s32.totalorder %s21, 1
      %p72 = por %p70, %p71
      %p73 = scmp.ne.s32.totalorder %s64, %s65
      %p74 = scmp.eq.s32.totalorder %s21, 0
      %p75 = por %p73, %p74
      %p76 = scmp.ne.s32.totalorder %s64, %s65
      %p77 = scmp.eq.s32.totalorder %s22, 1
      %p78 = por %p76, %p77
      %p80 = scmp.ne.s32.totalorder %s65, %s79
      %p81 = scmp.eq.s32.totalorder %s22, 0
      %p82 = por %p80, %p81
      %s83 = ssub.s32 %s23, %s35
      %s84 = ssub.s32 %s24, %s31
      %s85 = sor.u32 %s83, %s84
      %p86 = scmp.eq.s32.totalorder %s85, 0
      %s88 = sadd.s32 %s87, 1
      %s89 = scalar_select %p86, %s87, %s88
      %p92 = pneg %p86
      %p93 = scmp.eq.s32.totalorder %s16, 1
      %p94 = por %p92, %p93
      %p95 = scmp.ne.s32.totalorder %s87, %s90
      %p96 = scmp.eq.s32.totalorder %s16, 0
      %p97 = por %p95, %p96
      %p98 = scmp.ne.s32.totalorder %s87, %s90
      %p99 = scmp.eq.s32.totalorder %s21, 1
      %p100 = por %p98, %p99
      %p101 = scmp.ne.s32.totalorder %s90, %s91
      %p102 = scmp.eq.s32.totalorder %s21, 0
      %p103 = por %p101, %p102
      %p104 = scmp.ne.s32.totalorder %s90, %s91
      %p105 = scmp.eq.s32.totalorder %s22, 1
      %p106 = por %p104, %p105
      %p108 = scmp.ne.s32.totalorder %s91, %s107
      %p109 = scmp.eq.s32.totalorder %s22, 0
      %p110 = por %p108, %p109
      %s111 = ssub.s32 %s23, %s35
      %s112 = ssub.s32 %s24, %s31
      %s113 = sor.u32 %s111, %s112
      %p114 = scmp.eq.s32.totalorder %s113, 0
      %s116 = sadd.s32 %s115, 1
      %s117 = scalar_select %p114, %s115, %s116
      %p120 = pneg %p114
      %p121 = scmp.eq.s32.totalorder %s16, 1
      %p122 = por %p120, %p121
      %p123 = scmp.ne.s32.totalorder %s115, %s118
      %p124 = scmp.eq.s32.totalorder %s16, 0
      %p125 = por %p123, %p124
      %p126 = scmp.ne.s32.totalorder %s115, %s118
      %p127 = scmp.eq.s32.totalorder %s21, 1
      %p128 = por %p126, %p127
      %p129 = scmp.ne.s32.totalorder %s118, %s119
      %p130 = scmp.eq.s32.totalorder %s21, 0
      %p131 = por %p129, %p130
      %p132 = scmp.ne.s32.totalorder %s118, %s119
      %p133 = scmp.eq.s32.totalorder %s22, 1
      %p134 = por %p132, %p133
      %p136 = scmp.ne.s32.totalorder %s119, %s135
      %p137 = scmp.eq.s32.totalorder %s22, 0
      %p138 = por %p136, %p137
      %p139 = scmp.le.s32.totalorder 1, %s16
      %p140 = scmp.lt.s32.totalorder %s16, 3
      %p141 = pnand %p139, %p140
      %p142 = pneg %p141
      // Predicated region
      $region9: #{tpu_custom_call.1} parent=5 // pred_check
        _
      $region10: #{tpu_custom_call.1} parent=5 // pred_check_branch
        %144 = sbr.rel (%p141) target = $region12
      $region11: #{tpu_custom_call.1} parent=5 // pred_region
        %s145 = ssub.s32 %s16, 1
        // Predicated region
        $region13: #{tpu_custom_call.1} parent=11 // pred_check
          %p146 = pneg %p75
        $region14: #{tpu_custom_call.1} parent=11 // pred_check_branch
          %148 = sbr.rel (%p146) target = $region16
        $region15: #{tpu_custom_call.1} parent=11 // pred_region
          _
        $region16: #{tpu_custom_call.1} parent=11 // pred_fallthru
          _
      $region12: #{tpu_custom_call.1} parent=5 // pred_fallthru
        _
      %p149 = scmp.lt.s32.totalorder %s16, 2
      // Predicated region
      $region17: #{tpu_custom_call.1} parent=5 // pred_check
        %p150 = pneg %p149
      $region18: #{tpu_custom_call.1} parent=5 // pred_check_branch
        %152 = sbr.rel (%p150) target = $region20
      $region19: #{tpu_custom_call.1} parent=5 // pred_region
        // Predicated region
        $region21: #{tpu_custom_call.1} parent=19 // pred_check
          %p153 = pneg %p48
        $region22: #{tpu_custom_call.1} parent=19 // pred_check_branch
          %155 = sbr.rel (%p153) target = $region24
        $region23: #{tpu_custom_call.1} parent=19 // pred_region
          %p156 = scmp.lt.s32.totalorder %s23, 1
          %s157 = scalar_select %p156, %s23, 1
          %s158 = smul.addr %s157, 60
          %s159 = smul.addr %s158, 8
          %s160 = scalar_lea.vmem %s0, %s159
        $region24: #{tpu_custom_call.1} parent=19 // pred_fallthru
          _
      $region20: #{tpu_custom_call.1} parent=5 // pred_fallthru
        _
      %p161 = scmp.le.s32.totalorder 1, %s16
      %p162 = scmp.lt.s32.totalorder %s16, 3
      %p163 = pnand %p161, %p162
      %p164 = pneg %p163
      // Predicated region
      $region25: #{tpu_custom_call.1} parent=5 // pred_check
        _
      $region26: #{tpu_custom_call.1} parent=5 // pred_check_branch
        %166 = sbr.rel (%p163) target = $region28
      $region27: #{tpu_custom_call.1} parent=5 // pred_region
        %s167 = ssub.s32 %s16, 1
        %p168 = scmp.lt.s32.totalorder %s25, 1
        %s169 = scalar_select %p168, %s25, 1
        %s170 = smul.addr %s169, 60
        %s171 = smul.addr %s170, 8
        %s172 = scalar_lea.vmem %s0, %s171
        %p173 = pneg %p54
        %p174 = pneg %p51
        %p175 = pneg %p75
        %p176 = pneg %p72
        %p177 = pneg %p103
        %p178 = pneg %p100
        %s179 = sand.u32 %s90, 1
        %s180 = scalar_lea.sflag [#allocation3], %s179
        %s181 = sand.u32 %s90, 1
        %s182 = smul.addr %s181, 256
        %s183 = scalar_lea.vmem [#allocation2], %s182
        %p184 = pneg %p131
        %p185 = pneg %p128
        %s186 = sand.u32 %s118, 1
        %s187 = scalar_lea.sflag [#allocation5], %s186
        %s188 = sand.u32 %s118, 1
        %s189 = smul.addr %s188, 2
        %s190 = scalar_lea.vmem [#allocation4], %s189
        %p191 = scmp.lt.s32.totalorder %s25, 1
        %s192 = scalar_select %p191, %s25, 1
        %s193 = smul.addr %s192, 60
        %s194 = smul.addr %s193, 8
        %s195 = scalar_lea.vmem %s0, %s194
        %s196 = smul.u32 16, %s26
        %s197 = smul.u32 %s26, 16
        %s198 = smul.u32 %s197, 24
        %s199 = scalar_lea.vmem %s195, %s198
        %v200 = vld [vmem:[%s199] sm:$0xff]
        %v201 = vld [vmem:[%s199 + $0x8] sm:$0xff]
        %v202 = vld [vmem:[%s199 + $0x18] sm:$0xff]
        %v203 = vld [vmem:[%s199 + $0x20] sm:$0xff]
        %v204 = vld [vmem:[%s199 + $0x30] sm:$0xff]
        %v205 = vld [vmem:[%s199 + $0x38] sm:$0xff]
        %v206 = vld [vmem:[%s199 + $0x48] sm:$0xff]
        %v207 = vld [vmem:[%s199 + $0x50] sm:$0xff]
        %v208 = vld [vmem:[%s199 + $0x60] sm:$0xff]
        %v209 = vld [vmem:[%s199 + $0x68] sm:$0xff]
        %v210 = vld [vmem:[%s199 + $0x78] sm:$0xff]
        %v211 = vld [vmem:[%s199 + $0x80] sm:$0xff]
        %v212 = vld [vmem:[%s199 + $0x90] sm:$0xff]
        %v213 = vld [vmem:[%s199 + $0x98] sm:$0xff]
        %v214 = vld [vmem:[%s199 + $0xa8] sm:$0xff]
        %v215 = vld [vmem:[%s199 + $0xb0] sm:$0xff]
        %v216 = vld [vmem:[%s199 + $0xc0] sm:$0xff]
        %v217 = vld [vmem:[%s199 + $0xc8] sm:$0xff]
        %v218 = vld [vmem:[%s199 + $0xd8] sm:$0xff]
        %v219 = vld [vmem:[%s199 + $0xe0] sm:$0xff]
        %v220 = vld [vmem:[%s199 + $0xf0] sm:$0xff]
        %v221 = vld [vmem:[%s199 + $0xf8] sm:$0xff]
        %v222 = vld [vmem:[%s199 + $0x108] sm:$0xff]
        %v223 = vld [vmem:[%s199 + $0x110] sm:$0xff]
        %v224 = vld [vmem:[%s199 + $0x120] sm:$0xff]
        %v225 = vld [vmem:[%s199 + $0x128] sm:$0xff]
        %v226 = vld [vmem:[%s199 + $0x138] sm:$0xff]
        %v227 = vld [vmem:[%s199 + $0x140] sm:$0xff]
        %v228 = vld [vmem:[%s199 + $0x150] sm:$0xff]
        %v229 = vld [vmem:[%s199 + $0x158] sm:$0xff]
        %v230 = vld [vmem:[%s199 + $0x168] sm:$0xff]
        %v231 = vld [vmem:[%s199 + $0x170] sm:$0xff]
        %v232 = vld [vmem:[%s1] sm:$0xff]
        %v233 = vld [vmem:[%s1 + $0x8] sm:$0xff]
        %v234 = vld [vmem:[%s1 + $0x10] sm:$0xff]
        %v235 = vld [vmem:[%s1 + $0x18] sm:$0xff]
        %v236 = vld [vmem:[%s1 + $0x20] sm:$0xff]
        %v237 = vld [vmem:[%s1 + $0x28] sm:$0xff]
        %v238 = vld [vmem:[%s1 + $0x30] sm:$0xff]
        %v239 = vld [vmem:[%s1 + $0x38] sm:$0xff]
        %v240 = vld [vmem:[%s1 + $0x40] sm:$0xff]
        %v241 = vld [vmem:[%s1 + $0x48] sm:$0xff]
        %v242 = vld [vmem:[%s1 + $0x50] sm:$0xff]
        %v243 = vld [vmem:[%s1 + $0x58] sm:$0xff]
        %v244 = vld [vmem:[%s1 + $0x60] sm:$0xff]
        %v245 = vld [vmem:[%s1 + $0x68] sm:$0xff]
        %v246 = vld [vmem:[%s1 + $0x70] sm:$0xff]
        %v247 = vld [vmem:[%s1 + $0x78] sm:$0xff]
        %v248 = vld [vmem:[%s199 + $0x2] sm:$0xff]
        %v249 = vld [vmem:[%s199 + $0xa] sm:$0xff]
        %v250 = vld [vmem:[%s199 + $0x1a] sm:$0xff]
        %v251 = vld [vmem:[%s199 + $0x22] sm:$0xff]
        %v252 = vld [vmem:[%s199 + $0x32] sm:$0xff]
        %v253 = vld [vmem:[%s199 + $0x3a] sm:$0xff]
        %v254 = vld [vmem:[%s199 + $0x4a] sm:$0xff]
        %v255 = vld [vmem:[%s199 + $0x52] sm:$0xff]
        %v256 = vld [vmem:[%s199 + $0x62] sm:$0xff]
        %v257 = vld [vmem:[%s199 + $0x6a] sm:$0xff]
        %v258 = vld [vmem:[%s199 + $0x7a] sm:$0xff]
        %v259 = vld [vmem:[%s199 + $0x82] sm:$0xff]
        %v260 = vld [vmem:[%s199 + $0x92] sm:$0xff]
        %v261 = vld [vmem:[%s199 + $0x9a] sm:$0xff]
        %v262 = vld [vmem:[%s199 + $0xaa] sm:$0xff]
        %v263 = vld [vmem:[%s199 + $0xb2] sm:$0xff]
        %v264 = vld [vmem:[%s199 + $0xc2] sm:$0xff]
        %v265 = vld [vmem:[%s199 + $0xca] sm:$0xff]
        %v266 = vld [vmem:[%s199 + $0xda] sm:$0xff]
        %v267 = vld [vmem:[%s199 + $0xe2] sm:$0xff]
        %v268 = vld [vmem:[%s199 + $0xf2] sm:$0xff]
        %v269 = vld [vmem:[%s199 + $0xfa] sm:$0xff]
        %v270 = vld [vmem:[%s199 + $0x10a] sm:$0xff]
        %v271 = vld [vmem:[%s199 + $0x112] sm:$0xff]
        %v272 = vld [vmem:[%s199 + $0x122] sm:$0xff]
        %v273 = vld [vmem:[%s199 + $0x12a] sm:$0xff]
        %v274 = vld [vmem:[%s199 + $0x13a] sm:$0xff]
        %v275 = vld [vmem:[%s199 + $0x142] sm:$0xff]
        %v276 = vld [vmem:[%s199 + $0x152] sm:$0xff]
        %v277 = vld [vmem:[%s199 + $0x15a] sm:$0xff]
        %v278 = vld [vmem:[%s199 + $0x16a] sm:$0xff]
        %v279 = vld [vmem:[%s199 + $0x172] sm:$0xff]
        %s280 = scalar_lea.vmem %s1, 128
        %v281 = vld [vmem:[%s280] sm:$0xff]
        %v282 = vld [vmem:[%s280 + $0x8] sm:$0xff]
        %v283 = vld [vmem:[%s280 + $0x10] sm:$0xff]
        %v284 = vld [vmem:[%s280 + $0x18] sm:$0xff]
        %v285 = vld [vmem:[%s280 + $0x20] sm:$0xff]
        %v286 = vld [vmem:[%s280 + $0x28] sm:$0xff]
        %v287 = vld [vmem:[%s280 + $0x30] sm:$0xff]
        %v288 = vld [vmem:[%s280 + $0x38] sm:$0xff]
        %v289 = vld [vmem:[%s280 + $0x40] sm:$0xff]
        %v290 = vld [vmem:[%s280 + $0x48] sm:$0xff]
        %v291 = vld [vmem:[%s280 + $0x50] sm:$0xff]
        %v292 = vld [vmem:[%s280 + $0x58] sm:$0xff]
        %v293 = vld [vmem:[%s280 + $0x60] sm:$0xff]
        %v294 = vld [vmem:[%s280 + $0x68] sm:$0xff]
        %v295 = vld [vmem:[%s280 + $0x70] sm:$0xff]
        %v296 = vld [vmem:[%s280 + $0x78] sm:$0xff]
        %297 = vmatprep.subr.mxu0 0.0
        %298 = vmatpush1.msra.mxu0 %v281
        %299 = vmatprep.subr.mxu0 0.0
        %300 = vmatpush1.msra.mxu0 %v282
        %301 = vmatprep.subr.mxu0 0.0
        %302 = vmatpush1.msra.mxu0 %v283
        %303 = vmatprep.subr.mxu0 0.0
        %304 = vmatpush1.msra.mxu0 %v284
        %305 = vmatprep.subr.mxu0 0.0
        %306 = vmatpush1.msra.mxu0 %v285
        %307 = vmatprep.subr.mxu0 0.0
        %308 = vmatpush1.msra.mxu0 %v286
        %309 = vmatprep.subr.mxu0 0.0
        %310 = vmatpush1.msra.mxu0 %v287
        %311 = vmatprep.subr.mxu0 0.0
        %312 = vmatpush1.msra.mxu0 %v288
        %313 = vmatprep.subr.mxu0 0.0
        %314 = vmatpush1.msra.mxu0 %v289
        %315 = vmatprep.subr.mxu0 0.0
        %316 = vmatpush1.msra.mxu0 %v290
        %317 = vmatprep.subr.mxu0 0.0
        %318 = vmatpush1.msra.mxu0 %v291
        %319 = vmatprep.subr.mxu0 0.0
        %320 = vmatpush1.msra.mxu0 %v292
        %321 = vmatprep.subr.mxu0 0.0
        %322 = vmatpush1.msra.mxu0 %v293
        %323 = vmatprep.subr.mxu0 0.0
        %324 = vmatpush1.msra.mxu0 %v294
        %325 = vmatprep.subr.mxu0 0.0
        %326 = vmatpush1.msra.mxu0 %v295
        %327 = vmatprep.subr.mxu0 0.0
        %328 = vmatpush1.msra.mxu0 %v296
        %329 = vmatprep.subr.mxu0 0.0
        %330 = vmatpush1.msra.mxu0 0.0
        %331 = vmatprep.subr.mxu0 0.0
        %332 = vmatpush1.msra.mxu0 0.0
        %333 = vmatprep.subr.mxu0 0.0
        %334 = vmatpush1.msra.mxu0 0.0
        %335 = vmatprep.subr.mxu0 0.0
        %336 = vmatpush1.msra.mxu0 0.0
        %337 = vmatprep.subr.mxu0 0.0
        %338 = vmatpush1.msra.mxu0 0.0
        %339 = vmatprep.subr.mxu0 0.0
        %340 = vmatpush1.msra.mxu0 0.0
        %341 = vmatprep.subr.mxu0 0.0
        %342 = vmatpush1.msra.mxu0 0.0
        %343 = vmatprep.subr.mxu0 0.0
        %344 = vmatpush1.msra.mxu0 0.0
        %345 = vmatprep.subr.mxu0 0.0
        %346 = vmatpush1.msra.mxu0 0.0
        %347 = vmatprep.subr.mxu0 0.0
        %348 = vmatpush1.msra.mxu0 0.0
        %349 = vmatprep.subr.mxu0 0.0
        %350 = vmatpush1.msra.mxu0 0.0
        %351 = vmatprep.subr.mxu0 0.0
        %352 = vmatpush1.msra.mxu0 0.0
        %353 = vmatprep.subr.mxu0 0.0
        %354 = vmatpush1.msra.mxu0 0.0
        %355 = vmatprep.subr.mxu0 0.0
        %356 = vmatpush1.msra.mxu0 0.0
        %357 = vmatprep.subr.mxu0 0.0
        %358 = vmatpush1.msra.mxu0 0.0
        %359 = vmatprep.subr.mxu0 0.0
        %360 = vmatpush1.msra.mxu0 0.0
        %361 = vmatprep.mubr.f32.mxu0 0.0
        %362 = vmatmul.mubr.f32.gmra.mrb[0].mxu0 %v248
        %v363 = vpop.f32.mrb[0].mxu0
        %v364 = vadd.f32 0.0, %v363
        %v365 = vpop.f32.mrb[0].mxu0
        %366 = vmatprep.mubr.f32.mxu0 0.0
        %367 = vmatmul.mubr.f32.gmra.mrb[0].mxu0 %v249
        %v368 = vpop.f32.mrb[0].mxu0
        %v369 = vadd.f32 0.0, %v368
        %v370 = vpop.f32.mrb[0].mxu0
        %371 = vmatprep.mubr.f32.mxu0 0.0
        %372 = vmatmul.mubr.f32.gmra.mrb[0].mxu0 %v250
        %v373 = vpop.f32.mrb[0].mxu0
        %v374 = vadd.f32 0.0, %v373
        %v375 = vpop.f32.mrb[0].mxu0
        %376 = vmatprep.mubr.f32.mxu0 0.0
        %377 = vmatmul.mubr.f32.gmra.mrb[0].mxu0 %v251
        %v378 = vpop.f32.mrb[0].mxu0
        %v379 = vadd.f32 0.0, %v378
        %v380 = vpop.f32.mrb[0].mxu0
        %381 = vmatprep.mubr.f32.mxu0 0.0
        %382 = vmatmul.mubr.f32.gmra.mrb[0].mxu0 %v252
        %v383 = vpop.f32.mrb[0].mxu0
        %v384 = vadd.f32 0.0, %v383
        %v385 = vpop.f32.mrb[0].mxu0
        %386 = vmatprep.mubr.f32.mxu0 0.0
        %387 = vmatmul.mubr.f32.gmra.mrb[0].mxu0 %v253
        %v388 = vpop.f32.mrb[0].mxu0
        %v389 = vadd.f32 0.0, %v388
        %v390 = vpop.f32.mrb[0].mxu0
        %391 = vmatprep.mubr.f32.mxu0 0.0
        %392 = vmatmul.mubr.f32.gmra.mrb[0].mxu0 %v254
        %v393 = vpop.f32.mrb[0].mxu0
        %v394 = vadd.f32 0.0, %v393
        %v395 = vpop.f32.mrb[0].mxu0
        %396 = vmatprep.mubr.f32.mxu0 0.0
        %397 = vmatmul.mubr.f32.gmra.mrb[0].mxu0 %v255
        %v398 = vpop.f32.mrb[0].mxu0
        %v399 = vadd.f32 0.0, %v398
        %v400 = vpop.f32.mrb[0].mxu0
        %401 = vmatprep.mubr.f32.mxu0 0.0
        %402 = vmatmul.mubr.f32.gmra.mrb[0].mxu0 %v256
        %v403 = vpop.f32.mrb[0].mxu0
        %v404 = vadd.f32 0.0, %v403
        %v405 = vpop.f32.mrb[0].mxu0
        %406 = vmatprep.mubr.f32.mxu0 0.0
        %407 = vmatmul.mubr.f32.gmra.mrb[0].mxu0 %v257
        %v408 = vpop.f32.mrb[0].mxu0
        %v409 = vadd.f32 0.0, %v408
        %v410 = vpop.f32.mrb[0].mxu0
        %411 = vmatprep.mubr.f32.mxu0 0.0
        %412 = vmatmul.mubr.f32.gmra.mrb[0].mxu0 %v258
        %v413 = vpop.f32.mrb[0].mxu0
        %v414 = vadd.f32 0.0, %v413
        %v415 = vpop.f32.mrb[0].mxu0
        %416 = vmatprep.mubr.f32.mxu0 0.0
        %417 = vmatmul.mubr.f32.gmra.mrb[0].mxu0 %v259
        %v418 = vpop.f32.mrb[0].mxu0
        %v419 = vadd.f32 0.0, %v418
        %v420 = vpop.f32.mrb[0].mxu0
        %421 = vmatprep.mubr.f32.mxu0 0.0
        %422 = vmatmul.mubr.f32.gmra.mrb[0].mxu0 %v260
        %v423 = vpop.f32.mrb[0].mxu0
        %v424 = vadd.f32 0.0, %v423
        %v425 = vpop.f32.mrb[0].mxu0
        %426 = vmatprep.mubr.f32.mxu0 0.0
        %427 = vmatmul.mubr.f32.gmra.mrb[0].mxu0 %v261
        %v428 = vpop.f32.mrb[0].mxu0
        %v429 = vadd.f32 0.0, %v428
        %v430 = vpop.f32.mrb[0].mxu0
        %431 = vmatprep.mubr.f32.mxu0 0.0
        %432 = vmatmul.mubr.f32.gmra.mrb[0].mxu0 %v262
        %v433 = vpop.f32.mrb[0].mxu0
        %v434 = vadd.f32 0.0, %v433
        %v435 = vpop.f32.mrb[0].mxu0
        %436 = vmatprep.mubr.f32.mxu0 0.0
        %437 = vmatmul.mubr.f32.gmra.mrb[0].mxu0 %v263
        %v438 = vpop.f32.mrb[0].mxu0
        %v439 = vadd.f32 0.0, %v438
        %v440 = vpop.f32.mrb[0].mxu0
        %441 = vmatprep.mubr.f32.mxu0 0.0
        %442 = vmatmul.mubr.f32.gmra.mrb[0].mxu0 %v264
        %v443 = vpop.f32.mrb[0].mxu0
        %v444 = vadd.f32 0.0, %v443
        %v445 = vpop.f32.mrb[0].mxu0
        %446 = vmatprep.mubr.f32.mxu0 0.0
        %447 = vmatmul.mubr.f32.gmra.mrb[0].mxu0 %v265
        %v448 = vpop.f32.mrb[0].mxu0
        %v449 = vadd.f32 0.0, %v448
        %v450 = vpop.f32.mrb[0].mxu0
        %451 = vmatprep.mubr.f32.mxu0 0.0
        %452 = vmatmul.mubr.f32.gmra.mrb[0].mxu0 %v266
        %v453 = vpop.f32.mrb[0].mxu0
        %v454 = vadd.f32 0.0, %v453
        %v455 = vpop.f32.mrb[0].mxu0
        %456 = vmatprep.mubr.f32.mxu0 0.0
        %457 = vmatmul.mubr.f32.gmra.mrb[0].mxu0 %v267
        %v458 = vpop.f32.mrb[0].mxu0
        %v459 = vadd.f32 0.0, %v458
        %v460 = vpop.f32.mrb[0].mxu0
        %461 = vmatprep.mubr.f32.mxu0 0.0
        %462 = vmatmul.mubr.f32.gmra.mrb[0].mxu0 %v268
        %v463 = vpop.f32.mrb[0].mxu0
        %v464 = vadd.f32 0.0, %v463
        %v465 = vpop.f32.mrb[0].mxu0
        %466 = vmatprep.mubr.f32.mxu0 0.0
        %467 = vmatmul.mubr.f32.gmra.mrb[0].mxu0 %v269
        %v468 = vpop.f32.mrb[0].mxu0
        %v469 = vadd.f32 0.0, %v468
        %v470 = vpop.f32.mrb[0].mxu0
        %471 = vmatprep.mubr.f32.mxu0 0.0
        %472 = vmatmul.mubr.f32.gmra.mrb[0].mxu0 %v270
        %v473 = vpop.f32.mrb[0].mxu0
        %v474 = vadd.f32 0.0, %v473
        %v475 = vpop.f32.mrb[0].mxu0
        %476 = vmatprep.mubr.f32.mxu0 0.0
        %477 = vmatmul.mubr.f32.gmra.mrb[0].mxu0 %v271
        %v478 = vpop.f32.mrb[0].mxu0
        %v479 = vadd.f32 0.0, %v478
        %v480 = vpop.f32.mrb[0].mxu0
        %481 = vmatprep.mubr.f32.mxu0 0.0
        %482 = vmatmul.mubr.f32.gmra.mrb[0].mxu0 %v272
        %v483 = vpop.f32.mrb[0].mxu0
        %v484 = vadd.f32 0.0, %v483
        %v485 = vpop.f32.mrb[0].mxu0
        %486 = vmatprep.mubr.f32.mxu0 0.0
        %487 = vmatmul.mubr.f32.gmra.mrb[0].mxu0 %v273
        %v488 = vpop.f32.mrb[0].mxu0
        %v489 = vadd.f32 0.0, %v488
        %v490 = vpop.f32.mrb[0].mxu0
        %491 = vmatprep.mubr.f32.mxu0 0.0
        %492 = vmatmul.mubr.f32.gmra.mrb[0].mxu0 %v274
        %v493 = vpop.f32.mrb[0].mxu0
        %v494 = vadd.f32 0.0, %v493
        %v495 = vpop.f32.mrb[0].mxu0
        %496 = vmatprep.mubr.f32.mxu0 0.0
        %497 = vmatmul.mubr.f32.gmra.mrb[0].mxu0 %v275
        %v498 = vpop.f32.mrb[0].mxu0
        %v499 = vadd.f32 0.0, %v498
        %v500 = vpop.f32.mrb[0].mxu0
        %501 = vmatprep.mubr.f32.mxu0 0.0
        %502 = vmatmul.mubr.f32.gmra.mrb[0].mxu0 %v276
        %v503 = vpop.f32.mrb[0].mxu0
        %v504 = vadd.f32 0.0, %v503
        %v505 = vpop.f32.mrb[0].mxu0
        %506 = vmatprep.mubr.f32.mxu0 0.0
        %507 = vmatmul.mubr.f32.gmra.mrb[0].mxu0 %v277
        %v508 = vpop.f32.mrb[0].mxu0
        %v509 = vadd.f32 0.0, %v508
        %v510 = vpop.f32.mrb[0].mxu0
        %511 = vmatprep.mubr.f32.mxu0 0.0
        %512 = vmatmul.mubr.f32.gmra.mrb[0].mxu0 %v278
        %v513 = vpop.f32.mrb[0].mxu0
        %v514 = vadd.f32 0.0, %v513
        %v515 = vpop.f32.mrb[0].mxu0
        %516 = vmatprep.mubr.f32.mxu0 0.0
        %517 = vmatmul.mubr.f32.gmra.mrb[0].mxu0 %v279
        %v518 = vpop.f32.mrb[0].mxu0
        %v519 = vadd.f32 0.0, %v518
        %v520 = vpop.f32.mrb[0].mxu0
        %521 = vdwg.mxu0
        %522 = vmatprep.subr.mxu0 0.0
        %523 = vmatpush1.msra.mxu0 %v232
        %524 = vmatprep.subr.mxu0 0.0
        %525 = vmatpush1.msra.mxu0 %v233
        %526 = vmatprep.subr.mxu0 0.0
        %527 = vmatpush1.msra.mxu0 %v234
        %528 = vmatprep.subr.mxu0 0.0
        %529 = vmatpush1.msra.mxu0 %v235
        %530 = vmatprep.subr.mxu0 0.0
        %531 = vmatpush1.msra.mxu0 %v236
        %532 = vmatprep.subr.mxu0 0.0
        %533 = vmatpush1.msra.mxu0 %v237
        %534 = vmatprep.subr.mxu0 0.0
        %535 = vmatpush1.msra.mxu0 %v238
        %536 = vmatprep.subr.mxu0 0.0
        %537 = vmatpush1.msra.mxu0 %v239
        %538 = vmatprep.subr.mxu0 0.0
        %539 = vmatpush1.msra.mxu0 %v240
        %540 = vmatprep.subr.mxu0 0.0
        %541 = vmatpush1.msra.mxu0 %v241
        %542 = vmatprep.subr.mxu0 0.0
        %543 = vmatpush1.msra.mxu0 %v242
        %544 = vmatprep.subr.mxu0 0.0
        %545 = vmatpush1.msra.mxu0 %v243
        %546 = vmatprep.subr.mxu0 0.0
        %547 = vmatpush1.msra.mxu0 %v244
        %548 = vmatprep.subr.mxu0 0.0
        %549 = vmatpush1.msra.mxu0 %v245
        %550 = vmatprep.subr.mxu0 0.0
        %551 = vmatpush1.msra.mxu0 %v246
        %552 = vmatprep.subr.mxu0 0.0
        %553 = vmatpush1.msra.mxu0 %v247
        %554 = vmatprep.subr.mxu0 0.0
        %555 = vmatpush1.msra.mxu0 0.0
        %556 = vmatprep.subr.mxu0 0.0
        %557 = vmatpush1.msra.mxu0 0.0
        %558 = vmatprep.subr.mxu0 0.0
        %559 = vmatpush1.msra.mxu0 0.0
        %560 = vmatprep.subr.mxu0 0.0
        %561 = vmatpush1.msra.mxu0 0.0
        %562 = vmatprep.subr.mxu0 0.0
        %563 = vmatpush1.msra.mxu0 0.0
        %564 = vmatprep.subr.mxu0 0.0
        %565 = vmatpush1.msra.mxu0 0.0
        %566 = vmatprep.subr.mxu0 0.0
        %567 = vmatpush1.msra.mxu0 0.0
        %568 = vmatprep.subr.mxu0 0.0
        %569 = vmatpush1.msra.mxu0 0.0
        %570 = vmatprep.subr.mxu0 0.0
        %571 = vmatpush1.msra.mxu0 0.0
        %572 = vmatprep.subr.mxu0 0.0
        %573 = vmatpush1.msra.mxu0 0.0
        %574 = vmatprep.subr.mxu0 0.0
        %575 = vmatpush1.msra.mxu0 0.0
        %576 = vmatprep.subr.mxu0 0.0
        %577 = vmatpush1.msra.mxu0 0.0
        %578 = vmatprep.subr.mxu0 0.0
        %579 = vmatpush1.msra.mxu0 0.0
        %580 = vmatprep.subr.mxu0 0.0
        %581 = vmatpush1.msra.mxu0 0.0
        %582 = vmatprep.subr.mxu0 0.0
        %583 = vmatpush1.msra.mxu0 0.0
        %584 = vmatprep.subr.mxu0 0.0
        %585 = vmatpush1.msra.mxu0 0.0
        %586 = vmatprep.mubr.f32.mxu0 0.0
        %587 = vmatmul.mubr.f32.gmra.mrb[0].mxu0 %v200
        %v588 = vpop.f32.mrb[0].mxu0
        %v589 = vadd.f32 %v364, %v588
        %v590 = vpop.f32.mrb[0].mxu0
        %591 = vmatprep.mubr.f32.mxu0 0.0
        %592 = vmatmul.mubr.f32.gmra.mrb[0].mxu0 %v201
        %v593 = vpop.f32.mrb[0].mxu0
        %v594 = vadd.f32 %v369, %v593
        %v595 = vpop.f32.mrb[0].mxu0
        %596 = vmatprep.mubr.f32.mxu0 0.0
        %597 = vmatmul.mubr.f32.gmra.mrb[0].mxu0 %v202
        %v598 = vpop.f32.mrb[0].mxu0
        %v599 = vadd.f32 %v374, %v598
        %v600 = vpop.f32.mrb[0].mxu0
        %601 = vmatprep.mubr.f32.mxu0 0.0
        %602 = vmatmul.mubr.f32.gmra.mrb[0].mxu0 %v203
        %v603 = vpop.f32.mrb[0].mxu0
        %v604 = vadd.f32 %v379, %v603
        %v605 = vpop.f32.mrb[0].mxu0
        %606 = vmatprep.mubr.f32.mxu0 0.0
        %607 = vmatmul.mubr.f32.gmra.mrb[0].mxu0 %v204
        %v608 = vpop.f32.mrb[0].mxu0
        %v609 = vadd.f32 %v384, %v608
        %v610 = vpop.f32.mrb[0].mxu0
        %611 = vmatprep.mubr.f32.mxu0 0.0
        %612 = vmatmul.mubr.f32.gmra.mrb[0].mxu0 %v205
        %v613 = vpop.f32.mrb[0].mxu0
        %v614 = vadd.f32 %v389, %v613
        %v615 = vpop.f32.mrb[0].mxu0
        %616 = vmatprep.mubr.f32.mxu0 0.0
        %617 = vmatmul.mubr.f32.gmra.mrb[0].mxu0 %v206
        %v618 = vpop.f32.mrb[0].mxu0
        %v619 = vadd.f32 %v394, %v618
        %v620 = vpop.f32.mrb[0].mxu0
        %621 = vmatprep.mubr.f32.mxu0 0.0
        %622 = vmatmul.mubr.f32.gmra.mrb[0].mxu0 %v207
        %v623 = vpop.f32.mrb[0].mxu0
        %v624 = vadd.f32 %v399, %v623
        %v625 = vpop.f32.mrb[0].mxu0
        %626 = vmatprep.mubr.f32.mxu0 0.0
        %627 = vmatmul.mubr.f32.gmra.mrb[0].mxu0 %v208
        %v628 = vpop.f32.mrb[0].mxu0
        %v629 = vadd.f32 %v404, %v628
        %v630 = vpop.f32.mrb[0].mxu0
        %631 = vmatprep.mubr.f32.mxu0 0.0
        %632 = vmatmul.mubr.f32.gmra.mrb[0].mxu0 %v209
        %v633 = vpop.f32.mrb[0].mxu0
        %v634 = vadd.f32 %v409, %v633
        %v635 = vpop.f32.mrb[0].mxu0
        %636 = vmatprep.mubr.f32.mxu0 0.0
        %637 = vmatmul.mubr.f32.gmra.mrb[0].mxu0 %v210
        %v638 = vpop.f32.mrb[0].mxu0
        %v639 = vadd.f32 %v414, %v638
        %v640 = vpop.f32.mrb[0].mxu0
        %641 = vmatprep.mubr.f32.mxu0 0.0
        %642 = vmatmul.mubr.f32.gmra.mrb[0].mxu0 %v211
        %v643 = vpop.f32.mrb[0].mxu0
        %v644 = vadd.f32 %v419, %v643
        %v645 = vpop.f32.mrb[0].mxu0
        %646 = vmatprep.mubr.f32.mxu0 0.0
        %647 = vmatmul.mubr.f32.gmra.mrb[0].mxu0 %v212
        %v648 = vpop.f32.mrb[0].mxu0
        %v649 = vadd.f32 %v424, %v648
        %v650 = vpop.f32.mrb[0].mxu0
        %651 = vmatprep.mubr.f32.mxu0 0.0
        %652 = vmatmul.mubr.f32.gmra.mrb[0].mxu0 %v213
        %v653 = vpop.f32.mrb[0].mxu0
        %v654 = vadd.f32 %v429, %v653
        %v655 = vpop.f32.mrb[0].mxu0
        %656 = vmatprep.mubr.f32.mxu0 0.0
        %657 = vmatmul.mubr.f32.gmra.mrb[0].mxu0 %v214
        %v658 = vpop.f32.mrb[0].mxu0
        %v659 = vadd.f32 %v434, %v658
        %v660 = vpop.f32.mrb[0].mxu0
        %661 = vmatprep.mubr.f32.mxu0 0.0
        %662 = vmatmul.mubr.f32.gmra.mrb[0].mxu0 %v215
        %v663 = vpop.f32.mrb[0].mxu0
        %v664 = vadd.f32 %v439, %v663
        %v665 = vpop.f32.mrb[0].mxu0
        %666 = vmatprep.mubr.f32.mxu0 0.0
        %667 = vmatmul.mubr.f32.gmra.mrb[0].mxu0 %v216
        %v668 = vpop.f32.mrb[0].mxu0
        %v669 = vadd.f32 %v444, %v668
        %v670 = vpop.f32.mrb[0].mxu0
        %671 = vmatprep.mubr.f32.mxu0 0.0
        %672 = vmatmul.mubr.f32.gmra.mrb[0].mxu0 %v217
        %v673 = vpop.f32.mrb[0].mxu0
        %v674 = vadd.f32 %v449, %v673
        %v675 = vpop.f32.mrb[0].mxu0
        %676 = vmatprep.mubr.f32.mxu0 0.0
        %677 = vmatmul.mubr.f32.gmra.mrb[0].mxu0 %v218
        %v678 = vpop.f32.mrb[0].mxu0
        %v679 = vadd.f32 %v454, %v678
        %v680 = vpop.f32.mrb[0].mxu0
        %681 = vmatprep.mubr.f32.mxu0 0.0
        %682 = vmatmul.mubr.f32.gmra.mrb[0].mxu0 %v219
        %v683 = vpop.f32.mrb[0].mxu0
        %v684 = vadd.f32 %v459, %v683
        %v685 = vpop.f32.mrb[0].mxu0
        %686 = vmatprep.mubr.f32.mxu0 0.0
        %687 = vmatmul.mubr.f32.gmra.mrb[0].mxu0 %v220
        %v688 = vpop.f32.mrb[0].mxu0
        %v689 = vadd.f32 %v464, %v688
        %v690 = vpop.f32.mrb[0].mxu0
        %691 = vmatprep.mubr.f32.mxu0 0.0
        %692 = vmatmul.mubr.f32.gmra.mrb[0].mxu0 %v221
        %v693 = vpop.f32.mrb[0].mxu0
        %v694 = vadd.f32 %v469, %v693
        %v695 = vpop.f32.mrb[0].mxu0
        %696 = vmatprep.mubr.f32.mxu0 0.0
        %697 = vmatmul.mubr.f32.gmra.mrb[0].mxu0 %v222
        %v698 = vpop.f32.mrb[0].mxu0
        %v699 = vadd.f32 %v474, %v698
        %v700 = vpop.f32.mrb[0].mxu0
        %701 = vmatprep.mubr.f32.mxu0 0.0
        %702 = vmatmul.mubr.f32.gmra.mrb[0].mxu0 %v223
        %v703 = vpop.f32.mrb[0].mxu0
        %v704 = vadd.f32 %v479, %v703
        %v705 = vpop.f32.mrb[0].mxu0
        %706 = vmatprep.mubr.f32.mxu0 0.0
        %707 = vmatmul.mubr.f32.gmra.mrb[0].mxu0 %v224
        %v708 = vpop.f32.mrb[0].mxu0
        %v709 = vadd.f32 %v484, %v708
        %v710 = vpop.f32.mrb[0].mxu0
        %711 = vmatprep.mubr.f32.mxu0 0.0
        %712 = vmatmul.mubr.f32.gmra.mrb[0].mxu0 %v225
        %v713 = vpop.f32.mrb[0].mxu0
        %v714 = vadd.f32 %v489, %v713
        %v715 = vpop.f32.mrb[0].mxu0
        %716 = vmatprep.mubr.f32.mxu0 0.0
        %717 = vmatmul.mubr.f32.gmra.mrb[0].mxu0 %v226
        %v718 = vpop.f32.mrb[0].mxu0
        %v719 = vadd.f32 %v494, %v718
        %v720 = vpop.f32.mrb[0].mxu0
        %721 = vmatprep.mubr.f32.mxu0 0.0
        %722 = vmatmul.mubr.f32.gmra.mrb[0].mxu0 %v227
        %v723 = vpop.f32.mrb[0].mxu0
        %v724 = vadd.f32 %v499, %v723
        %v725 = vpop.f32.mrb[0].mxu0
        %726 = vmatprep.mubr.f32.mxu0 0.0
        %727 = vmatmul.mubr.f32.gmra.mrb[0].mxu0 %v228
        %v728 = vpop.f32.mrb[0].mxu0
        %v729 = vadd.f32 %v504, %v728
        %v730 = vpop.f32.mrb[0].mxu0
        %731 = vmatprep.mubr.f32.mxu0 0.0
        %732 = vmatmul.mubr.f32.gmra.mrb[0].mxu0 %v229
        %v733 = vpop.f32.mrb[0].mxu0
        %v734 = vadd.f32 %v509, %v733
        %v735 = vpop.f32.mrb[0].mxu0
        %736 = vmatprep.mubr.f32.mxu0 0.0
        %737 = vmatmul.mubr.f32.gmra.mrb[0].mxu0 %v230
        %v738 = vpop.f32.mrb[0].mxu0
        %v739 = vadd.f32 %v514, %v738
        %v740 = vpop.f32.mrb[0].mxu0
        %741 = vmatprep.mubr.f32.mxu0 0.0
        %742 = vmatmul.mubr.f32.gmra.mrb[0].mxu0 %v231
        %v743 = vpop.f32.mrb[0].mxu0
        %v744 = vadd.f32 %v519, %v743
        %v745 = vpop.f32.mrb[0].mxu0
        %746 = vdwg.mxu0
        %v747 = vld [vmem:[%s199 + $0x4] sm:$0xff]
        %v748 = vld [vmem:[%s199 + $0xc] sm:$0xff]
        %v749 = vld [vmem:[%s199 + $0x1c] sm:$0xff]
        %v750 = vld [vmem:[%s199 + $0x24] sm:$0xff]
        %v751 = vld [vmem:[%s199 + $0x34] sm:$0xff]
        %v752 = vld [vmem:[%s199 + $0x3c] sm:$0xff]
        %v753 = vld [vmem:[%s199 + $0x4c] sm:$0xff]
        %v754 = vld [vmem:[%s199 + $0x54] sm:$0xff]
        %v755 = vld [vmem:[%s199 + $0x64] sm:$0xff]
        %v756 = vld [vmem:[%s199 + $0x6c] sm:$0xff]
        %v757 = vld [vmem:[%s199 + $0x7c] sm:$0xff]
        %v758 = vld [vmem:[%s199 + $0x84] sm:$0xff]
        %v759 = vld [vmem:[%s199 + $0x94] sm:$0xff]
        %v760 = vld [vmem:[%s199 + $0x9c] sm:$0xff]
        %v761 = vld [vmem:[%s199 + $0xac] sm:$0xff]
        %v762 = vld [vmem:[%s199 + $0xb4] sm:$0xff]
        %v763 = vld [vmem:[%s199 + $0xc4] sm:$0xff]
        %v764 = vld [vmem:[%s199 + $0xcc] sm:$0xff]
        %v765 = vld [vmem:[%s199 + $0xdc] sm:$0xff]
        %v766 = vld [vmem:[%s199 + $0xe4] sm:$0xff]
        %v767 = vld [vmem:[%s199 + $0xf4] sm:$0xff]
        %v768 = vld [vmem:[%s199 + $0xfc] sm:$0xff]
        %v769 = vld [vmem:[%s199 + $0x10c] sm:$0xff]
        %v770 = vld [vmem:[%s199 + $0x114] sm:$0xff]
        %v771 = vld [vmem:[%s199 + $0x124] sm:$0xff]
        %v772 = vld [vmem:[%s199 + $0x12c] sm:$0xff]
        %v773 = vld [vmem:[%s199 + $0x13c] sm:$0xff]
        %v774 = vld [vmem:[%s199 + $0x144] sm:$0xff]
        %v775 = vld [vmem:[%s199 + $0x154] sm:$0xff]
        %v776 = vld [vmem:[%s199 + $0x15c] sm:$0xff]
        %v777 = vld [vmem:[%s199 + $0x16c] sm:$0xff]
        %v778 = vld [vmem:[%s199 + $0x174] sm:$0xff]
        %s779 = scalar_lea.vmem %s1, 256
        %v780 = vld [vmem:[%s779] sm:$0xff]
        %v781 = vld [vmem:[%s779 + $0x8] sm:$0xff]
        %v782 = vld [vmem:[%s779 + $0x10] sm:$0xff]
        %v783 = vld [vmem:[%s779 + $0x18] sm:$0xff]
        %v784 = vld [vmem:[%s779 + $0x20] sm:$0xff]
        %v785 = vld [vmem:[%s779 + $0x28] sm:$0xff]
        %v786 = vld [vmem:[%s779 + $0x30] sm:$0xff]
        %v787 = vld [vmem:[%s779 + $0x38] sm:$0xff]
        %v788 = vld [vmem:[%s779 + $0x40] sm:$0xff]
        %v789 = vld [vmem:[%s779 + $0x48] sm:$0xff]
        %v790 = vld [vmem:[%s779 + $0x50] sm:$0xff]
        %v791 = vld [vmem:[%s779 + $0x58] sm:$0xff]
        %v792 = vld [vmem:[%s779 + $0x60] sm:$0xff]
        %v793 = vld [vmem:[%s779 + $0x68] sm:$0xff]
        %v794 = vld [vmem:[%s779 + $0x70] sm:$0xff]
        %v795 = vld [vmem:[%s779 + $0x78] sm:$0xff]
        %796 = vmatprep.subr.mxu0 0.0
        %797 = vmatpush1.msra.mxu0 %v780
        %798 = vmatprep.subr.mxu0 0.0
        %799 = vmatpush1.msra.mxu0 %v781
        %800 = vmatprep.subr.mxu0 0.0
        %801 = vmatpush1.msra.mxu0 %v782
        %802 = vmatprep.subr.mxu0 0.0
        %803 = vmatpush1.msra.mxu0 %v783
        %804 = vmatprep.subr.mxu0 0.0
        %805 = vmatpush1.msra.mxu0 %v784
        %806 = vmatprep.subr.mxu0 0.0
        %807 = vmatpush1.msra.mxu0 %v785
        %808 = vmatprep.subr.mxu0 0.0
        %809 = vmatpush1.msra.mxu0 %v786
        %810 = vmatprep.subr.mxu0 0.0
        %811 = vmatpush1.msra.mxu0 %v787
        %812 = vmatprep.subr.mxu0 0.0
        %813 = vmatpush1.msra.mxu0 %v788
        %814 = vmatprep.subr.mxu0 0.0
        %815 = vmatpush1.msra.mxu0 %v789
        %816 = vmatprep.subr.mxu0 0.0
        %817 = vmatpush1.msra.mxu0 %v790
        %818 = vmatprep.subr.mxu0 0.0
        %819 = vmatpush1.msra.mxu0 %v791
        %820 = vmatprep.subr.mxu0 0.0
        %821 = vmatpush1.msra.mxu0 %v792
        %822 = vmatprep.subr.mxu0 0.0
        %823 = vmatpush1.msra.mxu0 %v793
        %824 = vmatprep.subr.mxu0 0.0
        %825 = vmatpush1.msra.mxu0 %v794
        %826 = vmatprep.subr.mxu0 0.0
        %827 = vmatpush1.msra.mxu0 %v795
        %828 = vmatprep.subr.mxu0 0.0
        %829 = vmatpush1.msra.mxu0 0.0
        %830 = vmatprep.subr.mxu0 0.0
        %831 = vmatpush1.msra.mxu0 0.0
        %832 = vmatprep.subr.mxu0 0.0
        %833 = vmatpush1.msra.mxu0 0.0
        %834 = vmatprep.subr.mxu0 0.0
        %835 = vmatpush1.msra.mxu0 0.0
        %836 = vmatprep.subr.mxu0 0.0
        %837 = vmatpush1.msra.mxu0 0.0
        %838 = vmatprep.subr.mxu0 0.0
        %839 = vmatpush1.msra.mxu0 0.0
        %840 = vmatprep.subr.mxu0 0.0
        %841 = vmatpush1.msra.mxu0 0.0
        %842 = vmatprep.subr.mxu0 0.0
        %843 = vmatpush1.msra.mxu0 0.0
        %844 = vmatprep.subr.mxu0 0.0
        %845 = vmatpush1.msra.mxu0 0.0
        %846 = vmatprep.subr.mxu0 0.0
        %847 = vmatpush1.msra.mxu0 0.0
        %848 = vmatprep.subr.mxu0 0.0
        %849 = vmatpush1.msra.mxu0 0.0
        %850 = vmatprep.subr.mxu0 0.0
        %851 = vmatpush1.msra.mxu0 0.0
        %852 = vmatprep.subr.mxu0 0.0
        %853 = vmatpush1.msra.mxu0 0.0
        %854 = vmatprep.subr.mxu0 0.0
        %855 = vmatpush1.msra.mxu0 0.0
        %856 = vmatprep.subr.mxu0 0.0
        %857 = vmatpush1.msra.mxu0 0.0
        %858 = vmatprep.subr.mxu0 0.0
        %859 = vmatpush1.msra.mxu0 0.0
        %860 = vmatprep.mubr.f32.mxu0 0.0
        %861 = vmatmul.mubr.f32.gmra.mrb[0].mxu0 %v747
        %v862 = vpop.f32.mrb[0].mxu0
        %v863 = vadd.f32 0.0, %v862
        %v864 = vpop.f32.mrb[0].mxu0
        %865 = vmatprep.mubr.f32.mxu0 0.0
        %866 = vmatmul.mubr.f32.gmra.mrb[0].mxu0 %v748
        %v867 = vpop.f32.mrb[0].mxu0
        %v868 = vadd.f32 0.0, %v867
        %v869 = vpop.f32.mrb[0].mxu0
        %870 = vmatprep.mubr.f32.mxu0 0.0
        %871 = vmatmul.mubr.f32.gmra.mrb[0].mxu0 %v749
        %v872 = vpop.f32.mrb[0].mxu0
        %v873 = vadd.f32 0.0, %v872
        %v874 = vpop.f32.mrb[0].mxu0
        %875 = vmatprep.mubr.f32.mxu0 0.0
        %876 = vmatmul.mubr.f32.gmra.mrb[0].mxu0 %v750
        %v877 = vpop.f32.mrb[0].mxu0
        %v878 = vadd.f32 0.0, %v877
        %v879 = vpop.f32.mrb[0].mxu0
        %880 = vmatprep.mubr.f32.mxu0 0.0
        %881 = vmatmul.mubr.f32.gmra.mrb[0].mxu0 %v751
        %v882 = vpop.f32.mrb[0].mxu0
        %v883 = vadd.f32 0.0, %v882
        %v884 = vpop.f32.mrb[0].mxu0
        %885 = vmatprep.mubr.f32.mxu0 0.0
        %886 = vmatmul.mubr.f32.gmra.mrb[0].mxu0 %v752
        %v887 = vpop.f32.mrb[0].mxu0
        %v888 = vadd.f32 0.0, %v887
        %v889 = vpop.f32.mrb[0].mxu0
        %890 = vmatprep.mubr.f32.mxu0 0.0
        %891 = vmatmul.mubr.f32.gmra.mrb[0].mxu0 %v753
        %v892 = vpop.f32.mrb[0].mxu0
        %v893 = vadd.f32 0.0, %v892
        %v894 = vpop.f32.mrb[0].mxu0
        %895 = vmatprep.mubr.f32.mxu0 0.0
        %896 = vmatmul.mubr.f32.gmra.mrb[0].mxu0 %v754
        %v897 = vpop.f32.mrb[0].mxu0
        %v898 = vadd.f32 0.0, %v897
        %v899 = vpop.f32.mrb[0].mxu0
        %900 = vmatprep.mubr.f32.mxu0 0.0
        %901 = vmatmul.mubr.f32.gmra.mrb[0].mxu0 %v755
        %v902 = vpop.f32.mrb[0].mxu0
        %v903 = vadd.f32 0.0, %v902
        %v904 = vpop.f32.mrb[0].mxu0
        %905 = vmatprep.mubr.f32.mxu0 0.0
        %906 = vmatmul.mubr.f32.gmra.mrb[0].mxu0 %v756
        %v907 = vpop.f32.mrb[0].mxu0
        %v908 = vadd.f32 0.0, %v907
        %v909 = vpop.f32.mrb[0].mxu0
        %910 = vmatprep.mubr.f32.mxu0 0.0
        %911 = vmatmul.mubr.f32.gmra.mrb[0].mxu0 %v757
        %v912 = vpop.f32.mrb[0].mxu0
        %v913 = vadd.f32 0.0, %v912
        %v914 = vpop.f32.mrb[0].mxu0
        %915 = vmatprep.mubr.f32.mxu0 0.0
        %916 = vmatmul.mubr.f32.gmra.mrb[0].mxu0 %v758
        %v917 = vpop.f32.mrb[0].mxu0
        %v918 = vadd.f32 0.0, %v917
        %v919 = vpop.f32.mrb[0].mxu0
        %920 = vmatprep.mubr.f32.mxu0 0.0
        %921 = vmatmul.mubr.f32.gmra.mrb[0].mxu0 %v759
        %v922 = vpop.f32.mrb[0].mxu0
        %v923 = vadd.f32 0.0, %v922
        %v924 = vpop.f32.mrb[0].mxu0
        %925 = vmatprep.mubr.f32.mxu0 0.0
        %926 = vmatmul.mubr.f32.gmra.mrb[0].mxu0 %v760
        %v927 = vpop.f32.mrb[0].mxu0
        %v928 = vadd.f32 0.0, %v927
        %v929 = vpop.f32.mrb[0].mxu0
        %930 = vmatprep.mubr.f32.mxu0 0.0
        %931 = vmatmul.mubr.f32.gmra.mrb[0].mxu0 %v761
        %v932 = vpop.f32.mrb[0].mxu0
        %v933 = vadd.f32 0.0, %v932
        %v934 = vpop.f32.mrb[0].mxu0
        %935 = vmatprep.mubr.f32.mxu0 0.0
        %936 = vmatmul.mubr.f32.gmra.mrb[0].mxu0 %v762
        %v937 = vpop.f32.mrb[0].mxu0
        %v938 = vadd.f32 0.0, %v937
        %v939 = vpop.f32.mrb[0].mxu0
        %940 = vmatprep.mubr.f32.mxu0 0.0
        %941 = vmatmul.mubr.f32.gmra.mrb[0].mxu0 %v763
        %v942 = vpop.f32.mrb[0].mxu0
        %v943 = vadd.f32 0.0, %v942
        %v944 = vpop.f32.mrb[0].mxu0
        %945 = vmatprep.mubr.f32.mxu0 0.0
        %946 = vmatmul.mubr.f32.gmra.mrb[0].mxu0 %v764
        %v947 = vpop.f32.mrb[0].mxu0
        %v948 = vadd.f32 0.0, %v947
        %v949 = vpop.f32.mrb[0].mxu0
        %950 = vmatprep.mubr.f32.mxu0 0.0
        %951 = vmatmul.mubr.f32.gmra.mrb[0].mxu0 %v765
        %v952 = vpop.f32.mrb[0].mxu0
        %v953 = vadd.f32 0.0, %v952
        %v954 = vpop.f32.mrb[0].mxu0
        %955 = vmatprep.mubr.f32.mxu0 0.0
        %956 = vmatmul.mubr.f32.gmra.mrb[0].mxu0 %v766
        %v957 = vpop.f32.mrb[0].mxu0
        %v958 = vadd.f32 0.0, %v957
        %v959 = vpop.f32.mrb[0].mxu0
        %960 = vmatprep.mubr.f32.mxu0 0.0
        %961 = vmatmul.mubr.f32.gmra.mrb[0].mxu0 %v767
        %v962 = vpop.f32.mrb[0].mxu0
        %v963 = vadd.f32 0.0, %v962
        %v964 = vpop.f32.mrb[0].mxu0
        %965 = vmatprep.mubr.f32.mxu0 0.0
        %966 = vmatmul.mubr.f32.gmra.mrb[0].mxu0 %v768
        %v967 = vpop.f32.mrb[0].mxu0
        %v968 = vadd.f32 0.0, %v967
        %v969 = vpop.f32.mrb[0].mxu0
        %970 = vmatprep.mubr.f32.mxu0 0.0
        %971 = vmatmul.mubr.f32.gmra.mrb[0].mxu0 %v769
        %v972 = vpop.f32.mrb[0].mxu0
        %v973 = vadd.f32 0.0, %v972
        %v974 = vpop.f32.mrb[0].mxu0
        %975 = vmatprep.mubr.f32.mxu0 0.0
        %976 = vmatmul.mubr.f32.gmra.mrb[0].mxu0 %v770
        %v977 = vpop.f32.mrb[0].mxu0
        %v978 = vadd.f32 0.0, %v977
        %v979 = vpop.f32.mrb[0].mxu0
        %980 = vmatprep.mubr.f32.mxu0 0.0
        %981 = vmatmul.mubr.f32.gmra.mrb[0].mxu0 %v771
        %v982 = vpop.f32.mrb[0].mxu0
        %v983 = vadd.f32 0.0, %v982
        %v984 = vpop.f32.mrb[0].mxu0
        %985 = vmatprep.mubr.f32.mxu0 0.0
        %986 = vmatmul.mubr.f32.gmra.mrb[0].mxu0 %v772
        %v987 = vpop.f32.mrb[0].mxu0
        %v988 = vadd.f32 0.0, %v987
        %v989 = vpop.f32.mrb[0].mxu0
        %990 = vmatprep.mubr.f32.mxu0 0.0
        %991 = vmatmul.mubr.f32.gmra.mrb[0].mxu0 %v773
        %v992 = vpop.f32.mrb[0].mxu0
        %v993 = vadd.f32 0.0, %v992
        %v994 = vpop.f32.mrb[0].mxu0
        %995 = vmatprep.mubr.f32.mxu0 0.0
        %996 = vmatmul.mubr.f32.gmra.mrb[0].mxu0 %v774
        %v997 = vpop.f32.mrb[0].mxu0
        %v998 = vadd.f32 0.0, %v997
        %v999 = vpop.f32.mrb[0].mxu0
        %1000 = vmatprep.mubr.f32.mxu0 0.0
        %1001 = vmatmul.mubr.f32.gmra.mrb[0].mxu0 %v775
        %v1002 = vpop.f32.mrb[0].mxu0
        %v1003 = vadd.f32 0.0, %v1002
        %v1004 = vpop.f32.mrb[0].mxu0
        %1005 = vmatprep.mubr.f32.mxu0 0.0
        %1006 = vmatmul.mubr.f32.gmra.mrb[0].mxu0 %v776
        %v1007 = vpop.f32.mrb[0].mxu0
        %v1008 = vadd.f32 0.0, %v1007
        %v1009 = vpop.f32.mrb[0].mxu0
        %1010 = vmatprep.mubr.f32.mxu0 0.0
        %1011 = vmatmul.mubr.f32.gmra.mrb[0].mxu0 %v777
        %v1012 = vpop.f32.mrb[0].mxu0
        %v1013 = vadd.f32 0.0, %v1012
        %v1014 = vpop.f32.mrb[0].mxu0
        %1015 = vmatprep.mubr.f32.mxu0 0.0
        %1016 = vmatmul.mubr.f32.gmra.mrb[0].mxu0 %v778
        %v1017 = vpop.f32.mrb[0].mxu0
        %v1018 = vadd.f32 0.0, %v1017
        %v1019 = vpop.f32.mrb[0].mxu0
        %1020 = vdwg.mxu0
        %v1021 = vadd.f32 %v589, %v863
        %v1022 = vadd.f32 %v594, %v868
        %v1023 = vadd.f32 %v599, %v873
        %v1024 = vadd.f32 %v604, %v878
        %v1025 = vadd.f32 %v609, %v883
        %v1026 = vadd.f32 %v614, %v888
        %v1027 = vadd.f32 %v619, %v893
        %v1028 = vadd.f32 %v624, %v898
        %v1029 = vadd.f32 %v629, %v903
        %v1030 = vadd.f32 %v634, %v908
        %v1031 = vadd.f32 %v639, %v913
        %v1032 = vadd.f32 %v644, %v918
        %v1033 = vadd.f32 %v649, %v923
        %v1034 = vadd.f32 %v654, %v928
        %v1035 = vadd.f32 %v659, %v933
        %v1036 = vadd.f32 %v664, %v938
        %v1037 = vadd.f32 %v669, %v943
        %v1038 = vadd.f32 %v674, %v948
        %v1039 = vadd.f32 %v679, %v953
        %v1040 = vadd.f32 %v684, %v958
        %v1041 = vadd.f32 %v689, %v963
        %v1042 = vadd.f32 %v694, %v968
        %v1043 = vadd.f32 %v699, %v973
        %v1044 = vadd.f32 %v704, %v978
        %v1045 = vadd.f32 %v709, %v983
        %v1046 = vadd.f32 %v714, %v988
        %v1047 = vadd.f32 %v719, %v993
        %v1048 = vadd.f32 %v724, %v998
        %v1049 = vadd.f32 %v729, %v1003
        %v1050 = vadd.f32 %v734, %v1008
        %v1051 = vadd.f32 %v739, %v1013
        %v1052 = vadd.f32 %v744, %v1018
        %s1053 = sadd.s32 %s197, 2
        %s1054 = smul.u32 %s1053, 24
        %s1055 = scalar_lea.vmem %s195, %s1054
        %v1056 = vld [vmem:[%s1055] sm:$0xff]
        %v1057 = vld [vmem:[%s1055 + $0x8] sm:$0xff]
        %v1058 = vld [vmem:[%s1055 + $0x18] sm:$0xff]
        %v1059 = vld [vmem:[%s1055 + $0x20] sm:$0xff]
        %v1060 = vld [vmem:[%s1055 + $0x30] sm:$0xff]
        %v1061 = vld [vmem:[%s1055 + $0x38] sm:$0xff]
        %v1062 = vld [vmem:[%s1055 + $0x48] sm:$0xff]
        %v1063 = vld [vmem:[%s1055 + $0x50] sm:$0xff]
        %v1064 = vld [vmem:[%s1055 + $0x60] sm:$0xff]
        %v1065 = vld [vmem:[%s1055 + $0x68] sm:$0xff]
        %v1066 = vld [vmem:[%s1055 + $0x78] sm:$0xff]
        %v1067 = vld [vmem:[%s1055 + $0x80] sm:$0xff]
        %v1068 = vld [vmem:[%s1055 + $0x90] sm:$0xff]
        %v1069 = vld [vmem:[%s1055 + $0x98] sm:$0xff]
        %v1070 = vld [vmem:[%s1055 + $0xa8] sm:$0xff]
        %v1071 = vld [vmem:[%s1055 + $0xb0] sm:$0xff]
        %v1072 = vld [vmem:[%s1055 + $0xc0] sm:$0xff]
        %v1073 = vld [vmem:[%s1055 + $0xc8] sm:$0xff]
        %v1074 = vld [vmem:[%s1055 + $0xd8] sm:$0xff]
        %v1075 = vld [vmem:[%s1055 + $0xe0] sm:$0xff]
        %v1076 = vld [vmem:[%s1055 + $0xf0] sm:$0xff]
        %v1077 = vld [vmem:[%s1055 + $0xf8] sm:$0xff]
        %v1078 = vld [vmem:[%s1055 + $0x108] sm:$0xff]
        %v1079 = vld [vmem:[%s1055 + $0x110] sm:$0xff]
        %v1080 = vld [vmem:[%s1055 + $0x120] sm:$0xff]
        %v1081 = vld [vmem:[%s1055 + $0x128] sm:$0xff]
        %v1082 = vld [vmem:[%s1055 + $0x138] sm:$0xff]
        %v1083 = vld [vmem:[%s1055 + $0x140] sm:$0xff]
        %v1084 = vld [vmem:[%s1055 + $0x150] sm:$0xff]
        %v1085 = vld [vmem:[%s1055 + $0x158] sm:$0xff]
        %v1086 = vld [vmem:[%s1055 + $0x168] sm:$0xff]
        %v1087 = vld [vmem:[%s1055 + $0x170] sm:$0xff]
        %s1088 = scalar_lea.vmem %s1, 384
        %v1089 = vld [vmem:[%s1088] sm:$0xff]
        %v1090 = vld [vmem:[%s1088 + $0x8] sm:$0xff]
        %v1091 = vld [vmem:[%s1088 + $0x10] sm:$0xff]
        %v1092 = vld [vmem:[%s1088 + $0x18] sm:$0xff]
        %v1093 = vld [vmem:[%s1088 + $0x20] sm:$0xff]
        %v1094 = vld [vmem:[%s1088 + $0x28] sm:$0xff]
        %v1095 = vld [vmem:[%s1088 + $0x30] sm:$0xff]
        %v1096 = vld [vmem:[%s1088 + $0x38] sm:$0xff]
        %v1097 = vld [vmem:[%s1088 + $0x40] sm:$0xff]
        %v1098 = vld [vmem:[%s1088 + $0x48] sm:$0xff]
        %v1099 = vld [vmem:[%s1088 + $0x50] sm:$0xff]
        %v1100 = vld [vmem:[%s1088 + $0x58] sm:$0xff]
        %v1101 = vld [vmem:[%s1088 + $0x60] sm:$0xff]
        %v1102 = vld [vmem:[%s1088 + $0x68] sm:$0xff]
        %v1103 = vld [vmem:[%s1088 + $0x70] sm:$0xff]
        %v1104 = vld [vmem:[%s1088 + $0x78] sm:$0xff]
        %1105 = vmatprep.subr.mxu0 0.0
        %1106 = vmatpush1.msra.mxu0 %v1089
        %1107 = vmatprep.subr.mxu0 0.0
        %1108 = vmatpush1.msra.mxu0 %v1090
        %1109 = vmatprep.subr.mxu0 0.0
        %1110 = vmatpush1.msra.mxu0 %v1091
        %1111 = vmatprep.subr.mxu0 0.0
        %1112 = vmatpush1.msra.mxu0 %v1092
        %1113 = vmatprep.subr.mxu0 0.0
        %1114 = vmatpush1.msra.mxu0 %v1093
        %1115 = vmatprep.subr.mxu0 0.0
        %1116 = vmatpush1.msra.mxu0 %v1094
        %1117 = vmatprep.subr.mxu0 0.0
        %1118 = vmatpush1.msra.mxu0 %v1095
        %1119 = vmatprep.subr.mxu0 0.0
        %1120 = vmatpush1.msra.mxu0 %v1096
        %1121 = vmatprep.subr.mxu0 0.0
        %1122 = vmatpush1.msra.mxu0 %v1097
        %1123 = vmatprep.subr.mxu0 0.0
        %1124 = vmatpush1.msra.mxu0 %v1098
        %1125 = vmatprep.subr.mxu0 0.0
        %1126 = vmatpush1.msra.mxu0 %v1099
        %1127 = vmatprep.subr.mxu0 0.0
        %1128 = vmatpush1.msra.mxu0 %v1100
        %1129 = vmatprep.subr.mxu0 0.0
        %1130 = vmatpush1.msra.mxu0 %v1101
        %1131 = vmatprep.subr.mxu0 0.0
        %1132 = vmatpush1.msra.mxu0 %v1102
        %1133 = vmatprep.subr.mxu0 0.0
        %1134 = vmatpush1.msra.mxu0 %v1103
        %1135 = vmatprep.subr.mxu0 0.0
        %1136 = vmatpush1.msra.mxu0 %v1104
        %1137 = vmatprep.subr.mxu0 0.0
        %1138 = vmatpush1.msra.mxu0 0.0
        %1139 = vmatprep.subr.mxu0 0.0
        %1140 = vmatpush1.msra.mxu0 0.0
        %1141 = vmatprep.subr.mxu0 0.0
        %1142 = vmatpush1.msra.mxu0 0.0
        %1143 = vmatprep.subr.mxu0 0.0
        %1144 = vmatpush1.msra.mxu0 0.0
        %1145 = vmatprep.subr.mxu0 0.0
        %1146 = vmatpush1.msra.mxu0 0.0
        %1147 = vmatprep.subr.mxu0 0.0
        %1148 = vmatpush1.msra.mxu0 0.0
        %1149 = vmatprep.subr.mxu0 0.0
        %1150 = vmatpush1.msra.mxu0 0.0
        %1151 = vmatprep.subr.mxu0 0.0
        %1152 = vmatpush1.msra.mxu0 0.0
        %1153 = vmatprep.subr.mxu0 0.0
        %1154 = vmatpush1.msra.mxu0 0.0
        %1155 = vmatprep.subr.mxu0 0.0
        %1156 = vmatpush1.msra.mxu0 0.0
        %1157 = vmatprep.subr.mxu0 0.0
        %1158 = vmatpush1.msra.mxu0 0.0
        %1159 = vmatprep.subr.mxu0 0.0
        %1160 = vmatpush1.msra.mxu0 0.0
        %1161 = vmatprep.subr.mxu0 0.0
        %1162 = vmatpush1.msra.mxu0 0.0
        %1163 = vmatprep.subr.mxu0 0.0
        %1164 = vmatpush1.msra.mxu0 0.0
        %1165 = vmatprep.subr.mxu0 0.0
        %1166 = vmatpush1.msra.mxu0 0.0
        %1167 = vmatprep.subr.mxu0 0.0
        %1168 = vmatpush1.msra.mxu0 0.0
        %1169 = vmatprep.mubr.f32.mxu0 0.0
        %1170 = vmatmul.mubr.f32.gmra.mrb[0].mxu0 %v1056
        %v1171 = vpop.f32.mrb[0].mxu0
        %v1172 = vadd.f32 0.0, %v1171
        %v1173 = vpop.f32.mrb[0].mxu0
        %1174 = vmatprep.mubr.f32.mxu0 0.0
        %1175 = vmatmul.mubr.f32.gmra.mrb[0].mxu0 %v1057
        %v1176 = vpop.f32.mrb[0].mxu0
        %v1177 = vadd.f32 0.0, %v1176
        %v1178 = vpop.f32.mrb[0].mxu0
        %1179 = vmatprep.mubr.f32.mxu0 0.0
        %1180 = vmatmul.mubr.f32.gmra.mrb[0].mxu0 %v1058
        %v1181 = vpop.f32.mrb[0].mxu0
        %v1182 = vadd.f32 0.0, %v1181
        %v1183 = vpop.f32.mrb[0].mxu0
        %1184 = vmatprep.mubr.f32.mxu0 0.0
        %1185 = vmatmul.mubr.f32.gmra.mrb[0].mxu0 %v1059
        %v1186 = vpop.f32.mrb[0].mxu0
        %v1187 = vadd.f32 0.0, %v1186
        %v1188 = vpop.f32.mrb[0].mxu0
        %1189 = vmatprep.mubr.f32.mxu0 0.0
        %1190 = vmatmul.mubr.f32.gmra.mrb[0].mxu0 %v1060
        %v1191 = vpop.f32.mrb[0].mxu0
        %v1192 = vadd.f32 0.0, %v1191
        %v1193 = vpop.f32.mrb[0].mxu0
        %1194 = vmatprep.mubr.f32.mxu0 0.0
        %1195 = vmatmul.mubr.f32.gmra.mrb[0].mxu0 %v1061
        %v1196 = vpop.f32.mrb[0].mxu0
        %v1197 = vadd.f32 0.0, %v1196
        %v1198 = vpop.f32.mrb[0].mxu0
        %1199 = vmatprep.mubr.f32.mxu0 0.0
        %1200 = vmatmul.mubr.f32.gmra.mrb[0].mxu0 %v1062
        %v1201 = vpop.f32.mrb[0].mxu0
        %v1202 = vadd.f32 0.0, %v1201
        %v1203 = vpop.f32.mrb[0].mxu0
        %1204 = vmatprep.mubr.f32.mxu0 0.0
        %1205 = vmatmul.mubr.f32.gmra.mrb[0].mxu0 %v1063
        %v1206 = vpop.f32.mrb[0].mxu0
        %v1207 = vadd.f32 0.0, %v1206
        %v1208 = vpop.f32.mrb[0].mxu0
        %1209 = vmatprep.mubr.f32.mxu0 0.0
        %1210 = vmatmul.mubr.f32.gmra.mrb[0].mxu0 %v1064
        %v1211 = vpop.f32.mrb[0].mxu0
        %v1212 = vadd.f32 0.0, %v1211
        %v1213 = vpop.f32.mrb[0].mxu0
        %1214 = vmatprep.mubr.f32.mxu0 0.0
        %1215 = vmatmul.mubr.f32.gmra.mrb[0].mxu0 %v1065
        %v1216 = vpop.f32.mrb[0].mxu0
        %v1217 = vadd.f32 0.0, %v1216
        %v1218 = vpop.f32.mrb[0].mxu0
        %1219 = vmatprep.mubr.f32.mxu0 0.0
        %1220 = vmatmul.mubr.f32.gmra.mrb[0].mxu0 %v1066
        %v1221 = vpop.f32.mrb[0].mxu0
        %v1222 = vadd.f32 0.0, %v1221
        %v1223 = vpop.f32.mrb[0].mxu0
        %1224 = vmatprep.mubr.f32.mxu0 0.0
        %1225 = vmatmul.mubr.f32.gmra.mrb[0].mxu0 %v1067
        %v1226 = vpop.f32.mrb[0].mxu0
        %v1227 = vadd.f32 0.0, %v1226
        %v1228 = vpop.f32.mrb[0].mxu0
        %1229 = vmatprep.mubr.f32.mxu0 0.0
        %1230 = vmatmul.mubr.f32.gmra.mrb[0].mxu0 %v1068
        %v1231 = vpop.f32.mrb[0].mxu0
        %v1232 = vadd.f32 0.0, %v1231
        %v1233 = vpop.f32.mrb[0].mxu0
        %1234 = vmatprep.mubr.f32.mxu0 0.0
        %1235 = vmatmul.mubr.f32.gmra.mrb[0].mxu0 %v1069
        %v1236 = vpop.f32.mrb[0].mxu0
        %v1237 = vadd.f32 0.0, %v1236
        %v1238 = vpop.f32.mrb[0].mxu0
        %1239 = vmatprep.mubr.f32.mxu0 0.0
        %1240 = vmatmul.mubr.f32.gmra.mrb[0].mxu0 %v1070
        %v1241 = vpop.f32.mrb[0].mxu0
        %v1242 = vadd.f32 0.0, %v1241
        %v1243 = vpop.f32.mrb[0].mxu0
        %1244 = vmatprep.mubr.f32.mxu0 0.0
        %1245 = vmatmul.mubr.f32.gmra.mrb[0].mxu0 %v1071
        %v1246 = vpop.f32.mrb[0].mxu0
        %v1247 = vadd.f32 0.0, %v1246
        %v1248 = vpop.f32.mrb[0].mxu0
        %1249 = vmatprep.mubr.f32.mxu0 0.0
        %1250 = vmatmul.mubr.f32.gmra.mrb[0].mxu0 %v1072
        %v1251 = vpop.f32.mrb[0].mxu0
        %v1252 = vadd.f32 0.0, %v1251
        %v1253 = vpop.f32.mrb[0].mxu0
        %1254 = vmatprep.mubr.f32.mxu0 0.0
        %1255 = vmatmul.mubr.f32.gmra.mrb[0].mxu0 %v1073
        %v1256 = vpop.f32.mrb[0].mxu0
        %v1257 = vadd.f32 0.0, %v1256
        %v1258 = vpop.f32.mrb[0].mxu0
        %1259 = vmatprep.mubr.f32.mxu0 0.0
        %1260 = vmatmul.mubr.f32.gmra.mrb[0].mxu0 %v1074
        %v1261 = vpop.f32.mrb[0].mxu0
        %v1262 = vadd.f32 0.0, %v1261
        %v1263 = vpop.f32.mrb[0].mxu0
        %1264 = vmatprep.mubr.f32.mxu0 0.0
        %1265 = vmatmul.mubr.f32.gmra.mrb[0].mxu0 %v1075
        %v1266 = vpop.f32.mrb[0].mxu0
        %v1267 = vadd.f32 0.0, %v1266
        %v1268 = vpop.f32.mrb[0].mxu0
        %1269 = vmatprep.mubr.f32.mxu0 0.0
        %1270 = vmatmul.mubr.f32.gmra.mrb[0].mxu0 %v1076
        %v1271 = vpop.f32.mrb[0].mxu0
        %v1272 = vadd.f32 0.0, %v1271
        %v1273 = vpop.f32.mrb[0].mxu0
        %1274 = vmatprep.mubr.f32.mxu0 0.0
        %1275 = vmatmul.mubr.f32.gmra.mrb[0].mxu0 %v1077
        %v1276 = vpop.f32.mrb[0].mxu0
        %v1277 = vadd.f32 0.0, %v1276
        %v1278 = vpop.f32.mrb[0].mxu0
        %1279 = vmatprep.mubr.f32.mxu0 0.0
        %1280 = vmatmul.mubr.f32.gmra.mrb[0].mxu0 %v1078
        %v1281 = vpop.f32.mrb[0].mxu0
        %v1282 = vadd.f32 0.0, %v1281
        %v1283 = vpop.f32.mrb[0].mxu0
        %1284 = vmatprep.mubr.f32.mxu0 0.0
        %1285 = vmatmul.mubr.f32.gmra.mrb[0].mxu0 %v1079
        %v1286 = vpop.f32.mrb[0].mxu0
        %v1287 = vadd.f32 0.0, %v1286
        %v1288 = vpop.f32.mrb[0].mxu0
        %1289 = vmatprep.mubr.f32.mxu0 0.0
        %1290 = vmatmul.mubr.f32.gmra.mrb[0].mxu0 %v1080
        %v1291 = vpop.f32.mrb[0].mxu0
        %v1292 = vadd.f32 0.0, %v1291
        %v1293 = vpop.f32.mrb[0].mxu0
        %1294 = vmatprep.mubr.f32.mxu0 0.0
        %1295 = vmatmul.mubr.f32.gmra.mrb[0].mxu0 %v1081
        %v1296 = vpop.f32.mrb[0].mxu0
        %v1297 = vadd.f32 0.0, %v1296
        %v1298 = vpop.f32.mrb[0].mxu0
        %1299 = vmatprep.mubr.f32.mxu0 0.0
        %1300 = vmatmul.mubr.f32.gmra.mrb[0].mxu0 %v1082
        %v1301 = vpop.f32.mrb[0].mxu0
        %v1302 = vadd.f32 0.0, %v1301
        %v1303 = vpop.f32.mrb[0].mxu0
        %1304 = vmatprep.mubr.f32.mxu0 0.0
        %1305 = vmatmul.mubr.f32.gmra.mrb[0].mxu0 %v1083
        %v1306 = vpop.f32.mrb[0].mxu0
        %v1307 = vadd.f32 0.0, %v1306
        %v1308 = vpop.f32.mrb[0].mxu0
        %1309 = vmatprep.mubr.f32.mxu0 0.0
        %1310 = vmatmul.mubr.f32.gmra.mrb[0].mxu0 %v1084
        %v1311 = vpop.f32.mrb[0].mxu0
        %v1312 = vadd.f32 0.0, %v1311
        %v1313 = vpop.f32.mrb[0].mxu0
        %1314 = vmatprep.mubr.f32.mxu0 0.0
        %1315 = vmatmul.mubr.f32.gmra.mrb[0].mxu0 %v1085
        %v1316 = vpop.f32.mrb[0].mxu0
        %v1317 = vadd.f32 0.0, %v1316
        %v1318 = vpop.f32.mrb[0].mxu0
        %1319 = vmatprep.mubr.f32.mxu0 0.0
        %1320 = vmatmul.mubr.f32.gmra.mrb[0].mxu0 %v1086
        %v1321 = vpop.f32.mrb[0].mxu0
        %v1322 = vadd.f32 0.0, %v1321
        %v1323 = vpop.f32.mrb[0].mxu0
        %1324 = vmatprep.mubr.f32.mxu0 0.0
        %1325 = vmatmul.mubr.f32.gmra.mrb[0].mxu0 %v1087
        %v1326 = vpop.f32.mrb[0].mxu0
        %v1327 = vadd.f32 0.0, %v1326
        %v1328 = vpop.f32.mrb[0].mxu0
        %1329 = vdwg.mxu0
        %v1330 = vadd.f32 %v1021, %v1172
        %v1331 = vadd.f32 %v1022, %v1177
        %v1332 = vadd.f32 %v1023, %v1182
        %v1333 = vadd.f32 %v1024, %v1187
        %v1334 = vadd.f32 %v1025, %v1192
        %v1335 = vadd.f32 %v1026, %v1197
        %v1336 = vadd.f32 %v1027, %v1202
        %v1337 = vadd.f32 %v1028, %v1207
        %v1338 = vadd.f32 %v1029, %v1212
        %v1339 = vadd.f32 %v1030, %v1217
        %v1340 = vadd.f32 %v1031, %v1222
        %v1341 = vadd.f32 %v1032, %v1227
        %v1342 = vadd.f32 %v1033, %v1232
        %v1343 = vadd.f32 %v1034, %v1237
        %v1344 = vadd.f32 %v1035, %v1242
        %v1345 = vadd.f32 %v1036, %v1247
        %v1346 = vadd.f32 %v1037, %v1252
        %v1347 = vadd.f32 %v1038, %v1257
        %v1348 = vadd.f32 %v1039, %v1262
        %v1349 = vadd.f32 %v1040, %v1267
        %v1350 = vadd.f32 %v1041, %v1272
        %v1351 = vadd.f32 %v1042, %v1277
        %v1352 = vadd.f32 %v1043, %v1282
        %v1353 = vadd.f32 %v1044, %v1287
        %v1354 = vadd.f32 %v1045, %v1292
        %v1355 = vadd.f32 %v1046, %v1297
        %v1356 = vadd.f32 %v1047, %v1302
        %v1357 = vadd.f32 %v1048, %v1307
        %v1358 = vadd.f32 %v1049, %v1312
        %v1359 = vadd.f32 %v1050, %v1317
        %v1360 = vadd.f32 %v1051, %v1322
        %v1361 = vadd.f32 %v1052, %v1327
        %v1362 = vld [vmem:[%s1055 + $0x2] sm:$0xff]
        %v1363 = vld [vmem:[%s1055 + $0xa] sm:$0xff]
        %v1364 = vld [vmem:[%s1055 + $0x1a] sm:$0xff]
        %v1365 = vld [vmem:[%s1055 + $0x22] sm:$0xff]
        %v1366 = vld [vmem:[%s1055 + $0x32] sm:$0xff]
        %v1367 = vld [vmem:[%s1055 + $0x3a] sm:$0xff]
        %v1368 = vld [vmem:[%s1055 + $0x4a] sm:$0xff]
        %v1369 = vld [vmem:[%s1055 + $0x52] sm:$0xff]
        %v1370 = vld [vmem:[%s1055 + $0x62] sm:$0xff]
        %v1371 = vld [vmem:[%s1055 + $0x6a] sm:$0xff]
        %v1372 = vld [vmem:[%s1055 + $0x7a] sm:$0xff]
        %v1373 = vld [vmem:[%s1055 + $0x82] sm:$0xff]
        %v1374 = vld [vmem:[%s1055 + $0x92] sm:$0xff]
        %v1375 = vld [vmem:[%s1055 + $0x9a] sm:$0xff]
        %v1376 = vld [vmem:[%s1055 + $0xaa] sm:$0xff]
        %v1377 = vld [vmem:[%s1055 + $0xb2] sm:$0xff]
        %v1378 = vld [vmem:[%s1055 + $0xc2] sm:$0xff]
        %v1379 = vld [vmem:[%s1055 + $0xca] sm:$0xff]
        %v1380 = vld [vmem:[%s1055 + $0xda] sm:$0xff]
        %v1381 = vld [vmem:[%s1055 + $0xe2] sm:$0xff]
        %v1382 = vld [vmem:[%s1055 + $0xf2] sm:$0xff]
        %v1383 = vld [vmem:[%s1055 + $0xfa] sm:$0xff]
        %v1384 = vld [vmem:[%s1055 + $0x10a] sm:$0xff]
        %v1385 = vld [vmem:[%s1055 + $0x112] sm:$0xff]
        %v1386 = vld [vmem:[%s1055 + $0x122] sm:$0xff]
        %v1387 = vld [vmem:[%s1055 + $0x12a] sm:$0xff]
        %v1388 = vld [vmem:[%s1055 + $0x13a] sm:$0xff]
        %v1389 = vld [vmem:[%s1055 + $0x142] sm:$0xff]
        %v1390 = vld [vmem:[%s1055 + $0x152] sm:$0xff]
        %v1391 = vld [vmem:[%s1055 + $0x15a] sm:$0xff]
        %v1392 = vld [vmem:[%s1055 + $0x16a] sm:$0xff]
        %v1393 = vld [vmem:[%s1055 + $0x172] sm:$0xff]
        %s1394 = scalar_lea.vmem %s1, 512
        %v1395 = vld [vmem:[%s1394] sm:$0xff]
        %v1396 = vld [vmem:[%s1394 + $0x8] sm:$0xff]
        %v1397 = vld [vmem:[%s1394 + $0x10] sm:$0xff]
        %v1398 = vld [vmem:[%s1394 + $0x18] sm:$0xff]
        %v1399 = vld [vmem:[%s1394 + $0x20] sm:$0xff]
        %v1400 = vld [vmem:[%s1394 + $0x28] sm:$0xff]
        %v1401 = vld [vmem:[%s1394 + $0x30] sm:$0xff]
        %v1402 = vld [vmem:[%s1394 + $0x38] sm:$0xff]
        %v1403 = vld [vmem:[%s1394 + $0x40] sm:$0xff]
        %v1404 = vld [vmem:[%s1394 + $0x48] sm:$0xff]
        %v1405 = vld [vmem:[%s1394 + $0x50] sm:$0xff]
        %v1406 = vld [vmem:[%s1394 + $0x58] sm:$0xff]
        %v1407 = vld [vmem:[%s1394 + $0x60] sm:$0xff]
        %v1408 = vld [vmem:[%s1394 + $0x68] sm:$0xff]
        %v1409 = vld [vmem:[%s1394 + $0x70] sm:$0xff]
        %v1410 = vld [vmem:[%s1394 + $0x78] sm:$0xff]
        %1411 = vmatprep.subr.mxu0 0.0
        %1412 = vmatpush1.msra.mxu0 %v1395
        %1413 = vmatprep.subr.mxu0 0.0
        %1414 = vmatpush1.msra.mxu0 %v1396
        %1415 = vmatprep.subr.mxu0 0.0
        %1416 = vmatpush1.msra.mxu0 %v1397
        %1417 = vmatprep.subr.mxu0 0.0
        %1418 = vmatpush1.msra.mxu0 %v1398
        %1419 = vmatprep.subr.mxu0 0.0
        %1420 = vmatpush1.msra.mxu0 %v1399
        %1421 = vmatprep.subr.mxu0 0.0
        %1422 = vmatpush1.msra.mxu0 %v1400
        %1423 = vmatprep.subr.mxu0 0.0
        %1424 = vmatpush1.msra.mxu0 %v1401
        %1425 = vmatprep.subr.mxu0 0.0
        %1426 = vmatpush1.msra.mxu0 %v1402
        %1427 = vmatprep.subr.mxu0 0.0
        %1428 = vmatpush1.msra.mxu0 %v1403
        %1429 = vmatprep.subr.mxu0 0.0
        %1430 = vmatpush1.msra.mxu0 %v1404
        %1431 = vmatprep.subr.mxu0 0.0
        %1432 = vmatpush1.msra.mxu0 %v1405
        %1433 = vmatprep.subr.mxu0 0.0
        %1434 = vmatpush1.msra.mxu0 %v1406
        %1435 = vmatprep.subr.mxu0 0.0
        %1436 = vmatpush1.msra.mxu0 %v1407
        %1437 = vmatprep.subr.mxu0 0.0
        %1438 = vmatpush1.msra.mxu0 %v1408
        %1439 = vmatprep.subr.mxu0 0.0
        %1440 = vmatpush1.msra.mxu0 %v1409
        %1441 = vmatprep.subr.mxu0 0.0
        %1442 = vmatpush1.msra.mxu0 %v1410
        %1443 = vmatprep.subr.mxu0 0.0
        %1444 = vmatpush1.msra.mxu0 0.0
        %1445 = vmatprep.subr.mxu0 0.0
        %1446 = vmatpush1.msra.mxu0 0.0
        %1447 = vmatprep.subr.mxu0 0.0
        %1448 = vmatpush1.msra.mxu0 0.0
        %1449 = vmatprep.subr.mxu0 0.0
        %1450 = vmatpush1.msra.mxu0 0.0
        %1451 = vmatprep.subr.mxu0 0.0
        %1452 = vmatpush1.msra.mxu0 0.0
        %1453 = vmatprep.subr.mxu0 0.0
        %1454 = vmatpush1.msra.mxu0 0.0
        %1455 = vmatprep.subr.mxu0 0.0
        %1456 = vmatpush1.msra.mxu0 0.0
        %1457 = vmatprep.subr.mxu0 0.0
        %1458 = vmatpush1.msra.mxu0 0.0
        %1459 = vmatprep.subr.mxu0 0.0
        %1460 = vmatpush1.msra.mxu0 0.0
        %1461 = vmatprep.subr.mxu0 0.0
        %1462 = vmatpush1.msra.mxu0 0.0
        %1463 = vmatprep.subr.mxu0 0.0
        %1464 = vmatpush1.msra.mxu0 0.0
        %1465 = vmatprep.subr.mxu0 0.0
        %1466 = vmatpush1.msra.mxu0 0.0
        %1467 = vmatprep.subr.mxu0 0.0
        %1468 = vmatpush1.msra.mxu0 0.0
        %1469 = vmatprep.subr.mxu0 0.0
        %1470 = vmatpush1.msra.mxu0 0.0
        %1471 = vmatprep.subr.mxu0 0.0
        %1472 = vmatpush1.msra.mxu0 0.0
        %1473 = vmatprep.subr.mxu0 0.0
        %1474 = vmatpush1.msra.mxu0 0.0
        %1475 = vmatprep.mubr.f32.mxu0 0.0
        %1476 = vmatmul.mubr.f32.gmra.mrb[0].mxu0 %v1362
        %v1477 = vpop.f32.mrb[0].mxu0
        %v1478 = vadd.f32 0.0, %v1477
        %v1479 = vpop.f32.mrb[0].mxu0
        %1480 = vmatprep.mubr.f32.mxu0 0.0
        %1481 = vmatmul.mubr.f32.gmra.mrb[0].mxu0 %v1363
        %v1482 = vpop.f32.mrb[0].mxu0
        %v1483 = vadd.f32 0.0, %v1482
        %v1484 = vpop.f32.mrb[0].mxu0
        %1485 = vmatprep.mubr.f32.mxu0 0.0
        %1486 = vmatmul.mubr.f32.gmra.mrb[0].mxu0 %v1364
        %v1487 = vpop.f32.mrb[0].mxu0
        %v1488 = vadd.f32 0.0, %v1487
        %v1489 = vpop.f32.mrb[0].mxu0
        %1490 = vmatprep.mubr.f32.mxu0 0.0
        %1491 = vmatmul.mubr.f32.gmra.mrb[0].mxu0 %v1365
        %v1492 = vpop.f32.mrb[0].mxu0
        %v1493 = vadd.f32 0.0, %v1492
        %v1494 = vpop.f32.mrb[0].mxu0
        %1495 = vmatprep.mubr.f32.mxu0 0.0
        %1496 = vmatmul.mubr.f32.gmra.mrb[0].mxu0 %v1366
        %v1497 = vpop.f32.mrb[0].mxu0
        %v1498 = vadd.f32 0.0, %v1497
        %v1499 = vpop.f32.mrb[0].mxu0
        %1500 = vmatprep.mubr.f32.mxu0 0.0
        %1501 = vmatmul.mubr.f32.gmra.mrb[0].mxu0 %v1367
        %v1502 = vpop.f32.mrb[0].mxu0
        %v1503 = vadd.f32 0.0, %v1502
        %v1504 = vpop.f32.mrb[0].mxu0
        %1505 = vmatprep.mubr.f32.mxu0 0.0
        %1506 = vmatmul.mubr.f32.gmra.mrb[0].mxu0 %v1368
        %v1507 = vpop.f32.mrb[0].mxu0
        %v1508 = vadd.f32 0.0, %v1507
        %v1509 = vpop.f32.mrb[0].mxu0
        %1510 = vmatprep.mubr.f32.mxu0 0.0
        %1511 = vmatmul.mubr.f32.gmra.mrb[0].mxu0 %v1369
        %v1512 = vpop.f32.mrb[0].mxu0
        %v1513 = vadd.f32 0.0, %v1512
        %v1514 = vpop.f32.mrb[0].mxu0
        %1515 = vmatprep.mubr.f32.mxu0 0.0
        %1516 = vmatmul.mubr.f32.gmra.mrb[0].mxu0 %v1370
        %v1517 = vpop.f32.mrb[0].mxu0
        %v1518 = vadd.f32 0.0, %v1517
        %v1519 = vpop.f32.mrb[0].mxu0
        %1520 = vmatprep.mubr.f32.mxu0 0.0
        %1521 = vmatmul.mubr.f32.gmra.mrb[0].mxu0 %v1371
        %v1522 = vpop.f32.mrb[0].mxu0
        %v1523 = vadd.f32 0.0, %v1522
        %v1524 = vpop.f32.mrb[0].mxu0
        %1525 = vmatprep.mubr.f32.mxu0 0.0
        %1526 = vmatmul.mubr.f32.gmra.mrb[0].mxu0 %v1372
        %v1527 = vpop.f32.mrb[0].mxu0
        %v1528 = vadd.f32 0.0, %v1527
        %v1529 = vpop.f32.mrb[0].mxu0
        %1530 = vmatprep.mubr.f32.mxu0 0.0
        %1531 = vmatmul.mubr.f32.gmra.mrb[0].mxu0 %v1373
        %v1532 = vpop.f32.mrb[0].mxu0
        %v1533 = vadd.f32 0.0, %v1532
        %v1534 = vpop.f32.mrb[0].mxu0
        %1535 = vmatprep.mubr.f32.mxu0 0.0
        %1536 = vmatmul.mubr.f32.gmra.mrb[0].mxu0 %v1374
        %v1537 = vpop.f32.mrb[0].mxu0
        %v1538 = vadd.f32 0.0, %v1537
        %v1539 = vpop.f32.mrb[0].mxu0
        %1540 = vmatprep.mubr.f32.mxu0 0.0
        %1541 = vmatmul.mubr.f32.gmra.mrb[0].mxu0 %v1375
        %v1542 = vpop.f32.mrb[0].mxu0
        %v1543 = vadd.f32 0.0, %v1542
        %v1544 = vpop.f32.mrb[0].mxu0
        %1545 = vmatprep.mubr.f32.mxu0 0.0
        %1546 = vmatmul.mubr.f32.gmra.mrb[0].mxu0 %v1376
        %v1547 = vpop.f32.mrb[0].mxu0
        %v1548 = vadd.f32 0.0, %v1547
        %v1549 = vpop.f32.mrb[0].mxu0
        %1550 = vmatprep.mubr.f32.mxu0 0.0
        %1551 = vmatmul.mubr.f32.gmra.mrb[0].mxu0 %v1377
        %v1552 = vpop.f32.mrb[0].mxu0
        %v1553 = vadd.f32 0.0, %v1552
        %v1554 = vpop.f32.mrb[0].mxu0
        %1555 = vmatprep.mubr.f32.mxu0 0.0
        %1556 = vmatmul.mubr.f32.gmra.mrb[0].mxu0 %v1378
        %v1557 = vpop.f32.mrb[0].mxu0
        %v1558 = vadd.f32 0.0, %v1557
        %v1559 = vpop.f32.mrb[0].mxu0
        %1560 = vmatprep.mubr.f32.mxu0 0.0
        %1561 = vmatmul.mubr.f32.gmra.mrb[0].mxu0 %v1379
        %v1562 = vpop.f32.mrb[0].mxu0
        %v1563 = vadd.f32 0.0, %v1562
        %v1564 = vpop.f32.mrb[0].mxu0
        %1565 = vmatprep.mubr.f32.mxu0 0.0
        %1566 = vmatmul.mubr.f32.gmra.mrb[0].mxu0 %v1380
        %v1567 = vpop.f32.mrb[0].mxu0
        %v1568 = vadd.f32 0.0, %v1567
        %v1569 = vpop.f32.mrb[0].mxu0
        %1570 = vmatprep.mubr.f32.mxu0 0.0
        %1571 = vmatmul.mubr.f32.gmra.mrb[0].mxu0 %v1381
        %v1572 = vpop.f32.mrb[0].mxu0
        %v1573 = vadd.f32 0.0, %v1572
        %v1574 = vpop.f32.mrb[0].mxu0
        %1575 = vmatprep.mubr.f32.mxu0 0.0
        %1576 = vmatmul.mubr.f32.gmra.mrb[0].mxu0 %v1382
        %v1577 = vpop.f32.mrb[0].mxu0
        %v1578 = vadd.f32 0.0, %v1577
        %v1579 = vpop.f32.mrb[0].mxu0
        %1580 = vmatprep.mubr.f32.mxu0 0.0
        %1581 = vmatmul.mubr.f32.gmra.mrb[0].mxu0 %v1383
        %v1582 = vpop.f32.mrb[0].mxu0
        %v1583 = vadd.f32 0.0, %v1582
        %v1584 = vpop.f32.mrb[0].mxu0
        %1585 = vmatprep.mubr.f32.mxu0 0.0
        %1586 = vmatmul.mubr.f32.gmra.mrb[0].mxu0 %v1384
        %v1587 = vpop.f32.mrb[0].mxu0
        %v1588 = vadd.f32 0.0, %v1587
        %v1589 = vpop.f32.mrb[0].mxu0
        %1590 = vmatprep.mubr.f32.mxu0 0.0
        %1591 = vmatmul.mubr.f32.gmra.mrb[0].mxu0 %v1385
        %v1592 = vpop.f32.mrb[0].mxu0
        %v1593 = vadd.f32 0.0, %v1592
        %v1594 = vpop.f32.mrb[0].mxu0
        %1595 = vmatprep.mubr.f32.mxu0 0.0
        %1596 = vmatmul.mubr.f32.gmra.mrb[0].mxu0 %v1386
        %v1597 = vpop.f32.mrb[0].mxu0
        %v1598 = vadd.f32 0.0, %v1597
        %v1599 = vpop.f32.mrb[0].mxu0
        %1600 = vmatprep.mubr.f32.mxu0 0.0
        %1601 = vmatmul.mubr.f32.gmra.mrb[0].mxu0 %v1387
        %v1602 = vpop.f32.mrb[0].mxu0
        %v1603 = vadd.f32 0.0, %v1602
        %v1604 = vpop.f32.mrb[0].mxu0
        %1605 = vmatprep.mubr.f32.mxu0 0.0
        %1606 = vmatmul.mubr.f32.gmra.mrb[0].mxu0 %v1388
        %v1607 = vpop.f32.mrb[0].mxu0
        %v1608 = vadd.f32 0.0, %v1607
        %v1609 = vpop.f32.mrb[0].mxu0
        %1610 = vmatprep.mubr.f32.mxu0 0.0
        %1611 = vmatmul.mubr.f32.gmra.mrb[0].mxu0 %v1389
        %v1612 = vpop.f32.mrb[0].mxu0
        %v1613 = vadd.f32 0.0, %v1612
        %v1614 = vpop.f32.mrb[0].mxu0
        %1615 = vmatprep.mubr.f32.mxu0 0.0
        %1616 = vmatmul.mubr.f32.gmra.mrb[0].mxu0 %v1390
        %v1617 = vpop.f32.mrb[0].mxu0
        %v1618 = vadd.f32 0.0, %v1617
        %v1619 = vpop.f32.mrb[0].mxu0
        %1620 = vmatprep.mubr.f32.mxu0 0.0
        %1621 = vmatmul.mubr.f32.gmra.mrb[0].mxu0 %v1391
        %v1622 = vpop.f32.mrb[0].mxu0
        %v1623 = vadd.f32 0.0, %v1622
        %v1624 = vpop.f32.mrb[0].mxu0
        %1625 = vmatprep.mubr.f32.mxu0 0.0
        %1626 = vmatmul.mubr.f32.gmra.mrb[0].mxu0 %v1392
        %v1627 = vpop.f32.mrb[0].mxu0
        %v1628 = vadd.f32 0.0, %v1627
        %v1629 = vpop.f32.mrb[0].mxu0
        %1630 = vmatprep.mubr.f32.mxu0 0.0
        %1631 = vmatmul.mubr.f32.gmra.mrb[0].mxu0 %v1393
        %v1632 = vpop.f32.mrb[0].mxu0
        %v1633 = vadd.f32 0.0, %v1632
        %v1634 = vpop.f32.mrb[0].mxu0
        %1635 = vdwg.mxu0
        %v1636 = vadd.f32 %v1330, %v1478
        %v1637 = vadd.f32 %v1331, %v1483
        %v1638 = vadd.f32 %v1332, %v1488
        %v1639 = vadd.f32 %v1333, %v1493
        %v1640 = vadd.f32 %v1334, %v1498
        %v1641 = vadd.f32 %v1335, %v1503
        %v1642 = vadd.f32 %v1336, %v1508
        %v1643 = vadd.f32 %v1337, %v1513
        %v1644 = vadd.f32 %v1338, %v1518
        %v1645 = vadd.f32 %v1339, %v1523
        %v1646 = vadd.f32 %v1340, %v1528
        %v1647 = vadd.f32 %v1341, %v1533
        %v1648 = vadd.f32 %v1342, %v1538
        %v1649 = vadd.f32 %v1343, %v1543
        %v1650 = vadd.f32 %v1344, %v1548
        %v1651 = vadd.f32 %v1345, %v1553
        %v1652 = vadd.f32 %v1346, %v1558
        %v1653 = vadd.f32 %v1347, %v1563
        %v1654 = vadd.f32 %v1348, %v1568
        %v1655 = vadd.f32 %v1349, %v1573
        %v1656 = vadd.f32 %v1350, %v1578
        %v1657 = vadd.f32 %v1351, %v1583
        %v1658 = vadd.f32 %v1352, %v1588
        %v1659 = vadd.f32 %v1353, %v1593
        %v1660 = vadd.f32 %v1354, %v1598
        %v1661 = vadd.f32 %v1355, %v1603
        %v1662 = vadd.f32 %v1356, %v1608
        %v1663 = vadd.f32 %v1357, %v1613
        %v1664 = vadd.f32 %v1358, %v1618
        %v1665 = vadd.f32 %v1359, %v1623
        %v1666 = vadd.f32 %v1360, %v1628
        %v1667 = vadd.f32 %v1361, %v1633
        %v1668 = vld [vmem:[%s1055 + $0x4] sm:$0xff]
        %v1669 = vld [vmem:[%s1055 + $0xc] sm:$0xff]
        %v1670 = vld [vmem:[%s1055 + $0x1c] sm:$0xff]
        %v1671 = vld [vmem:[%s1055 + $0x24] sm:$0xff]
        %v1672 = vld [vmem:[%s1055 + $0x34] sm:$0xff]
        %v1673 = vld [vmem:[%s1055 + $0x3c] sm:$0xff]
        %v1674 = vld [vmem:[%s1055 + $0x4c] sm:$0xff]
        %v1675 = vld [vmem:[%s1055 + $0x54] sm:$0xff]
        %v1676 = vld [vmem:[%s1055 + $0x64] sm:$0xff]
        %v1677 = vld [vmem:[%s1055 + $0x6c] sm:$0xff]
        %v1678 = vld [vmem:[%s1055 + $0x7c] sm:$0xff]
        %v1679 = vld [vmem:[%s1055 + $0x84] sm:$0xff]
        %v1680 = vld [vmem:[%s1055 + $0x94] sm:$0xff]
        %v1681 = vld [vmem:[%s1055 + $0x9c] sm:$0xff]
        %v1682 = vld [vmem:[%s1055 + $0xac] sm:$0xff]
        %v1683 = vld [vmem:[%s1055 + $0xb4] sm:$0xff]
        %v1684 = vld [vmem:[%s1055 + $0xc4] sm:$0xff]
        %v1685 = vld [vmem:[%s1055 + $0xcc] sm:$0xff]
        %v1686 = vld [vmem:[%s1055 + $0xdc] sm:$0xff]
        %v1687 = vld [vmem:[%s1055 + $0xe4] sm:$0xff]
        %v1688 = vld [vmem:[%s1055 + $0xf4] sm:$0xff]
        %v1689 = vld [vmem:[%s1055 + $0xfc] sm:$0xff]
        %v1690 = vld [vmem:[%s1055 + $0x10c] sm:$0xff]
        %v1691 = vld [vmem:[%s1055 + $0x114] sm:$0xff]
        %v1692 = vld [vmem:[%s1055 + $0x124] sm:$0xff]
        %v1693 = vld [vmem:[%s1055 + $0x12c] sm:$0xff]
        %v1694 = vld [vmem:[%s1055 + $0x13c] sm:$0xff]
        %v1695 = vld [vmem:[%s1055 + $0x144] sm:$0xff]
        %v1696 = vld [vmem:[%s1055 + $0x154] sm:$0xff]
        %v1697 = vld [vmem:[%s1055 + $0x15c] sm:$0xff]
        %v1698 = vld [vmem:[%s1055 + $0x16c] sm:$0xff]
        %v1699 = vld [vmem:[%s1055 + $0x174] sm:$0xff]
        %s1700 = scalar_lea.vmem %s1, 640
        %v1701 = vld [vmem:[%s1700] sm:$0xff]
        %v1702 = vld [vmem:[%s1700 + $0x8] sm:$0xff]
        %v1703 = vld [vmem:[%s1700 + $0x10] sm:$0xff]
        %v1704 = vld [vmem:[%s1700 + $0x18] sm:$0xff]
        %v1705 = vld [vmem:[%s1700 + $0x20] sm:$0xff]
        %v1706 = vld [vmem:[%s1700 + $0x28] sm:$0xff]
        %v1707 = vld [vmem:[%s1700 + $0x30] sm:$0xff]
        %v1708 = vld [vmem:[%s1700 + $0x38] sm:$0xff]
        %v1709 = vld [vmem:[%s1700 + $0x40] sm:$0xff]
        %v1710 = vld [vmem:[%s1700 + $0x48] sm:$0xff]
        %v1711 = vld [vmem:[%s1700 + $0x50] sm:$0xff]
        %v1712 = vld [vmem:[%s1700 + $0x58] sm:$0xff]
        %v1713 = vld [vmem:[%s1700 + $0x60] sm:$0xff]
        %v1714 = vld [vmem:[%s1700 + $0x68] sm:$0xff]
        %v1715 = vld [vmem:[%s1700 + $0x70] sm:$0xff]
        %v1716 = vld [vmem:[%s1700 + $0x78] sm:$0xff]
        %1717 = vmatprep.subr.mxu0 0.0
        %1718 = vmatpush1.msra.mxu0 %v1701
        %1719 = vmatprep.subr.mxu0 0.0
        %1720 = vmatpush1.msra.mxu0 %v1702
        %1721 = vmatprep.subr.mxu0 0.0
        %1722 = vmatpush1.msra.mxu0 %v1703
        %1723 = vmatprep.subr.mxu0 0.0
        %1724 = vmatpush1.msra.mxu0 %v1704
        %1725 = vmatprep.subr.mxu0 0.0
        %1726 = vmatpush1.msra.mxu0 %v1705
        %1727 = vmatprep.subr.mxu0 0.0
        %1728 = vmatpush1.msra.mxu0 %v1706
        %1729 = vmatprep.subr.mxu0 0.0
        %1730 = vmatpush1.msra.mxu0 %v1707
        %1731 = vmatprep.subr.mxu0 0.0
        %1732 = vmatpush1.msra.mxu0 %v1708
        %1733 = vmatprep.subr.mxu0 0.0
        %1734 = vmatpush1.msra.mxu0 %v1709
        %1735 = vmatprep.subr.mxu0 0.0
        %1736 = vmatpush1.msra.mxu0 %v1710
        %1737 = vmatprep.subr.mxu0 0.0
        %1738 = vmatpush1.msra.mxu0 %v1711
        %1739 = vmatprep.subr.mxu0 0.0
        %1740 = vmatpush1.msra.mxu0 %v1712
        %1741 = vmatprep.subr.mxu0 0.0
        %1742 = vmatpush1.msra.mxu0 %v1713
        %1743 = vmatprep.subr.mxu0 0.0
        %1744 = vmatpush1.msra.mxu0 %v1714
        %1745 = vmatprep.subr.mxu0 0.0
        %1746 = vmatpush1.msra.mxu0 %v1715
        %1747 = vmatprep.subr.mxu0 0.0
        %1748 = vmatpush1.msra.mxu0 %v1716
        %1749 = vmatprep.subr.mxu0 0.0
        %1750 = vmatpush1.msra.mxu0 0.0
        %1751 = vmatprep.subr.mxu0 0.0
        %1752 = vmatpush1.msra.mxu0 0.0
        %1753 = vmatprep.subr.mxu0 0.0
        %1754 = vmatpush1.msra.mxu0 0.0
        %1755 = vmatprep.subr.mxu0 0.0
        %1756 = vmatpush1.msra.mxu0 0.0
        %1757 = vmatprep.subr.mxu0 0.0
        %1758 = vmatpush1.msra.mxu0 0.0
        %1759 = vmatprep.subr.mxu0 0.0
        %1760 = vmatpush1.msra.mxu0 0.0
        %1761 = vmatprep.subr.mxu0 0.0
        %1762 = vmatpush1.msra.mxu0 0.0
        %1763 = vmatprep.subr.mxu0 0.0
        %1764 = vmatpush1.msra.mxu0 0.0
        %1765 = vmatprep.subr.mxu0 0.0
        %1766 = vmatpush1.msra.mxu0 0.0
        %1767 = vmatprep.subr.mxu0 0.0
        %1768 = vmatpush1.msra.mxu0 0.0
        %1769 = vmatprep.subr.mxu0 0.0
        %1770 = vmatpush1.msra.mxu0 0.0
        %1771 = vmatprep.subr.mxu0 0.0
        %1772 = vmatpush1.msra.mxu0 0.0
        %1773 = vmatprep.subr.mxu0 0.0
        %1774 = vmatpush1.msra.mxu0 0.0
        %1775 = vmatprep.subr.mxu0 0.0
        %1776 = vmatpush1.msra.mxu0 0.0
        %1777 = vmatprep.subr.mxu0 0.0
        %1778 = vmatpush1.msra.mxu0 0.0
        %1779 = vmatprep.subr.mxu0 0.0
        %1780 = vmatpush1.msra.mxu0 0.0
        %1781 = vmatprep.mubr.f32.mxu0 0.0
        %1782 = vmatmul.mubr.f32.gmra.mrb[0].mxu0 %v1668
        %v1783 = vpop.f32.mrb[0].mxu0
        %v1784 = vadd.f32 0.0, %v1783
        %v1785 = vpop.f32.mrb[0].mxu0
        %1786 = vmatprep.mubr.f32.mxu0 0.0
        %1787 = vmatmul.mubr.f32.gmra.mrb[0].mxu0 %v1669
        %v1788 = vpop.f32.mrb[0].mxu0
        %v1789 = vadd.f32 0.0, %v1788
        %v1790 = vpop.f32.mrb[0].mxu0
        %1791 = vmatprep.mubr.f32.mxu0 0.0
        %1792 = vmatmul.mubr.f32.gmra.mrb[0].mxu0 %v1670
        %v1793 = vpop.f32.mrb[0].mxu0
        %v1794 = vadd.f32 0.0, %v1793
        %v1795 = vpop.f32.mrb[0].mxu0
        %1796 = vmatprep.mubr.f32.mxu0 0.0
        %1797 = vmatmul.mubr.f32.gmra.mrb[0].mxu0 %v1671
        %v1798 = vpop.f32.mrb[0].mxu0
        %v1799 = vadd.f32 0.0, %v1798
        %v1800 = vpop.f32.mrb[0].mxu0
        %1801 = vmatprep.mubr.f32.mxu0 0.0
        %1802 = vmatmul.mubr.f32.gmra.mrb[0].mxu0 %v1672
        %v1803 = vpop.f32.mrb[0].mxu0
        %v1804 = vadd.f32 0.0, %v1803
        %v1805 = vpop.f32.mrb[0].mxu0
        %1806 = vmatprep.mubr.f32.mxu0 0.0
        %1807 = vmatmul.mubr.f32.gmra.mrb[0].mxu0 %v1673
        %v1808 = vpop.f32.mrb[0].mxu0
        %v1809 = vadd.f32 0.0, %v1808
        %v1810 = vpop.f32.mrb[0].mxu0
        %1811 = vmatprep.mubr.f32.mxu0 0.0
        %1812 = vmatmul.mubr.f32.gmra.mrb[0].mxu0 %v1674
        %v1813 = vpop.f32.mrb[0].mxu0
        %v1814 = vadd.f32 0.0, %v1813
        %v1815 = vpop.f32.mrb[0].mxu0
        %1816 = vmatprep.mubr.f32.mxu0 0.0
        %1817 = vmatmul.mubr.f32.gmra.mrb[0].mxu0 %v1675
        %v1818 = vpop.f32.mrb[0].mxu0
        %v1819 = vadd.f32 0.0, %v1818
        %v1820 = vpop.f32.mrb[0].mxu0
        %1821 = vmatprep.mubr.f32.mxu0 0.0
        %1822 = vmatmul.mubr.f32.gmra.mrb[0].mxu0 %v1676
        %v1823 = vpop.f32.mrb[0].mxu0
        %v1824 = vadd.f32 0.0, %v1823
        %v1825 = vpop.f32.mrb[0].mxu0
        %1826 = vmatprep.mubr.f32.mxu0 0.0
        %1827 = vmatmul.mubr.f32.gmra.mrb[0].mxu0 %v1677
        %v1828 = vpop.f32.mrb[0].mxu0
        %v1829 = vadd.f32 0.0, %v1828
        %v1830 = vpop.f32.mrb[0].mxu0
        %1831 = vmatprep.mubr.f32.mxu0 0.0
        %1832 = vmatmul.mubr.f32.gmra.mrb[0].mxu0 %v1678
        %v1833 = vpop.f32.mrb[0].mxu0
        %v1834 = vadd.f32 0.0, %v1833
        %v1835 = vpop.f32.mrb[0].mxu0
        %1836 = vmatprep.mubr.f32.mxu0 0.0
        %1837 = vmatmul.mubr.f32.gmra.mrb[0].mxu0 %v1679
        %v1838 = vpop.f32.mrb[0].mxu0
        %v1839 = vadd.f32 0.0, %v1838
        %v1840 = vpop.f32.mrb[0].mxu0
        %1841 = vmatprep.mubr.f32.mxu0 0.0
        %1842 = vmatmul.mubr.f32.gmra.mrb[0].mxu0 %v1680
        %v1843 = vpop.f32.mrb[0].mxu0
        %v1844 = vadd.f32 0.0, %v1843
        %v1845 = vpop.f32.mrb[0].mxu0
        %1846 = vmatprep.mubr.f32.mxu0 0.0
        %1847 = vmatmul.mubr.f32.gmra.mrb[0].mxu0 %v1681
        %v1848 = vpop.f32.mrb[0].mxu0
        %v1849 = vadd.f32 0.0, %v1848
        %v1850 = vpop.f32.mrb[0].mxu0
        %1851 = vmatprep.mubr.f32.mxu0 0.0
        %1852 = vmatmul.mubr.f32.gmra.mrb[0].mxu0 %v1682
        %v1853 = vpop.f32.mrb[0].mxu0
        %v1854 = vadd.f32 0.0, %v1853
        %v1855 = vpop.f32.mrb[0].mxu0
        %1856 = vmatprep.mubr.f32.mxu0 0.0
        %1857 = vmatmul.mubr.f32.gmra.mrb[0].mxu0 %v1683
        %v1858 = vpop.f32.mrb[0].mxu0
        %v1859 = vadd.f32 0.0, %v1858
        %v1860 = vpop.f32.mrb[0].mxu0
        %1861 = vmatprep.mubr.f32.mxu0 0.0
        %1862 = vmatmul.mubr.f32.gmra.mrb[0].mxu0 %v1684
        %v1863 = vpop.f32.mrb[0].mxu0
        %v1864 = vadd.f32 0.0, %v1863
        %v1865 = vpop.f32.mrb[0].mxu0
        %1866 = vmatprep.mubr.f32.mxu0 0.0
        %1867 = vmatmul.mubr.f32.gmra.mrb[0].mxu0 %v1685
        %v1868 = vpop.f32.mrb[0].mxu0
        %v1869 = vadd.f32 0.0, %v1868
        %v1870 = vpop.f32.mrb[0].mxu0
        %1871 = vmatprep.mubr.f32.mxu0 0.0
        %1872 = vmatmul.mubr.f32.gmra.mrb[0].mxu0 %v1686
        %v1873 = vpop.f32.mrb[0].mxu0
        %v1874 = vadd.f32 0.0, %v1873
        %v1875 = vpop.f32.mrb[0].mxu0
        %1876 = vmatprep.mubr.f32.mxu0 0.0
        %1877 = vmatmul.mubr.f32.gmra.mrb[0].mxu0 %v1687
        %v1878 = vpop.f32.mrb[0].mxu0
        %v1879 = vadd.f32 0.0, %v1878
        %v1880 = vpop.f32.mrb[0].mxu0
        %1881 = vmatprep.mubr.f32.mxu0 0.0
        %1882 = vmatmul.mubr.f32.gmra.mrb[0].mxu0 %v1688
        %v1883 = vpop.f32.mrb[0].mxu0
        %v1884 = vadd.f32 0.0, %v1883
        %v1885 = vpop.f32.mrb[0].mxu0
        %1886 = vmatprep.mubr.f32.mxu0 0.0
        %1887 = vmatmul.mubr.f32.gmra.mrb[0].mxu0 %v1689
        %v1888 = vpop.f32.mrb[0].mxu0
        %v1889 = vadd.f32 0.0, %v1888
        %v1890 = vpop.f32.mrb[0].mxu0
        %1891 = vmatprep.mubr.f32.mxu0 0.0
        %1892 = vmatmul.mubr.f32.gmra.mrb[0].mxu0 %v1690
        %v1893 = vpop.f32.mrb[0].mxu0
        %v1894 = vadd.f32 0.0, %v1893
        %v1895 = vpop.f32.mrb[0].mxu0
        %1896 = vmatprep.mubr.f32.mxu0 0.0
        %1897 = vmatmul.mubr.f32.gmra.mrb[0].mxu0 %v1691
        %v1898 = vpop.f32.mrb[0].mxu0
        %v1899 = vadd.f32 0.0, %v1898
        %v1900 = vpop.f32.mrb[0].mxu0
        %1901 = vmatprep.mubr.f32.mxu0 0.0
        %1902 = vmatmul.mubr.f32.gmra.mrb[0].mxu0 %v1692
        %v1903 = vpop.f32.mrb[0].mxu0
        %v1904 = vadd.f32 0.0, %v1903
        %v1905 = vpop.f32.mrb[0].mxu0
        %1906 = vmatprep.mubr.f32.mxu0 0.0
        %1907 = vmatmul.mubr.f32.gmra.mrb[0].mxu0 %v1693
        %v1908 = vpop.f32.mrb[0].mxu0
        %v1909 = vadd.f32 0.0, %v1908
        %v1910 = vpop.f32.mrb[0].mxu0
        %1911 = vmatprep.mubr.f32.mxu0 0.0
        %1912 = vmatmul.mubr.f32.gmra.mrb[0].mxu0 %v1694
        %v1913 = vpop.f32.mrb[0].mxu0
        %v1914 = vadd.f32 0.0, %v1913
        %v1915 = vpop.f32.mrb[0].mxu0
        %1916 = vmatprep.mubr.f32.mxu0 0.0
        %1917 = vmatmul.mubr.f32.gmra.mrb[0].mxu0 %v1695
        %v1918 = vpop.f32.mrb[0].mxu0
        %v1919 = vadd.f32 0.0, %v1918
        %v1920 = vpop.f32.mrb[0].mxu0
        %1921 = vmatprep.mubr.f32.mxu0 0.0
        %1922 = vmatmul.mubr.f32.gmra.mrb[0].mxu0 %v1696
        %v1923 = vpop.f32.mrb[0].mxu0
        %v1924 = vadd.f32 0.0, %v1923
        %v1925 = vpop.f32.mrb[0].mxu0
        %1926 = vmatprep.mubr.f32.mxu0 0.0
        %1927 = vmatmul.mubr.f32.gmra.mrb[0].mxu0 %v1697
        %v1928 = vpop.f32.mrb[0].mxu0
        %v1929 = vadd.f32 0.0, %v1928
        %v1930 = vpop.f32.mrb[0].mxu0
        %1931 = vmatprep.mubr.f32.mxu0 0.0
        %1932 = vmatmul.mubr.f32.gmra.mrb[0].mxu0 %v1698
        %v1933 = vpop.f32.mrb[0].mxu0
        %v1934 = vadd.f32 0.0, %v1933
        %v1935 = vpop.f32.mrb[0].mxu0
        %1936 = vmatprep.mubr.f32.mxu0 0.0
        %1937 = vmatmul.mubr.f32.gmra.mrb[0].mxu0 %v1699
        %v1938 = vpop.f32.mrb[0].mxu0
        %v1939 = vadd.f32 0.0, %v1938
        %v1940 = vpop.f32.mrb[0].mxu0
        %1941 = vdwg.mxu0
        %v1942 = vadd.f32 %v1636, %v1784
        %v1943 = vadd.f32 %v1637, %v1789
        %v1944 = vadd.f32 %v1638, %v1794
        %v1945 = vadd.f32 %v1639, %v1799
        %v1946 = vadd.f32 %v1640, %v1804
        %v1947 = vadd.f32 %v1641, %v1809
        %v1948 = vadd.f32 %v1642, %v1814
        %v1949 = vadd.f32 %v1643, %v1819
        %v1950 = vadd.f32 %v1644, %v1824
        %v1951 = vadd.f32 %v1645, %v1829
        %v1952 = vadd.f32 %v1646, %v1834
        %v1953 = vadd.f32 %v1647, %v1839
        %v1954 = vadd.f32 %v1648, %v1844
        %v1955 = vadd.f32 %v1649, %v1849
        %v1956 = vadd.f32 %v1650, %v1854
        %v1957 = vadd.f32 %v1651, %v1859
        %v1958 = vadd.f32 %v1652, %v1864
        %v1959 = vadd.f32 %v1653, %v1869
        %v1960 = vadd.f32 %v1654, %v1874
        %v1961 = vadd.f32 %v1655, %v1879
        %v1962 = vadd.f32 %v1656, %v1884
        %v1963 = vadd.f32 %v1657, %v1889
        %v1964 = vadd.f32 %v1658, %v1894
        %v1965 = vadd.f32 %v1659, %v1899
        %v1966 = vadd.f32 %v1660, %v1904
        %v1967 = vadd.f32 %v1661, %v1909
        %v1968 = vadd.f32 %v1662, %v1914
        %v1969 = vadd.f32 %v1663, %v1919
        %v1970 = vadd.f32 %v1664, %v1924
        %v1971 = vadd.f32 %v1665, %v1929
        %v1972 = vadd.f32 %v1666, %v1934
        %v1973 = vadd.f32 %v1667, %v1939
        %s1974 = sadd.s32 %s197, 4
        %s1975 = smul.u32 %s1974, 24
        %s1976 = scalar_lea.vmem %s195, %s1975
        %v1977 = vld [vmem:[%s1976] sm:$0xff]
        %v1978 = vld [vmem:[%s1976 + $0x8] sm:$0xff]
        %v1979 = vld [vmem:[%s1976 + $0x18] sm:$0xff]
        %v1980 = vld [vmem:[%s1976 + $0x20] sm:$0xff]
        %v1981 = vld [vmem:[%s1976 + $0x30] sm:$0xff]
        %v1982 = vld [vmem:[%s1976 + $0x38] sm:$0xff]
        %v1983 = vld [vmem:[%s1976 + $0x48] sm:$0xff]
        %v1984 = vld [vmem:[%s1976 + $0x50] sm:$0xff]
        %v1985 = vld [vmem:[%s1976 + $0x60] sm:$0xff]
        %v1986 = vld [vmem:[%s1976 + $0x68] sm:$0xff]
        %v1987 = vld [vmem:[%s1976 + $0x78] sm:$0xff]
        %v1988 = vld [vmem:[%s1976 + $0x80] sm:$0xff]
        %v1989 = vld [vmem:[%s1976 + $0x90] sm:$0xff]
        %v1990 = vld [vmem:[%s1976 + $0x98] sm:$0xff]
        %v1991 = vld [vmem:[%s1976 + $0xa8] sm:$0xff]
        %v1992 = vld [vmem:[%s1976 + $0xb0] sm:$0xff]
        %v1993 = vld [vmem:[%s1976 + $0xc0] sm:$0xff]
        %v1994 = vld [vmem:[%s1976 + $0xc8] sm:$0xff]
        %v1995 = vld [vmem:[%s1976 + $0xd8] sm:$0xff]
        %v1996 = vld [vmem:[%s1976 + $0xe0] sm:$0xff]
        %v1997 = vld [vmem:[%s1976 + $0xf0] sm:$0xff]
        %v1998 = vld [vmem:[%s1976 + $0xf8] sm:$0xff]
        %v1999 = vld [vmem:[%s1976 + $0x108] sm:$0xff]
        %v2000 = vld [vmem:[%s1976 + $0x110] sm:$0xff]
        %v2001 = vld [vmem:[%s1976 + $0x120] sm:$0xff]
        %v2002 = vld [vmem:[%s1976 + $0x128] sm:$0xff]
        %v2003 = vld [vmem:[%s1976 + $0x138] sm:$0xff]
        %v2004 = vld [vmem:[%s1976 + $0x140] sm:$0xff]
        %v2005 = vld [vmem:[%s1976 + $0x150] sm:$0xff]
        %v2006 = vld [vmem:[%s1976 + $0x158] sm:$0xff]
        %v2007 = vld [vmem:[%s1976 + $0x168] sm:$0xff]
        %v2008 = vld [vmem:[%s1976 + $0x170] sm:$0xff]
        %s2009 = scalar_lea.vmem %s1, 768
        %v2010 = vld [vmem:[%s2009] sm:$0xff]
        %v2011 = vld [vmem:[%s2009 + $0x8] sm:$0xff]
        %v2012 = vld [vmem:[%s2009 + $0x10] sm:$0xff]
        %v2013 = vld [vmem:[%s2009 + $0x18] sm:$0xff]
        %v2014 = vld [vmem:[%s2009 + $0x20] sm:$0xff]
        %v2015 = vld [vmem:[%s2009 + $0x28] sm:$0xff]
        %v2016 = vld [vmem:[%s2009 + $0x30] sm:$0xff]
        %v2017 = vld [vmem:[%s2009 + $0x38] sm:$0xff]
        %v2018 = vld [vmem:[%s2009 + $0x40] sm:$0xff]
        %v2019 = vld [vmem:[%s2009 + $0x48] sm:$0xff]
        %v2020 = vld [vmem:[%s2009 + $0x50] sm:$0xff]
        %v2021 = vld [vmem:[%s2009 + $0x58] sm:$0xff]
        %v2022 = vld [vmem:[%s2009 + $0x60] sm:$0xff]
        %v2023 = vld [vmem:[%s2009 + $0x68] sm:$0xff]
        %v2024 = vld [vmem:[%s2009 + $0x70] sm:$0xff]
        %v2025 = vld [vmem:[%s2009 + $0x78] sm:$0xff]
        %2026 = vmatprep.subr.mxu0 0.0
        %2027 = vmatpush1.msra.mxu0 %v2010
        %2028 = vmatprep.subr.mxu0 0.0
        %2029 = vmatpush1.msra.mxu0 %v2011
        %2030 = vmatprep.subr.mxu0 0.0
        %2031 = vmatpush1.msra.mxu0 %v2012
        %2032 = vmatprep.subr.mxu0 0.0
        %2033 = vmatpush1.msra.mxu0 %v2013
        %2034 = vmatprep.subr.mxu0 0.0
        %2035 = vmatpush1.msra.mxu0 %v2014
        %2036 = vmatprep.subr.mxu0 0.0
        %2037 = vmatpush1.msra.mxu0 %v2015
        %2038 = vmatprep.subr.mxu0 0.0
        %2039 = vmatpush1.msra.mxu0 %v2016
        %2040 = vmatprep.subr.mxu0 0.0
        %2041 = vmatpush1.msra.mxu0 %v2017
        %2042 = vmatprep.subr.mxu0 0.0
        %2043 = vmatpush1.msra.mxu0 %v2018
        %2044 = vmatprep.subr.mxu0 0.0
        %2045 = vmatpush1.msra.mxu0 %v2019
        %2046 = vmatprep.subr.mxu0 0.0
        %2047 = vmatpush1.msra.mxu0 %v2020
        %2048 = vmatprep.subr.mxu0 0.0
        %2049 = vmatpush1.msra.mxu0 %v2021
        %2050 = vmatprep.subr.mxu0 0.0
        %2051 = vmatpush1.msra.mxu0 %v2022
        %2052 = vmatprep.subr.mxu0 0.0
        %2053 = vmatpush1.msra.mxu0 %v2023
        %2054 = vmatprep.subr.mxu0 0.0
        %2055 = vmatpush1.msra.mxu0 %v2024
        %2056 = vmatprep.subr.mxu0 0.0
        %2057 = vmatpush1.msra.mxu0 %v2025
        %2058 = vmatprep.subr.mxu0 0.0
        %2059 = vmatpush1.msra.mxu0 0.0
        %2060 = vmatprep.subr.mxu0 0.0
        %2061 = vmatpush1.msra.mxu0 0.0
        %2062 = vmatprep.subr.mxu0 0.0
        %2063 = vmatpush1.msra.mxu0 0.0
        %2064 = vmatprep.subr.mxu0 0.0
        %2065 = vmatpush1.msra.mxu0 0.0
        %2066 = vmatprep.subr.mxu0 0.0
        %2067 = vmatpush1.msra.mxu0 0.0
        %2068 = vmatprep.subr.mxu0 0.0
        %2069 = vmatpush1.msra.mxu0 0.0
        %2070 = vmatprep.subr.mxu0 0.0
        %2071 = vmatpush1.msra.mxu0 0.0
        %2072 = vmatprep.subr.mxu0 0.0
        %2073 = vmatpush1.msra.mxu0 0.0
        %2074 = vmatprep.subr.mxu0 0.0
        %2075 = vmatpush1.msra.mxu0 0.0
        %2076 = vmatprep.subr.mxu0 0.0
        %2077 = vmatpush1.msra.mxu0 0.0
        %2078 = vmatprep.subr.mxu0 0.0
        %2079 = vmatpush1.msra.mxu0 0.0
        %2080 = vmatprep.subr.mxu0 0.0
        %2081 = vmatpush1.msra.mxu0 0.0
        %2082 = vmatprep.subr.mxu0 0.0
        %2083 = vmatpush1.msra.mxu0 0.0
        %2084 = vmatprep.subr.mxu0 0.0
        %2085 = vmatpush1.msra.mxu0 0.0
        %2086 = vmatprep.subr.mxu0 0.0
        %2087 = vmatpush1.msra.mxu0 0.0
        %2088 = vmatprep.subr.mxu0 0.0
        %2089 = vmatpush1.msra.mxu0 0.0
        %2090 = vmatprep.mubr.f32.mxu0 0.0
        %2091 = vmatmul.mubr.f32.gmra.mrb[0].mxu0 %v1977
        %v2092 = vpop.f32.mrb[0].mxu0
        %v2093 = vadd.f32 0.0, %v2092
        %v2094 = vpop.f32.mrb[0].mxu0
        %2095 = vmatprep.mubr.f32.mxu0 0.0
        %2096 = vmatmul.mubr.f32.gmra.mrb[0].mxu0 %v1978
        %v2097 = vpop.f32.mrb[0].mxu0
        %v2098 = vadd.f32 0.0, %v2097
        %v2099 = vpop.f32.mrb[0].mxu0
        %2100 = vmatprep.mubr.f32.mxu0 0.0
        %2101 = vmatmul.mubr.f32.gmra.mrb[0].mxu0 %v1979
        %v2102 = vpop.f32.mrb[0].mxu0
        %v2103 = vadd.f32 0.0, %v2102
        %v2104 = vpop.f32.mrb[0].mxu0
        %2105 = vmatprep.mubr.f32.mxu0 0.0
        %2106 = vmatmul.mubr.f32.gmra.mrb[0].mxu0 %v1980
        %v2107 = vpop.f32.mrb[0].mxu0
        %v2108 = vadd.f32 0.0, %v2107
        %v2109 = vpop.f32.mrb[0].mxu0
        %2110 = vmatprep.mubr.f32.mxu0 0.0
        %2111 = vmatmul.mubr.f32.gmra.mrb[0].mxu0 %v1981
        %v2112 = vpop.f32.mrb[0].mxu0
        %v2113 = vadd.f32 0.0, %v2112
        %v2114 = vpop.f32.mrb[0].mxu0
        %2115 = vmatprep.mubr.f32.mxu0 0.0
        %2116 = vmatmul.mubr.f32.gmra.mrb[0].mxu0 %v1982
        %v2117 = vpop.f32.mrb[0].mxu0
        %v2118 = vadd.f32 0.0, %v2117
        %v2119 = vpop.f32.mrb[0].mxu0
        %2120 = vmatprep.mubr.f32.mxu0 0.0
        %2121 = vmatmul.mubr.f32.gmra.mrb[0].mxu0 %v1983
        %v2122 = vpop.f32.mrb[0].mxu0
        %v2123 = vadd.f32 0.0, %v2122
        %v2124 = vpop.f32.mrb[0].mxu0
        %2125 = vmatprep.mubr.f32.mxu0 0.0
        %2126 = vmatmul.mubr.f32.gmra.mrb[0].mxu0 %v1984
        %v2127 = vpop.f32.mrb[0].mxu0
        %v2128 = vadd.f32 0.0, %v2127
        %v2129 = vpop.f32.mrb[0].mxu0
        %2130 = vmatprep.mubr.f32.mxu0 0.0
        %2131 = vmatmul.mubr.f32.gmra.mrb[0].mxu0 %v1985
        %v2132 = vpop.f32.mrb[0].mxu0
        %v2133 = vadd.f32 0.0, %v2132
        %v2134 = vpop.f32.mrb[0].mxu0
        %2135 = vmatprep.mubr.f32.mxu0 0.0
        %2136 = vmatmul.mubr.f32.gmra.mrb[0].mxu0 %v1986
        %v2137 = vpop.f32.mrb[0].mxu0
        %v2138 = vadd.f32 0.0, %v2137
        %v2139 = vpop.f32.mrb[0].mxu0
        %2140 = vmatprep.mubr.f32.mxu0 0.0
        %2141 = vmatmul.mubr.f32.gmra.mrb[0].mxu0 %v1987
        %v2142 = vpop.f32.mrb[0].mxu0
        %v2143 = vadd.f32 0.0, %v2142
        %v2144 = vpop.f32.mrb[0].mxu0
        %2145 = vmatprep.mubr.f32.mxu0 0.0
        %2146 = vmatmul.mubr.f32.gmra.mrb[0].mxu0 %v1988
        %v2147 = vpop.f32.mrb[0].mxu0
        %v2148 = vadd.f32 0.0, %v2147
        %v2149 = vpop.f32.mrb[0].mxu0
        %2150 = vmatprep.mubr.f32.mxu0 0.0
        %2151 = vmatmul.mubr.f32.gmra.mrb[0].mxu0 %v1989
        %v2152 = vpop.f32.mrb[0].mxu0
        %v2153 = vadd.f32 0.0, %v2152
        %v2154 = vpop.f32.mrb[0].mxu0
        %2155 = vmatprep.mubr.f32.mxu0 0.0
        %2156 = vmatmul.mubr.f32.gmra.mrb[0].mxu0 %v1990
        %v2157 = vpop.f32.mrb[0].mxu0
        %v2158 = vadd.f32 0.0, %v2157
        %v2159 = vpop.f32.mrb[0].mxu0
        %2160 = vmatprep.mubr.f32.mxu0 0.0
        %2161 = vmatmul.mubr.f32.gmra.mrb[0].mxu0 %v1991
        %v2162 = vpop.f32.mrb[0].mxu0
        %v2163 = vadd.f32 0.0, %v2162
        %v2164 = vpop.f32.mrb[0].mxu0
        %2165 = vmatprep.mubr.f32.mxu0 0.0
        %2166 = vmatmul.mubr.f32.gmra.mrb[0].mxu0 %v1992
        %v2167 = vpop.f32.mrb[0].mxu0
        %v2168 = vadd.f32 0.0, %v2167
        %v2169 = vpop.f32.mrb[0].mxu0
        %2170 = vmatprep.mubr.f32.mxu0 0.0
        %2171 = vmatmul.mubr.f32.gmra.mrb[0].mxu0 %v1993
        %v2172 = vpop.f32.mrb[0].mxu0
        %v2173 = vadd.f32 0.0, %v2172
        %v2174 = vpop.f32.mrb[0].mxu0
        %2175 = vmatprep.mubr.f32.mxu0 0.0
        %2176 = vmatmul.mubr.f32.gmra.mrb[0].mxu0 %v1994
        %v2177 = vpop.f32.mrb[0].mxu0
        %v2178 = vadd.f32 0.0, %v2177
        %v2179 = vpop.f32.mrb[0].mxu0
        %2180 = vmatprep.mubr.f32.mxu0 0.0
        %2181 = vmatmul.mubr.f32.gmra.mrb[0].mxu0 %v1995
        %v2182 = vpop.f32.mrb[0].mxu0
        %v2183 = vadd.f32 0.0, %v2182
        %v2184 = vpop.f32.mrb[0].mxu0
        %2185 = vmatprep.mubr.f32.mxu0 0.0
        %2186 = vmatmul.mubr.f32.gmra.mrb[0].mxu0 %v1996
        %v2187 = vpop.f32.mrb[0].mxu0
        %v2188 = vadd.f32 0.0, %v2187
        %v2189 = vpop.f32.mrb[0].mxu0
        %2190 = vmatprep.mubr.f32.mxu0 0.0
        %2191 = vmatmul.mubr.f32.gmra.mrb[0].mxu0 %v1997
        %v2192 = vpop.f32.mrb[0].mxu0
        %v2193 = vadd.f32 0.0, %v2192
        %v2194 = vpop.f32.mrb[0].mxu0
        %2195 = vmatprep.mubr.f32.mxu0 0.0
        %2196 = vmatmul.mubr.f32.gmra.mrb[0].mxu0 %v1998
        %v2197 = vpop.f32.mrb[0].mxu0
        %v2198 = vadd.f32 0.0, %v2197
        %v2199 = vpop.f32.mrb[0].mxu0
        %2200 = vmatprep.mubr.f32.mxu0 0.0
        %2201 = vmatmul.mubr.f32.gmra.mrb[0].mxu0 %v1999
        %v2202 = vpop.f32.mrb[0].mxu0
        %v2203 = vadd.f32 0.0, %v2202
        %v2204 = vpop.f32.mrb[0].mxu0
        %2205 = vmatprep.mubr.f32.mxu0 0.0
        %2206 = vmatmul.mubr.f32.gmra.mrb[0].mxu0 %v2000
        %v2207 = vpop.f32.mrb[0].mxu0
        %v2208 = vadd.f32 0.0, %v2207
        %v2209 = vpop.f32.mrb[0].mxu0
        %2210 = vmatprep.mubr.f32.mxu0 0.0
        %2211 = vmatmul.mubr.f32.gmra.mrb[0].mxu0 %v2001
        %v2212 = vpop.f32.mrb[0].mxu0
        %v2213 = vadd.f32 0.0, %v2212
        %v2214 = vpop.f32.mrb[0].mxu0
        %2215 = vmatprep.mubr.f32.mxu0 0.0
        %2216 = vmatmul.mubr.f32.gmra.mrb[0].mxu0 %v2002
        %v2217 = vpop.f32.mrb[0].mxu0
        %v2218 = vadd.f32 0.0, %v2217
        %v2219 = vpop.f32.mrb[0].mxu0
        %2220 = vmatprep.mubr.f32.mxu0 0.0
        %2221 = vmatmul.mubr.f32.gmra.mrb[0].mxu0 %v2003
        %v2222 = vpop.f32.mrb[0].mxu0
        %v2223 = vadd.f32 0.0, %v2222
        %v2224 = vpop.f32.mrb[0].mxu0
        %2225 = vmatprep.mubr.f32.mxu0 0.0
        %2226 = vmatmul.mubr.f32.gmra.mrb[0].mxu0 %v2004
        %v2227 = vpop.f32.mrb[0].mxu0
        %v2228 = vadd.f32 0.0, %v2227
        %v2229 = vpop.f32.mrb[0].mxu0
        %2230 = vmatprep.mubr.f32.mxu0 0.0
        %2231 = vmatmul.mubr.f32.gmra.mrb[0].mxu0 %v2005
        %v2232 = vpop.f32.mrb[0].mxu0
        %v2233 = vadd.f32 0.0, %v2232
        %v2234 = vpop.f32.mrb[0].mxu0
        %2235 = vmatprep.mubr.f32.mxu0 0.0
        %2236 = vmatmul.mubr.f32.gmra.mrb[0].mxu0 %v2006
        %v2237 = vpop.f32.mrb[0].mxu0
        %v2238 = vadd.f32 0.0, %v2237
        %v2239 = vpop.f32.mrb[0].mxu0
        %2240 = vmatprep.mubr.f32.mxu0 0.0
        %2241 = vmatmul.mubr.f32.gmra.mrb[0].mxu0 %v2007
        %v2242 = vpop.f32.mrb[0].mxu0
        %v2243 = vadd.f32 0.0, %v2242
        %v2244 = vpop.f32.mrb[0].mxu0
        %2245 = vmatprep.mubr.f32.mxu0 0.0
        %2246 = vmatmul.mubr.f32.gmra.mrb[0].mxu0 %v2008
        %v2247 = vpop.f32.mrb[0].mxu0
        %v2248 = vadd.f32 0.0, %v2247
        %v2249 = vpop.f32.mrb[0].mxu0
        %2250 = vdwg.mxu0
        %v2251 = vadd.f32 %v1942, %v2093
        %v2252 = vadd.f32 %v1943, %v2098
        %v2253 = vadd.f32 %v1944, %v2103
        %v2254 = vadd.f32 %v1945, %v2108
        %v2255 = vadd.f32 %v1946, %v2113
        %v2256 = vadd.f32 %v1947, %v2118
        %v2257 = vadd.f32 %v1948, %v2123
        %v2258 = vadd.f32 %v1949, %v2128
        %v2259 = vadd.f32 %v1950, %v2133
        %v2260 = vadd.f32 %v1951, %v2138
        %v2261 = vadd.f32 %v1952, %v2143
        %v2262 = vadd.f32 %v1953, %v2148
        %v2263 = vadd.f32 %v1954, %v2153
        %v2264 = vadd.f32 %v1955, %v2158
        %v2265 = vadd.f32 %v1956, %v2163
        %v2266 = vadd.f32 %v1957, %v2168
        %v2267 = vadd.f32 %v1958, %v2173
        %v2268 = vadd.f32 %v1959, %v2178
        %v2269 = vadd.f32 %v1960, %v2183
        %v2270 = vadd.f32 %v1961, %v2188
        %v2271 = vadd.f32 %v1962, %v2193
        %v2272 = vadd.f32 %v1963, %v2198
        %v2273 = vadd.f32 %v1964, %v2203
        %v2274 = vadd.f32 %v1965, %v2208
        %v2275 = vadd.f32 %v1966, %v2213
        %v2276 = vadd.f32 %v1967, %v2218
        %v2277 = vadd.f32 %v1968, %v2223
        %v2278 = vadd.f32 %v1969, %v2228
        %v2279 = vadd.f32 %v1970, %v2233
        %v2280 = vadd.f32 %v1971, %v2238
        %v2281 = vadd.f32 %v1972, %v2243
        %v2282 = vadd.f32 %v1973, %v2248
        %v2283 = vld [vmem:[%s1976 + $0x2] sm:$0xff]
        %v2284 = vld [vmem:[%s1976 + $0xa] sm:$0xff]
        %v2285 = vld [vmem:[%s1976 + $0x1a] sm:$0xff]
        %v2286 = vld [vmem:[%s1976 + $0x22] sm:$0xff]
        %v2287 = vld [vmem:[%s1976 + $0x32] sm:$0xff]
        %v2288 = vld [vmem:[%s1976 + $0x3a] sm:$0xff]
        %v2289 = vld [vmem:[%s1976 + $0x4a] sm:$0xff]
        %v2290 = vld [vmem:[%s1976 + $0x52] sm:$0xff]
        %v2291 = vld [vmem:[%s1976 + $0x62] sm:$0xff]
        %v2292 = vld [vmem:[%s1976 + $0x6a] sm:$0xff]
        %v2293 = vld [vmem:[%s1976 + $0x7a] sm:$0xff]
        %v2294 = vld [vmem:[%s1976 + $0x82] sm:$0xff]
        %v2295 = vld [vmem:[%s1976 + $0x92] sm:$0xff]
        %v2296 = vld [vmem:[%s1976 + $0x9a] sm:$0xff]
        %v2297 = vld [vmem:[%s1976 + $0xaa] sm:$0xff]
        %v2298 = vld [vmem:[%s1976 + $0xb2] sm:$0xff]
        %v2299 = vld [vmem:[%s1976 + $0xc2] sm:$0xff]
        %v2300 = vld [vmem:[%s1976 + $0xca] sm:$0xff]
        %v2301 = vld [vmem:[%s1976 + $0xda] sm:$0xff]
        %v2302 = vld [vmem:[%s1976 + $0xe2] sm:$0xff]
        %v2303 = vld [vmem:[%s1976 + $0xf2] sm:$0xff]
        %v2304 = vld [vmem:[%s1976 + $0xfa] sm:$0xff]
        %v2305 = vld [vmem:[%s1976 + $0x10a] sm:$0xff]
        %v2306 = vld [vmem:[%s1976 + $0x112] sm:$0xff]
        %v2307 = vld [vmem:[%s1976 + $0x122] sm:$0xff]
        %v2308 = vld [vmem:[%s1976 + $0x12a] sm:$0xff]
        %v2309 = vld [vmem:[%s1976 + $0x13a] sm:$0xff]
        %v2310 = vld [vmem:[%s1976 + $0x142] sm:$0xff]
        %v2311 = vld [vmem:[%s1976 + $0x152] sm:$0xff]
        %v2312 = vld [vmem:[%s1976 + $0x15a] sm:$0xff]
        %v2313 = vld [vmem:[%s1976 + $0x16a] sm:$0xff]
        %v2314 = vld [vmem:[%s1976 + $0x172] sm:$0xff]
        %s2315 = scalar_lea.vmem %s1, 896
        %v2316 = vld [vmem:[%s2315] sm:$0xff]
        %v2317 = vld [vmem:[%s2315 + $0x8] sm:$0xff]
        %v2318 = vld [vmem:[%s2315 + $0x10] sm:$0xff]
        %v2319 = vld [vmem:[%s2315 + $0x18] sm:$0xff]
        %v2320 = vld [vmem:[%s2315 + $0x20] sm:$0xff]
        %v2321 = vld [vmem:[%s2315 + $0x28] sm:$0xff]
        %v2322 = vld [vmem:[%s2315 + $0x30] sm:$0xff]
        %v2323 = vld [vmem:[%s2315 + $0x38] sm:$0xff]
        %v2324 = vld [vmem:[%s2315 + $0x40] sm:$0xff]
        %v2325 = vld [vmem:[%s2315 + $0x48] sm:$0xff]
        %v2326 = vld [vmem:[%s2315 + $0x50] sm:$0xff]
        %v2327 = vld [vmem:[%s2315 + $0x58] sm:$0xff]
        %v2328 = vld [vmem:[%s2315 + $0x60] sm:$0xff]
        %v2329 = vld [vmem:[%s2315 + $0x68] sm:$0xff]
        %v2330 = vld [vmem:[%s2315 + $0x70] sm:$0xff]
        %v2331 = vld [vmem:[%s2315 + $0x78] sm:$0xff]
        %2332 = vmatprep.subr.mxu0 0.0
        %2333 = vmatpush1.msra.mxu0 %v2316
        %2334 = vmatprep.subr.mxu0 0.0
        %2335 = vmatpush1.msra.mxu0 %v2317
        %2336 = vmatprep.subr.mxu0 0.0
        %2337 = vmatpush1.msra.mxu0 %v2318
        %2338 = vmatprep.subr.mxu0 0.0
        %2339 = vmatpush1.msra.mxu0 %v2319
        %2340 = vmatprep.subr.mxu0 0.0
        %2341 = vmatpush1.msra.mxu0 %v2320
        %2342 = vmatprep.subr.mxu0 0.0
        %2343 = vmatpush1.msra.mxu0 %v2321
        %2344 = vmatprep.subr.mxu0 0.0
        %2345 = vmatpush1.msra.mxu0 %v2322
        %2346 = vmatprep.subr.mxu0 0.0
        %2347 = vmatpush1.msra.mxu0 %v2323
        %2348 = vmatprep.subr.mxu0 0.0
        %2349 = vmatpush1.msra.mxu0 %v2324
        %2350 = vmatprep.subr.mxu0 0.0
        %2351 = vmatpush1.msra.mxu0 %v2325
        %2352 = vmatprep.subr.mxu0 0.0
        %2353 = vmatpush1.msra.mxu0 %v2326
        %2354 = vmatprep.subr.mxu0 0.0
        %2355 = vmatpush1.msra.mxu0 %v2327
        %2356 = vmatprep.subr.mxu0 0.0
        %2357 = vmatpush1.msra.mxu0 %v2328
        %2358 = vmatprep.subr.mxu0 0.0
        %2359 = vmatpush1.msra.mxu0 %v2329
        %2360 = vmatprep.subr.mxu0 0.0
        %2361 = vmatpush1.msra.mxu0 %v2330
        %2362 = vmatprep.subr.mxu0 0.0
        %2363 = vmatpush1.msra.mxu0 %v2331
        %2364 = vmatprep.subr.mxu0 0.0
        %2365 = vmatpush1.msra.mxu0 0.0
        %2366 = vmatprep.subr.mxu0 0.0
        %2367 = vmatpush1.msra.mxu0 0.0
        %2368 = vmatprep.subr.mxu0 0.0
        %2369 = vmatpush1.msra.mxu0 0.0
        %2370 = vmatprep.subr.mxu0 0.0
        %2371 = vmatpush1.msra.mxu0 0.0
        %2372 = vmatprep.subr.mxu0 0.0
        %2373 = vmatpush1.msra.mxu0 0.0
        %2374 = vmatprep.subr.mxu0 0.0
        %2375 = vmatpush1.msra.mxu0 0.0
        %2376 = vmatprep.subr.mxu0 0.0
        %2377 = vmatpush1.msra.mxu0 0.0
        %2378 = vmatprep.subr.mxu0 0.0
        %2379 = vmatpush1.msra.mxu0 0.0
        %2380 = vmatprep.subr.mxu0 0.0
        %2381 = vmatpush1.msra.mxu0 0.0
        %2382 = vmatprep.subr.mxu0 0.0
        %2383 = vmatpush1.msra.mxu0 0.0
        %2384 = vmatprep.subr.mxu0 0.0
        %2385 = vmatpush1.msra.mxu0 0.0
        %2386 = vmatprep.subr.mxu0 0.0
        %2387 = vmatpush1.msra.mxu0 0.0
        %2388 = vmatprep.subr.mxu0 0.0
        %2389 = vmatpush1.msra.mxu0 0.0
        %2390 = vmatprep.subr.mxu0 0.0
        %2391 = vmatpush1.msra.mxu0 0.0
        %2392 = vmatprep.subr.mxu0 0.0
        %2393 = vmatpush1.msra.mxu0 0.0
        %2394 = vmatprep.subr.mxu0 0.0
        %2395 = vmatpush1.msra.mxu0 0.0
        %2396 = vmatprep.mubr.f32.mxu0 0.0
        %2397 = vmatmul.mubr.f32.gmra.mrb[0].mxu0 %v2283
        %v2398 = vpop.f32.mrb[0].mxu0
        %v2399 = vadd.f32 0.0, %v2398
        %v2400 = vpop.f32.mrb[0].mxu0
        %2401 = vmatprep.mubr.f32.mxu0 0.0
        %2402 = vmatmul.mubr.f32.gmra.mrb[0].mxu0 %v2284
        %v2403 = vpop.f32.mrb[0].mxu0
        %v2404 = vadd.f32 0.0, %v2403
        %v2405 = vpop.f32.mrb[0].mxu0
        %2406 = vmatprep.mubr.f32.mxu0 0.0
        %2407 = vmatmul.mubr.f32.gmra.mrb[0].mxu0 %v2285
        %v2408 = vpop.f32.mrb[0].mxu0
        %v2409 = vadd.f32 0.0, %v2408
        %v2410 = vpop.f32.mrb[0].mxu0
        %2411 = vmatprep.mubr.f32.mxu0 0.0
        %2412 = vmatmul.mubr.f32.gmra.mrb[0].mxu0 %v2286
        %v2413 = vpop.f32.mrb[0].mxu0
        %v2414 = vadd.f32 0.0, %v2413
        %v2415 = vpop.f32.mrb[0].mxu0
        %2416 = vmatprep.mubr.f32.mxu0 0.0
        %2417 = vmatmul.mubr.f32.gmra.mrb[0].mxu0 %v2287
        %v2418 = vpop.f32.mrb[0].mxu0
        %v2419 = vadd.f32 0.0, %v2418
        %v2420 = vpop.f32.mrb[0].mxu0
        %2421 = vmatprep.mubr.f32.mxu0 0.0
        %2422 = vmatmul.mubr.f32.gmra.mrb[0].mxu0 %v2288
        %v2423 = vpop.f32.mrb[0].mxu0
        %v2424 = vadd.f32 0.0, %v2423
        %v2425 = vpop.f32.mrb[0].mxu0
        %2426 = vmatprep.mubr.f32.mxu0 0.0
        %2427 = vmatmul.mubr.f32.gmra.mrb[0].mxu0 %v2289
        %v2428 = vpop.f32.mrb[0].mxu0
        %v2429 = vadd.f32 0.0, %v2428
        %v2430 = vpop.f32.mrb[0].mxu0
        %2431 = vmatprep.mubr.f32.mxu0 0.0
        %2432 = vmatmul.mubr.f32.gmra.mrb[0].mxu0 %v2290
        %v2433 = vpop.f32.mrb[0].mxu0
        %v2434 = vadd.f32 0.0, %v2433
        %v2435 = vpop.f32.mrb[0].mxu0
        %2436 = vmatprep.mubr.f32.mxu0 0.0
        %2437 = vmatmul.mubr.f32.gmra.mrb[0].mxu0 %v2291
        %v2438 = vpop.f32.mrb[0].mxu0
        %v2439 = vadd.f32 0.0, %v2438
        %v2440 = vpop.f32.mrb[0].mxu0
        %2441 = vmatprep.mubr.f32.mxu0 0.0
        %2442 = vmatmul.mubr.f32.gmra.mrb[0].mxu0 %v2292
        %v2443 = vpop.f32.mrb[0].mxu0
        %v2444 = vadd.f32 0.0, %v2443
        %v2445 = vpop.f32.mrb[0].mxu0
        %2446 = vmatprep.mubr.f32.mxu0 0.0
        %2447 = vmatmul.mubr.f32.gmra.mrb[0].mxu0 %v2293
        %v2448 = vpop.f32.mrb[0].mxu0
        %v2449 = vadd.f32 0.0, %v2448
        %v2450 = vpop.f32.mrb[0].mxu0
        %2451 = vmatprep.mubr.f32.mxu0 0.0
        %2452 = vmatmul.mubr.f32.gmra.mrb[0].mxu0 %v2294
        %v2453 = vpop.f32.mrb[0].mxu0
        %v2454 = vadd.f32 0.0, %v2453
        %v2455 = vpop.f32.mrb[0].mxu0
        %2456 = vmatprep.mubr.f32.mxu0 0.0
        %2457 = vmatmul.mubr.f32.gmra.mrb[0].mxu0 %v2295
        %v2458 = vpop.f32.mrb[0].mxu0
        %v2459 = vadd.f32 0.0, %v2458
        %v2460 = vpop.f32.mrb[0].mxu0
        %2461 = vmatprep.mubr.f32.mxu0 0.0
        %2462 = vmatmul.mubr.f32.gmra.mrb[0].mxu0 %v2296
        %v2463 = vpop.f32.mrb[0].mxu0
        %v2464 = vadd.f32 0.0, %v2463
        %v2465 = vpop.f32.mrb[0].mxu0
        %2466 = vmatprep.mubr.f32.mxu0 0.0
        %2467 = vmatmul.mubr.f32.gmra.mrb[0].mxu0 %v2297
        %v2468 = vpop.f32.mrb[0].mxu0
        %v2469 = vadd.f32 0.0, %v2468
        %v2470 = vpop.f32.mrb[0].mxu0
        %2471 = vmatprep.mubr.f32.mxu0 0.0
        %2472 = vmatmul.mubr.f32.gmra.mrb[0].mxu0 %v2298
        %v2473 = vpop.f32.mrb[0].mxu0
        %v2474 = vadd.f32 0.0, %v2473
        %v2475 = vpop.f32.mrb[0].mxu0
        %2476 = vmatprep.mubr.f32.mxu0 0.0
        %2477 = vmatmul.mubr.f32.gmra.mrb[0].mxu0 %v2299
        %v2478 = vpop.f32.mrb[0].mxu0
        %v2479 = vadd.f32 0.0, %v2478
        %v2480 = vpop.f32.mrb[0].mxu0
        %2481 = vmatprep.mubr.f32.mxu0 0.0
        %2482 = vmatmul.mubr.f32.gmra.mrb[0].mxu0 %v2300
        %v2483 = vpop.f32.mrb[0].mxu0
        %v2484 = vadd.f32 0.0, %v2483
        %v2485 = vpop.f32.mrb[0].mxu0
        %2486 = vmatprep.mubr.f32.mxu0 0.0
        %2487 = vmatmul.mubr.f32.gmra.mrb[0].mxu0 %v2301
        %v2488 = vpop.f32.mrb[0].mxu0
        %v2489 = vadd.f32 0.0, %v2488
        %v2490 = vpop.f32.mrb[0].mxu0
        %2491 = vmatprep.mubr.f32.mxu0 0.0
        %2492 = vmatmul.mubr.f32.gmra.mrb[0].mxu0 %v2302
        %v2493 = vpop.f32.mrb[0].mxu0
        %v2494 = vadd.f32 0.0, %v2493
        %v2495 = vpop.f32.mrb[0].mxu0
        %2496 = vmatprep.mubr.f32.mxu0 0.0
        %2497 = vmatmul.mubr.f32.gmra.mrb[0].mxu0 %v2303
        %v2498 = vpop.f32.mrb[0].mxu0
        %v2499 = vadd.f32 0.0, %v2498
        %v2500 = vpop.f32.mrb[0].mxu0
        %2501 = vmatprep.mubr.f32.mxu0 0.0
        %2502 = vmatmul.mubr.f32.gmra.mrb[0].mxu0 %v2304
        %v2503 = vpop.f32.mrb[0].mxu0
        %v2504 = vadd.f32 0.0, %v2503
        %v2505 = vpop.f32.mrb[0].mxu0
        %2506 = vmatprep.mubr.f32.mxu0 0.0
        %2507 = vmatmul.mubr.f32.gmra.mrb[0].mxu0 %v2305
        %v2508 = vpop.f32.mrb[0].mxu0
        %v2509 = vadd.f32 0.0, %v2508
        %v2510 = vpop.f32.mrb[0].mxu0
        %2511 = vmatprep.mubr.f32.mxu0 0.0
        %2512 = vmatmul.mubr.f32.gmra.mrb[0].mxu0 %v2306
        %v2513 = vpop.f32.mrb[0].mxu0
        %v2514 = vadd.f32 0.0, %v2513
        %v2515 = vpop.f32.mrb[0].mxu0
        %2516 = vmatprep.mubr.f32.mxu0 0.0
        %2517 = vmatmul.mubr.f32.gmra.mrb[0].mxu0 %v2307
        %v2518 = vpop.f32.mrb[0].mxu0
        %v2519 = vadd.f32 0.0, %v2518
        %v2520 = vpop.f32.mrb[0].mxu0
        %2521 = vmatprep.mubr.f32.mxu0 0.0
        %2522 = vmatmul.mubr.f32.gmra.mrb[0].mxu0 %v2308
        %v2523 = vpop.f32.mrb[0].mxu0
        %v2524 = vadd.f32 0.0, %v2523
        %v2525 = vpop.f32.mrb[0].mxu0
        %2526 = vmatprep.mubr.f32.mxu0 0.0
        %2527 = vmatmul.mubr.f32.gmra.mrb[0].mxu0 %v2309
        %v2528 = vpop.f32.mrb[0].mxu0
        %v2529 = vadd.f32 0.0, %v2528
        %v2530 = vpop.f32.mrb[0].mxu0
        %2531 = vmatprep.mubr.f32.mxu0 0.0
        %2532 = vmatmul.mubr.f32.gmra.mrb[0].mxu0 %v2310
        %v2533 = vpop.f32.mrb[0].mxu0
        %v2534 = vadd.f32 0.0, %v2533
        %v2535 = vpop.f32.mrb[0].mxu0
        %2536 = vmatprep.mubr.f32.mxu0 0.0
        %2537 = vmatmul.mubr.f32.gmra.mrb[0].mxu0 %v2311
        %v2538 = vpop.f32.mrb[0].mxu0
        %v2539 = vadd.f32 0.0, %v2538
        %v2540 = vpop.f32.mrb[0].mxu0
        %2541 = vmatprep.mubr.f32.mxu0 0.0
        %2542 = vmatmul.mubr.f32.gmra.mrb[0].mxu0 %v2312
        %v2543 = vpop.f32.mrb[0].mxu0
        %v2544 = vadd.f32 0.0, %v2543
        %v2545 = vpop.f32.mrb[0].mxu0
        %2546 = vmatprep.mubr.f32.mxu0 0.0
        %2547 = vmatmul.mubr.f32.gmra.mrb[0].mxu0 %v2313
        %v2548 = vpop.f32.mrb[0].mxu0
        %v2549 = vadd.f32 0.0, %v2548
        %v2550 = vpop.f32.mrb[0].mxu0
        %2551 = vmatprep.mubr.f32.mxu0 0.0
        %2552 = vmatmul.mubr.f32.gmra.mrb[0].mxu0 %v2314
        %v2553 = vpop.f32.mrb[0].mxu0
        %v2554 = vadd.f32 0.0, %v2553
        %v2555 = vpop.f32.mrb[0].mxu0
        %2556 = vdwg.mxu0
        %v2557 = vadd.f32 %v2251, %v2399
        %v2558 = vadd.f32 %v2252, %v2404
        %v2559 = vadd.f32 %v2253, %v2409
        %v2560 = vadd.f32 %v2254, %v2414
        %v2561 = vadd.f32 %v2255, %v2419
        %v2562 = vadd.f32 %v2256, %v2424
        %v2563 = vadd.f32 %v2257, %v2429
        %v2564 = vadd.f32 %v2258, %v2434
        %v2565 = vadd.f32 %v2259, %v2439
        %v2566 = vadd.f32 %v2260, %v2444
        %v2567 = vadd.f32 %v2261, %v2449
        %v2568 = vadd.f32 %v2262, %v2454
        %v2569 = vadd.f32 %v2263, %v2459
        %v2570 = vadd.f32 %v2264, %v2464
        %v2571 = vadd.f32 %v2265, %v2469
        %v2572 = vadd.f32 %v2266, %v2474
        %v2573 = vadd.f32 %v2267, %v2479
        %v2574 = vadd.f32 %v2268, %v2484
        %v2575 = vadd.f32 %v2269, %v2489
        %v2576 = vadd.f32 %v2270, %v2494
        %v2577 = vadd.f32 %v2271, %v2499
        %v2578 = vadd.f32 %v2272, %v2504
        %v2579 = vadd.f32 %v2273, %v2509
        %v2580 = vadd.f32 %v2274, %v2514
        %v2581 = vadd.f32 %v2275, %v2519
        %v2582 = vadd.f32 %v2276, %v2524
        %v2583 = vadd.f32 %v2277, %v2529
        %v2584 = vadd.f32 %v2278, %v2534
        %v2585 = vadd.f32 %v2279, %v2539
        %v2586 = vadd.f32 %v2280, %v2544
        %v2587 = vadd.f32 %v2281, %v2549
        %v2588 = vadd.f32 %v2282, %v2554
        %v2589 = vld [vmem:[%s1976 + $0x4] sm:$0xff]
        %v2590 = vld [vmem:[%s1976 + $0xc] sm:$0xff]
        %v2591 = vld [vmem:[%s1976 + $0x1c] sm:$0xff]
        %v2592 = vld [vmem:[%s1976 + $0x24] sm:$0xff]
        %v2593 = vld [vmem:[%s1976 + $0x34] sm:$0xff]
        %v2594 = vld [vmem:[%s1976 + $0x3c] sm:$0xff]
        %v2595 = vld [vmem:[%s1976 + $0x4c] sm:$0xff]
        %v2596 = vld [vmem:[%s1976 + $0x54] sm:$0xff]
        %v2597 = vld [vmem:[%s1976 + $0x64] sm:$0xff]
        %v2598 = vld [vmem:[%s1976 + $0x6c] sm:$0xff]
        %v2599 = vld [vmem:[%s1976 + $0x7c] sm:$0xff]
        %v2600 = vld [vmem:[%s1976 + $0x84] sm:$0xff]
        %v2601 = vld [vmem:[%s1976 + $0x94] sm:$0xff]
        %v2602 = vld [vmem:[%s1976 + $0x9c] sm:$0xff]
        %v2603 = vld [vmem:[%s1976 + $0xac] sm:$0xff]
        %v2604 = vld [vmem:[%s1976 + $0xb4] sm:$0xff]
        %v2605 = vld [vmem:[%s1976 + $0xc4] sm:$0xff]
        %v2606 = vld [vmem:[%s1976 + $0xcc] sm:$0xff]
        %v2607 = vld [vmem:[%s1976 + $0xdc] sm:$0xff]
        %v2608 = vld [vmem:[%s1976 + $0xe4] sm:$0xff]
        %v2609 = vld [vmem:[%s1976 + $0xf4] sm:$0xff]
        %v2610 = vld [vmem:[%s1976 + $0xfc] sm:$0xff]
        %v2611 = vld [vmem:[%s1976 + $0x10c] sm:$0xff]
        %v2612 = vld [vmem:[%s1976 + $0x114] sm:$0xff]
        %v2613 = vld [vmem:[%s1976 + $0x124] sm:$0xff]
        %v2614 = vld [vmem:[%s1976 + $0x12c] sm:$0xff]
        %v2615 = vld [vmem:[%s1976 + $0x13c] sm:$0xff]
        %v2616 = vld [vmem:[%s1976 + $0x144] sm:$0xff]
        %v2617 = vld [vmem:[%s1976 + $0x154] sm:$0xff]
        %v2618 = vld [vmem:[%s1976 + $0x15c] sm:$0xff]
        %v2619 = vld [vmem:[%s1976 + $0x16c] sm:$0xff]
        %v2620 = vld [vmem:[%s1976 + $0x174] sm:$0xff]
        %s2621 = scalar_lea.vmem %s1, 1024
        %v2622 = vld [vmem:[%s2621] sm:$0xff]
        %v2623 = vld [vmem:[%s2621 + $0x8] sm:$0xff]
        %v2624 = vld [vmem:[%s2621 + $0x10] sm:$0xff]
        %v2625 = vld [vmem:[%s2621 + $0x18] sm:$0xff]
        %v2626 = vld [vmem:[%s2621 + $0x20] sm:$0xff]
        %v2627 = vld [vmem:[%s2621 + $0x28] sm:$0xff]
        %v2628 = vld [vmem:[%s2621 + $0x30] sm:$0xff]
        %v2629 = vld [vmem:[%s2621 + $0x38] sm:$0xff]
        %v2630 = vld [vmem:[%s2621 + $0x40] sm:$0xff]
        %v2631 = vld [vmem:[%s2621 + $0x48] sm:$0xff]
        %v2632 = vld [vmem:[%s2621 + $0x50] sm:$0xff]
        %v2633 = vld [vmem:[%s2621 + $0x58] sm:$0xff]
        %v2634 = vld [vmem:[%s2621 + $0x60] sm:$0xff]
        %v2635 = vld [vmem:[%s2621 + $0x68] sm:$0xff]
        %v2636 = vld [vmem:[%s2621 + $0x70] sm:$0xff]
        %v2637 = vld [vmem:[%s2621 + $0x78] sm:$0xff]
        %2638 = vmatprep.subr.mxu0 0.0
        %2639 = vmatpush1.msra.mxu0 %v2622
        %2640 = vmatprep.subr.mxu0 0.0
        %2641 = vmatpush1.msra.mxu0 %v2623
        %2642 = vmatprep.subr.mxu0 0.0
        %2643 = vmatpush1.msra.mxu0 %v2624
        %2644 = vmatprep.subr.mxu0 0.0
        %2645 = vmatpush1.msra.mxu0 %v2625
        %2646 = vmatprep.subr.mxu0 0.0
        %2647 = vmatpush1.msra.mxu0 %v2626
        %2648 = vmatprep.subr.mxu0 0.0
        %2649 = vmatpush1.msra.mxu0 %v2627
        %2650 = vmatprep.subr.mxu0 0.0
        %2651 = vmatpush1.msra.mxu0 %v2628
        %2652 = vmatprep.subr.mxu0 0.0
        %2653 = vmatpush1.msra.mxu0 %v2629
        %2654 = vmatprep.subr.mxu0 0.0
        %2655 = vmatpush1.msra.mxu0 %v2630
        %2656 = vmatprep.subr.mxu0 0.0
        %2657 = vmatpush1.msra.mxu0 %v2631
        %2658 = vmatprep.subr.mxu0 0.0
        %2659 = vmatpush1.msra.mxu0 %v2632
        %2660 = vmatprep.subr.mxu0 0.0
        %2661 = vmatpush1.msra.mxu0 %v2633
        %2662 = vmatprep.subr.mxu0 0.0
        %2663 = vmatpush1.msra.mxu0 %v2634
        %2664 = vmatprep.subr.mxu0 0.0
        %2665 = vmatpush1.msra.mxu0 %v2635
        %2666 = vmatprep.subr.mxu0 0.0
        %2667 = vmatpush1.msra.mxu0 %v2636
        %2668 = vmatprep.subr.mxu0 0.0
        %2669 = vmatpush1.msra.mxu0 %v2637
        %2670 = vmatprep.subr.mxu0 0.0
        %2671 = vmatpush1.msra.mxu0 0.0
        %2672 = vmatprep.subr.mxu0 0.0
        %2673 = vmatpush1.msra.mxu0 0.0
        %2674 = vmatprep.subr.mxu0 0.0
        %2675 = vmatpush1.msra.mxu0 0.0
        %2676 = vmatprep.subr.mxu0 0.0
        %2677 = vmatpush1.msra.mxu0 0.0
        %2678 = vmatprep.subr.mxu0 0.0
        %2679 = vmatpush1.msra.mxu0 0.0
        %2680 = vmatprep.subr.mxu0 0.0
        %2681 = vmatpush1.msra.mxu0 0.0
        %2682 = vmatprep.subr.mxu0 0.0
        %2683 = vmatpush1.msra.mxu0 0.0
        %2684 = vmatprep.subr.mxu0 0.0
        %2685 = vmatpush1.msra.mxu0 0.0
        %2686 = vmatprep.subr.mxu0 0.0
        %2687 = vmatpush1.msra.mxu0 0.0
        %2688 = vmatprep.subr.mxu0 0.0
        %2689 = vmatpush1.msra.mxu0 0.0
        %2690 = vmatprep.subr.mxu0 0.0
        %2691 = vmatpush1.msra.mxu0 0.0
        %2692 = vmatprep.subr.mxu0 0.0
        %2693 = vmatpush1.msra.mxu0 0.0
        %2694 = vmatprep.subr.mxu0 0.0
        %2695 = vmatpush1.msra.mxu0 0.0
        %2696 = vmatprep.subr.mxu0 0.0
        %2697 = vmatpush1.msra.mxu0 0.0
        %2698 = vmatprep.subr.mxu0 0.0
        %2699 = vmatpush1.msra.mxu0 0.0
        %2700 = vmatprep.subr.mxu0 0.0
        %2701 = vmatpush1.msra.mxu0 0.0
        %2702 = vmatprep.mubr.f32.mxu0 0.0
        %2703 = vmatmul.mubr.f32.gmra.mrb[0].mxu0 %v2589
        %v2704 = vpop.f32.mrb[0].mxu0
        %v2705 = vadd.f32 0.0, %v2704
        %v2706 = vpop.f32.mrb[0].mxu0
        %2707 = vmatprep.mubr.f32.mxu0 0.0
        %2708 = vmatmul.mubr.f32.gmra.mrb[0].mxu0 %v2590
        %v2709 = vpop.f32.mrb[0].mxu0
        %v2710 = vadd.f32 0.0, %v2709
        %v2711 = vpop.f32.mrb[0].mxu0
        %2712 = vmatprep.mubr.f32.mxu0 0.0
        %2713 = vmatmul.mubr.f32.gmra.mrb[0].mxu0 %v2591
        %v2714 = vpop.f32.mrb[0].mxu0
        %v2715 = vadd.f32 0.0, %v2714
        %v2716 = vpop.f32.mrb[0].mxu0
        %2717 = vmatprep.mubr.f32.mxu0 0.0
        %2718 = vmatmul.mubr.f32.gmra.mrb[0].mxu0 %v2592
        %v2719 = vpop.f32.mrb[0].mxu0
        %v2720 = vadd.f32 0.0, %v2719
        %v2721 = vpop.f32.mrb[0].mxu0
        %2722 = vmatprep.mubr.f32.mxu0 0.0
        %2723 = vmatmul.mubr.f32.gmra.mrb[0].mxu0 %v2593
        %v2724 = vpop.f32.mrb[0].mxu0
        %v2725 = vadd.f32 0.0, %v2724
        %v2726 = vpop.f32.mrb[0].mxu0
        %2727 = vmatprep.mubr.f32.mxu0 0.0
        %2728 = vmatmul.mubr.f32.gmra.mrb[0].mxu0 %v2594
        %v2729 = vpop.f32.mrb[0].mxu0
        %v2730 = vadd.f32 0.0, %v2729
        %v2731 = vpop.f32.mrb[0].mxu0
        %2732 = vmatprep.mubr.f32.mxu0 0.0
        %2733 = vmatmul.mubr.f32.gmra.mrb[0].mxu0 %v2595
        %v2734 = vpop.f32.mrb[0].mxu0
        %v2735 = vadd.f32 0.0, %v2734
        %v2736 = vpop.f32.mrb[0].mxu0
        %2737 = vmatprep.mubr.f32.mxu0 0.0
        %2738 = vmatmul.mubr.f32.gmra.mrb[0].mxu0 %v2596
        %v2739 = vpop.f32.mrb[0].mxu0
        %v2740 = vadd.f32 0.0, %v2739
        %v2741 = vpop.f32.mrb[0].mxu0
        %2742 = vmatprep.mubr.f32.mxu0 0.0
        %2743 = vmatmul.mubr.f32.gmra.mrb[0].mxu0 %v2597
        %v2744 = vpop.f32.mrb[0].mxu0
        %v2745 = vadd.f32 0.0, %v2744
        %v2746 = vpop.f32.mrb[0].mxu0
        %2747 = vmatprep.mubr.f32.mxu0 0.0
        %2748 = vmatmul.mubr.f32.gmra.mrb[0].mxu0 %v2598
        %v2749 = vpop.f32.mrb[0].mxu0
        %v2750 = vadd.f32 0.0, %v2749
        %v2751 = vpop.f32.mrb[0].mxu0
        %2752 = vmatprep.mubr.f32.mxu0 0.0
        %2753 = vmatmul.mubr.f32.gmra.mrb[0].mxu0 %v2599
        %v2754 = vpop.f32.mrb[0].mxu0
        %v2755 = vadd.f32 0.0, %v2754
        %v2756 = vpop.f32.mrb[0].mxu0
        %2757 = vmatprep.mubr.f32.mxu0 0.0
        %2758 = vmatmul.mubr.f32.gmra.mrb[0].mxu0 %v2600
        %v2759 = vpop.f32.mrb[0].mxu0
        %v2760 = vadd.f32 0.0, %v2759
        %v2761 = vpop.f32.mrb[0].mxu0
        %2762 = vmatprep.mubr.f32.mxu0 0.0
        %2763 = vmatmul.mubr.f32.gmra.mrb[0].mxu0 %v2601
        %v2764 = vpop.f32.mrb[0].mxu0
        %v2765 = vadd.f32 0.0, %v2764
        %v2766 = vpop.f32.mrb[0].mxu0
        %2767 = vmatprep.mubr.f32.mxu0 0.0
        %2768 = vmatmul.mubr.f32.gmra.mrb[0].mxu0 %v2602
        %v2769 = vpop.f32.mrb[0].mxu0
        %v2770 = vadd.f32 0.0, %v2769
        %v2771 = vpop.f32.mrb[0].mxu0
        %2772 = vmatprep.mubr.f32.mxu0 0.0
        %2773 = vmatmul.mubr.f32.gmra.mrb[0].mxu0 %v2603
        %v2774 = vpop.f32.mrb[0].mxu0
        %v2775 = vadd.f32 0.0, %v2774
        %v2776 = vpop.f32.mrb[0].mxu0
        %2777 = vmatprep.mubr.f32.mxu0 0.0
        %2778 = vmatmul.mubr.f32.gmra.mrb[0].mxu0 %v2604
        %v2779 = vpop.f32.mrb[0].mxu0
        %v2780 = vadd.f32 0.0, %v2779
        %v2781 = vpop.f32.mrb[0].mxu0
        %2782 = vmatprep.mubr.f32.mxu0 0.0
        %2783 = vmatmul.mubr.f32.gmra.mrb[0].mxu0 %v2605
        %v2784 = vpop.f32.mrb[0].mxu0
        %v2785 = vadd.f32 0.0, %v2784
        %v2786 = vpop.f32.mrb[0].mxu0
        %2787 = vmatprep.mubr.f32.mxu0 0.0
        %2788 = vmatmul.mubr.f32.gmra.mrb[0].mxu0 %v2606
        %v2789 = vpop.f32.mrb[0].mxu0
        %v2790 = vadd.f32 0.0, %v2789
        %v2791 = vpop.f32.mrb[0].mxu0
        %2792 = vmatprep.mubr.f32.mxu0 0.0
        %2793 = vmatmul.mubr.f32.gmra.mrb[0].mxu0 %v2607
        %v2794 = vpop.f32.mrb[0].mxu0
        %v2795 = vadd.f32 0.0, %v2794
        %v2796 = vpop.f32.mrb[0].mxu0
        %2797 = vmatprep.mubr.f32.mxu0 0.0
        %2798 = vmatmul.mubr.f32.gmra.mrb[0].mxu0 %v2608
        %v2799 = vpop.f32.mrb[0].mxu0
        %v2800 = vadd.f32 0.0, %v2799
        %v2801 = vpop.f32.mrb[0].mxu0
        %2802 = vmatprep.mubr.f32.mxu0 0.0
        %2803 = vmatmul.mubr.f32.gmra.mrb[0].mxu0 %v2609
        %v2804 = vpop.f32.mrb[0].mxu0
        %v2805 = vadd.f32 0.0, %v2804
        %v2806 = vpop.f32.mrb[0].mxu0
        %2807 = vmatprep.mubr.f32.mxu0 0.0
        %2808 = vmatmul.mubr.f32.gmra.mrb[0].mxu0 %v2610
        %v2809 = vpop.f32.mrb[0].mxu0
        %v2810 = vadd.f32 0.0, %v2809
        %v2811 = vpop.f32.mrb[0].mxu0
        %2812 = vmatprep.mubr.f32.mxu0 0.0
        %2813 = vmatmul.mubr.f32.gmra.mrb[0].mxu0 %v2611
        %v2814 = vpop.f32.mrb[0].mxu0
        %v2815 = vadd.f32 0.0, %v2814
        %v2816 = vpop.f32.mrb[0].mxu0
        %2817 = vmatprep.mubr.f32.mxu0 0.0
        %2818 = vmatmul.mubr.f32.gmra.mrb[0].mxu0 %v2612
        %v2819 = vpop.f32.mrb[0].mxu0
        %v2820 = vadd.f32 0.0, %v2819
        %v2821 = vpop.f32.mrb[0].mxu0
        %2822 = vmatprep.mubr.f32.mxu0 0.0
        %2823 = vmatmul.mubr.f32.gmra.mrb[0].mxu0 %v2613
        %v2824 = vpop.f32.mrb[0].mxu0
        %v2825 = vadd.f32 0.0, %v2824
        %v2826 = vpop.f32.mrb[0].mxu0
        %2827 = vmatprep.mubr.f32.mxu0 0.0
        %2828 = vmatmul.mubr.f32.gmra.mrb[0].mxu0 %v2614
        %v2829 = vpop.f32.mrb[0].mxu0
        %v2830 = vadd.f32 0.0, %v2829
        %v2831 = vpop.f32.mrb[0].mxu0
        %2832 = vmatprep.mubr.f32.mxu0 0.0
        %2833 = vmatmul.mubr.f32.gmra.mrb[0].mxu0 %v2615
        %v2834 = vpop.f32.mrb[0].mxu0
        %v2835 = vadd.f32 0.0, %v2834
        %v2836 = vpop.f32.mrb[0].mxu0
        %2837 = vmatprep.mubr.f32.mxu0 0.0
        %2838 = vmatmul.mubr.f32.gmra.mrb[0].mxu0 %v2616
        %v2839 = vpop.f32.mrb[0].mxu0
        %v2840 = vadd.f32 0.0, %v2839
        %v2841 = vpop.f32.mrb[0].mxu0
        %2842 = vmatprep.mubr.f32.mxu0 0.0
        %2843 = vmatmul.mubr.f32.gmra.mrb[0].mxu0 %v2617
        %v2844 = vpop.f32.mrb[0].mxu0
        %v2845 = vadd.f32 0.0, %v2844
        %v2846 = vpop.f32.mrb[0].mxu0
        %2847 = vmatprep.mubr.f32.mxu0 0.0
        %2848 = vmatmul.mubr.f32.gmra.mrb[0].mxu0 %v2618
        %v2849 = vpop.f32.mrb[0].mxu0
        %v2850 = vadd.f32 0.0, %v2849
        %v2851 = vpop.f32.mrb[0].mxu0
        %2852 = vmatprep.mubr.f32.mxu0 0.0
        %2853 = vmatmul.mubr.f32.gmra.mrb[0].mxu0 %v2619
        %v2854 = vpop.f32.mrb[0].mxu0
        %v2855 = vadd.f32 0.0, %v2854
        %v2856 = vpop.f32.mrb[0].mxu0
        %2857 = vmatprep.mubr.f32.mxu0 0.0
        %2858 = vmatmul.mubr.f32.gmra.mrb[0].mxu0 %v2620
        %v2859 = vpop.f32.mrb[0].mxu0
        %v2860 = vadd.f32 0.0, %v2859
        %v2861 = vpop.f32.mrb[0].mxu0
        %2862 = vdwg.mxu0
        %v2863 = vadd.f32 %v2557, %v2705
        %v2864 = vadd.f32 %v2558, %v2710
        %v2865 = vadd.f32 %v2559, %v2715
        %v2866 = vadd.f32 %v2560, %v2720
        %v2867 = vadd.f32 %v2561, %v2725
        %v2868 = vadd.f32 %v2562, %v2730
        %v2869 = vadd.f32 %v2563, %v2735
        %v2870 = vadd.f32 %v2564, %v2740
        %v2871 = vadd.f32 %v2565, %v2745
        %v2872 = vadd.f32 %v2566, %v2750
        %v2873 = vadd.f32 %v2567, %v2755
        %v2874 = vadd.f32 %v2568, %v2760
        %v2875 = vadd.f32 %v2569, %v2765
        %v2876 = vadd.f32 %v2570, %v2770
        %v2877 = vadd.f32 %v2571, %v2775
        %v2878 = vadd.f32 %v2572, %v2780
        %v2879 = vadd.f32 %v2573, %v2785
        %v2880 = vadd.f32 %v2574, %v2790
        %v2881 = vadd.f32 %v2575, %v2795
        %v2882 = vadd.f32 %v2576, %v2800
        %v2883 = vadd.f32 %v2577, %v2805
        %v2884 = vadd.f32 %v2578, %v2810
        %v2885 = vadd.f32 %v2579, %v2815
        %v2886 = vadd.f32 %v2580, %v2820
        %v2887 = vadd.f32 %v2581, %v2825
        %v2888 = vadd.f32 %v2582, %v2830
        %v2889 = vadd.f32 %v2583, %v2835
        %v2890 = vadd.f32 %v2584, %v2840
        %v2891 = vadd.f32 %v2585, %v2845
        %v2892 = vadd.f32 %v2586, %v2850
        %v2893 = vadd.f32 %v2587, %v2855
        %v2894 = vadd.f32 %v2588, %v2860
        %2895 = vst [vmem:[%s183] sm:$0xff] %v2863
        %2896 = vst [vmem:[%s183 + $0x8] sm:$0xff] %v2864
        %2897 = vst [vmem:[%s183 + $0x10] sm:$0xff] %v2865
        %2898 = vst [vmem:[%s183 + $0x18] sm:$0xff] %v2866
        %2899 = vst [vmem:[%s183 + $0x20] sm:$0xff] %v2867
        %2900 = vst [vmem:[%s183 + $0x28] sm:$0xff] %v2868
        %2901 = vst [vmem:[%s183 + $0x30] sm:$0xff] %v2869
        %2902 = vst [vmem:[%s183 + $0x38] sm:$0xff] %v2870
        %2903 = vst [vmem:[%s183 + $0x40] sm:$0xff] %v2871
        %2904 = vst [vmem:[%s183 + $0x48] sm:$0xff] %v2872
        %2905 = vst [vmem:[%s183 + $0x50] sm:$0xff] %v2873
        %2906 = vst [vmem:[%s183 + $0x58] sm:$0xff] %v2874
        %2907 = vst [vmem:[%s183 + $0x60] sm:$0xff] %v2875
        %2908 = vst [vmem:[%s183 + $0x68] sm:$0xff] %v2876
        %2909 = vst [vmem:[%s183 + $0x70] sm:$0xff] %v2877
        %2910 = vst [vmem:[%s183 + $0x78] sm:$0xff] %v2878
        %2911 = vst [vmem:[%s183 + $0x80] sm:$0xff] %v2879
        %2912 = vst [vmem:[%s183 + $0x88] sm:$0xff] %v2880
        %2913 = vst [vmem:[%s183 + $0x90] sm:$0xff] %v2881
        %2914 = vst [vmem:[%s183 + $0x98] sm:$0xff] %v2882
        %2915 = vst [vmem:[%s183 + $0xa0] sm:$0xff] %v2883
        %2916 = vst [vmem:[%s183 + $0xa8] sm:$0xff] %v2884
        %2917 = vst [vmem:[%s183 + $0xb0] sm:$0xff] %v2885
        %2918 = vst [vmem:[%s183 + $0xb8] sm:$0xff] %v2886
        %2919 = vst [vmem:[%s183 + $0xc0] sm:$0xff] %v2887
        %2920 = vst [vmem:[%s183 + $0xc8] sm:$0xff] %v2888
        %2921 = vst [vmem:[%s183 + $0xd0] sm:$0xff] %v2889
        %2922 = vst [vmem:[%s183 + $0xd8] sm:$0xff] %v2890
        %2923 = vst [vmem:[%s183 + $0xe0] sm:$0xff] %v2891
        %2924 = vst [vmem:[%s183 + $0xe8] sm:$0xff] %v2892
        %2925 = vst [vmem:[%s183 + $0xf0] sm:$0xff] %v2893
        %2926 = vst [vmem:[%s183 + $0xf8] sm:$0xff] %v2894
        %v2927 = vadd.f32 %v2863, %v2864
        %v2928 = vadd.f32 %v2927, %v2865
        %v2929 = vadd.f32 %v2928, %v2866
        %v2930 = vadd.f32 %v2929, %v2867
        %v2931 = vadd.f32 %v2930, %v2868
        %v2932 = vadd.f32 %v2931, %v2869
        %v2933 = vadd.f32 %v2932, %v2870
        %v2934 = vadd.f32 %v2933, %v2871
        %v2935 = vadd.f32 %v2934, %v2872
        %v2936 = vadd.f32 %v2935, %v2873
        %v2937 = vadd.f32 %v2936, %v2874
        %v2938 = vadd.f32 %v2937, %v2875
        %v2939 = vadd.f32 %v2938, %v2876
        %v2940 = vadd.f32 %v2939, %v2877
        %v2941 = vadd.f32 %v2940, %v2878
        %v2942 = vadd.f32 %v2941, %v2879
        %v2943 = vadd.f32 %v2942, %v2880
        %v2944 = vadd.f32 %v2943, %v2881
        %v2945 = vadd.f32 %v2944, %v2882
        %v2946 = vadd.f32 %v2945, %v2883
        %v2947 = vadd.f32 %v2946, %v2884
        %v2948 = vadd.f32 %v2947, %v2885
        %v2949 = vadd.f32 %v2948, %v2886
        %v2950 = vadd.f32 %v2949, %v2887
        %v2951 = vadd.f32 %v2950, %v2888
        %v2952 = vadd.f32 %v2951, %v2889
        %v2953 = vadd.f32 %v2952, %v2890
        %v2954 = vadd.f32 %v2953, %v2891
        %v2955 = vadd.f32 %v2954, %v2892
        %v2956 = vadd.f32 %v2955, %v2893
        %v2957 = vadd.f32 %v2956, %v2894
        %v2958 = vrot.slane %v2957, 4
        %v2959 = vadd.f32 %v2957, %v2958
        %v2960 = vrot.slane %v2959, 2
        %v2961 = vadd.f32 %v2959, %v2960
        %v2962 = vrot.slane %v2961, 1
        %v2963 = vadd.f32 %v2961, %v2962
        %v2964 = vmul.f32 %v2863, %v2863
        %v2965 = vmul.f32 %v2864, %v2864
        %v2966 = vmul.f32 %v2865, %v2865
        %v2967 = vmul.f32 %v2866, %v2866
        %v2968 = vmul.f32 %v2867, %v2867
        %v2969 = vmul.f32 %v2868, %v2868
        %v2970 = vmul.f32 %v2869, %v2869
        %v2971 = vmul.f32 %v2870, %v2870
        %v2972 = vmul.f32 %v2871, %v2871
        %v2973 = vmul.f32 %v2872, %v2872
        %v2974 = vmul.f32 %v2873, %v2873
        %v2975 = vmul.f32 %v2874, %v2874
        %v2976 = vmul.f32 %v2875, %v2875
        %v2977 = vmul.f32 %v2876, %v2876
        %v2978 = vmul.f32 %v2877, %v2877
        %v2979 = vmul.f32 %v2878, %v2878
        %v2980 = vmul.f32 %v2879, %v2879
        %v2981 = vmul.f32 %v2880, %v2880
        %v2982 = vmul.f32 %v2881, %v2881
        %v2983 = vmul.f32 %v2882, %v2882
        %v2984 = vmul.f32 %v2883, %v2883
        %v2985 = vmul.f32 %v2884, %v2884
        %v2986 = vmul.f32 %v2885, %v2885
        %v2987 = vmul.f32 %v2886, %v2886
        %v2988 = vmul.f32 %v2887, %v2887
        %v2989 = vmul.f32 %v2888, %v2888
        %v2990 = vmul.f32 %v2889, %v2889
        %v2991 = vmul.f32 %v2890, %v2890
        %v2992 = vmul.f32 %v2891, %v2891
        %v2993 = vmul.f32 %v2892, %v2892
        %v2994 = vmul.f32 %v2893, %v2893
        %v2995 = vmul.f32 %v2894, %v2894
        %v2996 = vadd.f32 %v2964, %v2965
        %v2997 = vadd.f32 %v2996, %v2966
        %v2998 = vadd.f32 %v2997, %v2967
        %v2999 = vadd.f32 %v2998, %v2968
        %v3000 = vadd.f32 %v2999, %v2969
        %v3001 = vadd.f32 %v3000, %v2970
        %v3002 = vadd.f32 %v3001, %v2971
        %v3003 = vadd.f32 %v3002, %v2972
        %v3004 = vadd.f32 %v3003, %v2973
        %v3005 = vadd.f32 %v3004, %v2974
        %v3006 = vadd.f32 %v3005, %v2975
        %v3007 = vadd.f32 %v3006, %v2976
        %v3008 = vadd.f32 %v3007, %v2977
        %v3009 = vadd.f32 %v3008, %v2978
        %v3010 = vadd.f32 %v3009, %v2979
        %v3011 = vadd.f32 %v3010, %v2980
        %v3012 = vadd.f32 %v3011, %v2981
        %v3013 = vadd.f32 %v3012, %v2982
        %v3014 = vadd.f32 %v3013, %v2983
        %v3015 = vadd.f32 %v3014, %v2984
        %v3016 = vadd.f32 %v3015, %v2985
        %v3017 = vadd.f32 %v3016, %v2986
        %v3018 = vadd.f32 %v3017, %v2987
        %v3019 = vadd.f32 %v3018, %v2988
        %v3020 = vadd.f32 %v3019, %v2989
        %v3021 = vadd.f32 %v3020, %v2990
        %v3022 = vadd.f32 %v3021, %v2991
        %v3023 = vadd.f32 %v3022, %v2992
        %v3024 = vadd.f32 %v3023, %v2993
        %v3025 = vadd.f32 %v3024, %v2994
        %v3026 = vadd.f32 %v3025, %v2995
        %v3027 = vrot.slane %v3026, 4
        %v3028 = vadd.f32 %v3026, %v3027
        %v3029 = vrot.slane %v3028, 2
        %v3030 = vadd.f32 %v3028, %v3029
        %v3031 = vrot.slane %v3030, 1
        %v3032 = vadd.f32 %v3030, %v3031
        %vm3033 = vcmask 1040384
        %v3034 = vsel %vm3033, %v2963, %v3032
        %3035 = vst [vmem:[%s190] sm:$0x3] %v3034
        %s3036 = sand.u32 %s90, 1
        %s3037 = scalar_lea.sflag [#allocation3], %s3036
        %s3038 = sand.u32 %s90, 1
        %s3039 = smul.addr %s3038, 256
        %s3040 = scalar_lea.vmem [#allocation2], %s3039
        %s3041 = sand.u32 %s118, 1
        %s3042 = scalar_lea.sflag [#allocation5], %s3041
        %s3043 = sand.u32 %s118, 1
        %s3044 = smul.addr %s3043, 2
        %s3045 = scalar_lea.vmem [#allocation4], %s3044
        // Predicated region
        $region29: #{tpu_custom_call.1} parent=27 // pred_check
          %p3046 = pneg %p100
        $region30: #{tpu_custom_call.1} parent=27 // pred_check_branch
          %3048 = sbr.rel (%p3046) target = $region32
        $region31: #{tpu_custom_call.1} parent=27 // pred_region
          %s3049 = smul.u32 16, %s26
          %s3051 = ssub.s32 4096, 4096
          %3052 = vsyncadd %s3037, %s3051
          %s3053 = smul.addr %s3049, 2
          %s3054 = smul.addr %s25, 32
          %s3055 = sadd.s32 %s3053, %s3054
          %s3056 = smul.addr %s3055, 128
          %s3057 = scalar_lea.hbm %s2, %s3056
          %s3058 = sshll.u32 %s3040, 4
          %s3059 = int_to_ptr.vmem [resolvable:$true] %s3058
          %3064 = dma.vmem_to_hbm [thread:$0]  %s3059, 4096, %s3057, %s3037, 128, 128, 8
        $region32: #{tpu_custom_call.1} parent=27 // pred_fallthru
          _
        // Predicated region
        $region33: #{tpu_custom_call.1} parent=27 // pred_check
          %p3065 = pneg %p128
        $region34: #{tpu_custom_call.1} parent=27 // pred_check_branch
          %3067 = sbr.rel (%p3065) target = $region36
        $region35: #{tpu_custom_call.1} parent=27 // pred_region
          %s3069 = ssub.s32 32, 32
          %3070 = vsyncadd %s3042, %s3069
          %s3071 = sadd.s32 %s26, %s25
          %s3072 = smul.addr %s3071, 32
          %s3073 = scalar_lea.hbm %s3, %s3072
          %s3075 = sshll.u32 %s3045, 4
          %s3076 = int_to_ptr.vmem [resolvable:$true] %s3075
          %3078 = dma.vmem_to_hbm [thread:$0]  %s3076, 32, %s3073, %s3042
        $region36: #{tpu_custom_call.1} parent=27 // pred_fallthru
          _
      $region28: #{tpu_custom_call.1} parent=5 // pred_fallthru
        _
      %p3079 = scmp.le.s32.totalorder 2, %s16
      // Predicated region
      $region37: #{tpu_custom_call.1} parent=5 // pred_check
        %p3080 = pneg %p3079
      $region38: #{tpu_custom_call.1} parent=5 // pred_check_branch
        %3082 = sbr.rel (%p3080) target = $region40
      $region39: #{tpu_custom_call.1} parent=5 // pred_region
        %s3083 = ssub.s32 %s16, 2
        // Predicated region
        $region41: #{tpu_custom_call.1} parent=39 // pred_check
          %p3084 = pneg %p106
        $region42: #{tpu_custom_call.1} parent=39 // pred_check_branch
          %3086 = sbr.rel (%p3084) target = $region44
        $region43: #{tpu_custom_call.1} parent=39 // pred_region
          %s3087 = sand.u32 %s91, 1
          %s3088 = scalar_lea.sflag [#allocation3], %s3087
          %s3089 = sand.u32 %s91, 1
          %s3090 = smul.addr %s3089, 256
          %s3091 = scalar_lea.vmem [#allocation2], %s3090
          %3092 = dma.done %s3088, 4096
        $region44: #{tpu_custom_call.1} parent=39 // pred_fallthru
          _
        // Predicated region
        $region45: #{tpu_custom_call.1} parent=39 // pred_check
          %p3093 = pneg %p134
        $region46: #{tpu_custom_call.1} parent=39 // pred_check_branch
          %3095 = sbr.rel (%p3093) target = $region48
        $region47: #{tpu_custom_call.1} parent=39 // pred_region
          %s3096 = sand.u32 %s119, 1
          %s3097 = scalar_lea.sflag [#allocation5], %s3096
          %s3098 = sand.u32 %s119, 1
          %s3099 = smul.addr %s3098, 2
          %s3100 = scalar_lea.vmem [#allocation4], %s3099
          %3101 = dma.done %s3097, 32
        $region48: #{tpu_custom_call.1} parent=39 // pred_fallthru
          _
      $region40: #{tpu_custom_call.1} parent=5 // pred_fallthru
        _
    $region6: #{tpu_custom_call.1} parent=1 // loop_footer
      %s20 = sadd.s32 1, %s16
    $region7: #{tpu_custom_call.1} parent=1 // loop_footer_branch
      %15 = sbr.rel target = $region3
    $region8: #{tpu_custom_call.1} parent=1 // loop_exit
      _
    %3102 = vsyncpa [#allocation3], 1
    %s3103 = scalar_lea.sflag [#allocation3], 1
    %3104 = vsyncpa %s3103, 1
    %3105 = vsyncpa [#allocation5], 1
    %s3106 = scalar_lea.sflag [#allocation5], 1
    %3107 = vsyncpa %s3106, 1

</llo_original>
